<compile_context>
chip_gen: v7x
topology: tpu7x:2x2x1
jax: 0.10.0
libtpu: 0.0.40
codegen_flags: <defaults>
</compile_context>

<pallas_src>
import jax
import jax.numpy as jnp
from jax.experimental import pallas as pl
from jax.experimental.pallas import tpu as pltpu


Z_DIM = 32
IN = 28 * 28                 # 784
IN_PAD = 896                 # 7 * 128  (lane-dense K for the first matmul)
H1 = 1024
H2 = 256
OUT = 2 * Z_DIM              # 64
OUT_PAD = 128                # round up to 128 for lane-dense output stores
EPS = float(jnp.finfo(jnp.float32).eps)


def _round_up(n, m):
    return ((n + m - 1) // m) * m


def _choose_batch_tile(b):
    if b <= 128:
        return _round_up(max(b, 1), 8)
    if b <= 1024:
        return 128
    return 256


def encoder_mlp_kernel(x_ref, w1_ref, b1_ref, w2_ref, b2_ref, w3_ref, b3_ref,
                       params_ref, sigma_ref):
    # Layer 1: Linear(784->1024) + ReLU   (bf16 inputs, f32 accumulation)
    x = x_ref[...].astype(jnp.bfloat16)
    h1 = jnp.dot(x, w1_ref[...], preferred_element_type=jnp.float32)
    h1 = jnp.maximum(h1 + b1_ref[...], 0.0)

    # Layer 2: Linear(1024->256) + ReLU
    h2 = jnp.dot(h1.astype(jnp.bfloat16), w2_ref[...],
                 preferred_element_type=jnp.float32)
    h2 = jnp.maximum(h2 + b2_ref[...], 0.0)

    # Layer 3: Linear(256 -> 2*z_dim, padded to 128 lanes)
    p = jnp.dot(h2.astype(jnp.bfloat16), w3_ref[...],
                preferred_element_type=jnp.float32)
    p = p + b3_ref[...]

    params_ref[...] = p

    # softplus(p) + eps on the whole padded block (EUP work, nearly free);
    # the wrapper slices out the log_sigma half.
    sp = jnp.maximum(p, 0.0) + jnp.log(1.0 + jnp.exp(-jnp.abs(p)))
    sigma_ref[...] = sp + jnp.float32(EPS)


def encoder_forward(x, prepared_params, z_dim=Z_DIM):
    """Returns (mu, sigma), each of shape [B, z_dim] (Normal distribution params)."""
    w1p, b1, w2p, b2, w3p, b3p = prepared_params
    B = x.shape[0]

    tb = _choose_batch_tile(B)
    b_pad = _round_up(B, tb)
    n_tiles = b_pad // tb

    # Flatten and zero-pad batch rows + input features (zeros x zero w1-rows -> no effect).
    xf = x.reshape(B, -1).astype(jnp.float32)
    xf = jnp.pad(xf, ((0, b_pad - B), (0, IN_PAD - IN)))

    resident = lambda shape: pl.BlockSpec(shape, lambda i: tuple(0 for _ in shape))
    out_spec = pl.BlockSpec((tb, OUT_PAD), lambda i: (i, 0))

    params_out, sigma_out = pl.pallas_call(
        encoder_mlp_kernel,
        out_shape=(
            jax.ShapeDtypeStruct((b_pad, OUT_PAD), jnp.float32),
            jax.ShapeDtypeStruct((b_pad, OUT_PAD), jnp.float32),
        ),
        grid=(n_tiles,),
        in_specs=[
            pl.BlockSpec((tb, IN_PAD), lambda i: (i, 0)),   # x tiles pipeline over batch
            resident(w1p.shape), resident(b1.shape),        # weights stay VMEM-resident
            resident(w2p.shape), resident(b2.shape),
            resident(w3p.shape), resident(b3p.shape),
        ],
        out_specs=(out_spec, out_spec),
        compiler_params=pltpu.CompilerParams(
            dimension_semantics=("parallel",),
            vmem_limit_bytes=32 << 20,
        ),
    )(xf, w1p, b1, w2p, b2, w3p, b3p)

    mu = params_out[:B, :z_dim]
    sigma = sigma_out[:B, z_dim:2 * z_dim]
    return mu, sigma


def init_params(key, z_dim=Z_DIM):
    """PyTorch-style (uniform +/- 1/sqrt(fan_in)) init, weights stored (fan_in, fan_out)."""
    def linear(k, fan_in, fan_out):
        kw, kb = jax.random.split(k)
        bound = 1.0 / (fan_in ** 0.5)
        w = jax.random.uniform(kw, (fan_in, fan_out), jnp.float32, -bound, bound)
        b = jax.random.uniform(kb, (1, fan_out), jnp.float32, -bound, bound)
        return w, b

    k1, k2, k3 = jax.random.split(key, 3)
    w1, b1 = linear(k1, IN, H1)
    w2, b2 = linear(k2, H1, H2)
    w3, b3 = linear(k3, H2, 2 * z_dim)
    return (w1, b1, w2, b2, w3, b3)


def prepare_params(params):
    """Pad ragged dims to 128-multiples and cast weights to bf16 (done once)."""
    w1, b1, w2, b2, w3, b3 = params
    w1p = jnp.pad(w1, ((0, IN_PAD - IN), (0, 0))).astype(jnp.bfloat16)
    w2p = w2.astype(jnp.bfloat16)
    w3p = jnp.pad(w3, ((0, 0), (0, OUT_PAD - OUT))).astype(jnp.bfloat16)
    b3p = jnp.pad(b3, ((0, 0), (0, OUT_PAD - OUT)))
    return (w1p, b1, w2p, b2, w3p, b3p)


def encoder_reference(x, prepared_params, z_dim=Z_DIM):
    """Pure-JAX reference using the same prepared (bf16/padded) params."""
    w1p, b1, w2p, b2, w3p, b3p = prepared_params
    B = x.shape[0]
    xf = x.reshape(B, -1).astype(jnp.float32)
    xf = jnp.pad(xf, ((0, 0), (0, IN_PAD - IN)))
    h = jnp.maximum(jnp.dot(xf.astype(jnp.bfloat16), w1p,
                            preferred_element_type=jnp.float32) + b1, 0.0)
    h = jnp.maximum(jnp.dot(h.astype(jnp.bfloat16), w2p,
                            preferred_element_type=jnp.float32) + b2, 0.0)
    p = jnp.dot(h.astype(jnp.bfloat16), w3p,
                preferred_element_type=jnp.float32) + b3p
    mu = p[:, :z_dim]
    ls = p[:, z_dim:2 * z_dim]
    sigma = jnp.maximum(ls, 0.0) + jnp.log(1.0 + jnp.exp(-jnp.abs(ls))) + EPS
    return mu, sigma


if __name__ == "__main__":
    key = jax.random.PRNGKey(0)
    kx, kp = jax.random.split(key)

    B = 4
    x = jax.random.normal(kx, (B, 1, 28, 28), jnp.float32)

    raw_params = init_params(kp, Z_DIM)
    prepared = prepare_params(raw_params)

    mu, sigma = encoder_forward(x, prepared, Z_DIM)
    mu, sigma = jax.block_until_ready((mu, sigma))

    mu_ref, sigma_ref = encoder_reference(x, prepared, Z_DIM)

    assert mu.shape == (B, Z_DIM), mu.shape
    assert sigma.shape == (B, Z_DIM), sigma.shape
    assert bool(jnp.all(sigma > 0.0)), "sigma must be positive"
    assert jnp.allclose(mu, mu_ref, atol=1e-3, rtol=1e-3), "mu mismatch vs reference"
    assert jnp.allclose(sigma, sigma_ref, atol=1e-3, rtol=1e-3), "sigma mismatch vs reference"

    print("KERNEL_OK")
</pallas_src>

<mosaic_0001>
module attributes {stable_mosaic.version = 11 : i64} {
  func.func @encoder_mlp_kernel(%arg0: i32, %arg1: memref<8x896xf32, #tpu.memory_space<vmem>>, %arg2: memref<896x1024xbf16, #tpu.memory_space<vmem>>, %arg3: memref<1x1024xf32, #tpu.memory_space<vmem>>, %arg4: memref<1024x256xbf16, #tpu.memory_space<vmem>>, %arg5: memref<1x256xf32, #tpu.memory_space<vmem>>, %arg6: memref<256x128xbf16, #tpu.memory_space<vmem>>, %arg7: memref<1x128xf32, #tpu.memory_space<vmem>>, %arg8: memref<8x128xf32, #tpu.memory_space<vmem>>, %arg9: memref<8x128xf32, #tpu.memory_space<vmem>>) attributes {dimension_semantics = [#tpu.dimension_semantics<parallel>], iteration_bounds = array<i64: 1>, scalar_prefetch = 0 : i64, scratch_operands = 0 : i64, tpu.core_type = #tpu.core_type<tc>, window_params = [{transform_indices = @transform_0, window_bounds = array<i64: 8, 896>}, {pipeline_mode = #tpu.pipeline_mode<synchronous>, transform_indices = @transform_1, window_bounds = array<i64: 896, 1024>}, {pipeline_mode = #tpu.pipeline_mode<synchronous>, transform_indices = @transform_2, window_bounds = array<i64: 1, 1024>}, {pipeline_mode = #tpu.pipeline_mode<synchronous>, transform_indices = @transform_3, window_bounds = array<i64: 1024, 256>}, {pipeline_mode = #tpu.pipeline_mode<synchronous>, transform_indices = @transform_4, window_bounds = array<i64: 1, 256>}, {pipeline_mode = #tpu.pipeline_mode<synchronous>, transform_indices = @transform_5, window_bounds = array<i64: 256, 128>}, {pipeline_mode = #tpu.pipeline_mode<synchronous>, transform_indices = @transform_6, window_bounds = array<i64: 1, 128>}, {transform_indices = @transform_7, window_bounds = array<i64: 8, 128>}, {transform_indices = @transform_8, window_bounds = array<i64: 8, 128>}]} {
    %c0 = arith.constant 0 : index
    %c0_0 = arith.constant 0 : index
    %0 = vector.load %arg1[%c0, %c0_0] : memref<8x896xf32, #tpu.memory_space<vmem>>, vector<8x896xf32>
    %1 = arith.truncf %0 : vector<8x896xf32> to vector<8x896xbf16>
    %c0_1 = arith.constant 0 : index
    %c0_2 = arith.constant 0 : index
    %2 = vector.load %arg2[%c0_1, %c0_2] : memref<896x1024xbf16, #tpu.memory_space<vmem>>, vector<896x1024xbf16>
    %cst = arith.constant dense<0.000000e+00> : vector<8x1024xf32>
    %3 = tpu.matmul %1, %2, %cst {dimension_numbers = #tpu.dot_dimension_numbers<[1], [0], [0], [1], [0, 0, 1, 1], [], []>} : vector<8x896xbf16>, vector<896x1024xbf16>, vector<8x1024xf32> -> vector<8x1024xf32>
    %c0_3 = arith.constant 0 : index
    %c0_4 = arith.constant 0 : index
    %4 = vector.load %arg3[%c0_3, %c0_4] : memref<1x1024xf32, #tpu.memory_space<vmem>>, vector<1x1024xf32>
    %5 = vector.broadcast %4 : vector<1x1024xf32> to vector<8x1024xf32>
    %6 = arith.addf %3, %5 : vector<8x1024xf32>
    %cst_5 = arith.constant 0.000000e+00 : f32
    %7 = vector.broadcast %cst_5 : f32 to vector<8x1024xf32>
    %8 = arith.maximumf %6, %7 : vector<8x1024xf32>
    %9 = arith.truncf %8 : vector<8x1024xf32> to vector<8x1024xbf16>
    %c0_6 = arith.constant 0 : index
    %c0_7 = arith.constant 0 : index
    %10 = vector.load %arg4[%c0_6, %c0_7] : memref<1024x256xbf16, #tpu.memory_space<vmem>>, vector<1024x256xbf16>
    %cst_8 = arith.constant dense<0.000000e+00> : vector<8x256xf32>
    %11 = tpu.matmul %9, %10, %cst_8 {dimension_numbers = #tpu.dot_dimension_numbers<[1], [0], [0], [1], [0, 0, 1, 1], [], []>} : vector<8x1024xbf16>, vector<1024x256xbf16>, vector<8x256xf32> -> vector<8x256xf32>
    %c0_9 = arith.constant 0 : index
    %c0_10 = arith.constant 0 : index
    %12 = vector.load %arg5[%c0_9, %c0_10] : memref<1x256xf32, #tpu.memory_space<vmem>>, vector<1x256xf32>
    %13 = vector.broadcast %12 : vector<1x256xf32> to vector<8x256xf32>
    %14 = arith.addf %11, %13 : vector<8x256xf32>
    %cst_11 = arith.constant 0.000000e+00 : f32
    %15 = vector.broadcast %cst_11 : f32 to vector<8x256xf32>
    %16 = arith.maximumf %14, %15 : vector<8x256xf32>
    %17 = arith.truncf %16 : vector<8x256xf32> to vector<8x256xbf16>
    %c0_12 = arith.constant 0 : index
    %c0_13 = arith.constant 0 : index
    %18 = vector.load %arg6[%c0_12, %c0_13] : memref<256x128xbf16, #tpu.memory_space<vmem>>, vector<256x128xbf16>
    %cst_14 = arith.constant dense<0.000000e+00> : vector<8x128xf32>
    %19 = tpu.matmul %17, %18, %cst_14 {dimension_numbers = #tpu.dot_dimension_numbers<[1], [0], [0], [1], [0, 0, 1, 1], [], []>} : vector<8x256xbf16>, vector<256x128xbf16>, vector<8x128xf32> -> vector<8x128xf32>
    %c0_15 = arith.constant 0 : index
    %c0_16 = arith.constant 0 : index
    %20 = vector.load %arg7[%c0_15, %c0_16] : memref<1x128xf32, #tpu.memory_space<vmem>>, vector<1x128xf32>
    %21 = vector.broadcast %20 : vector<1x128xf32> to vector<8x128xf32>
    %22 = arith.addf %19, %21 : vector<8x128xf32>
    %c0_17 = arith.constant 0 : index
    %c0_18 = arith.constant 0 : index
    %23 = vector.load %arg8[%c0_17, %c0_18] : memref<8x128xf32, #tpu.memory_space<vmem>>, vector<8x128xf32>
    tpu.vector_store %arg8[%c0_17, %c0_18], %22 {strides = array<i32>} : memref<8x128xf32, #tpu.memory_space<vmem>>, vector<8x128xf32>,
    %cst_19 = arith.constant 0.000000e+00 : f32
    %24 = vector.broadcast %cst_19 : f32 to vector<8x128xf32>
    %25 = arith.maximumf %22, %24 : vector<8x128xf32>
    %26 = math.absf %22 : vector<8x128xf32>
    %cst_20 = arith.constant 0.000000e+00 : f32
    %27 = vector.broadcast %cst_20 : f32 to vector<8x128xf32>
    %28 = arith.subf %27, %26 : vector<8x128xf32>
    %29 = math.exp %28 : vector<8x128xf32>
    %cst_21 = arith.constant 1.000000e+00 : f32
    %30 = vector.broadcast %cst_21 : f32 to vector<8x128xf32>
    %31 = arith.addf %30, %29 : vector<8x128xf32>
    %32 = math.log %31 : vector<8x128xf32>
    %33 = arith.addf %25, %32 : vector<8x128xf32>
    %cst_22 = arith.constant 1.1920929E-7 : f32
    %34 = vector.broadcast %cst_22 : f32 to vector<8x128xf32>
    %35 = arith.addf %33, %34 : vector<8x128xf32>
    %c0_23 = arith.constant 0 : index
    %c0_24 = arith.constant 0 : index
    %36 = vector.load %arg9[%c0_23, %c0_24] : memref<8x128xf32, #tpu.memory_space<vmem>>, vector<8x128xf32>
    tpu.vector_store %arg9[%c0_23, %c0_24], %35 {strides = array<i32>} : memref<8x128xf32, #tpu.memory_space<vmem>>, vector<8x128xf32>,
    return
  }
  func.func @transform_0(%arg0: i32) -> (i32, i32) {
    %c0_i32 = arith.constant 0 : i32
    %c0_i32_0 = arith.constant 0 : i32
    return %arg0, %c0_i32 : i32, i32
  }
  func.func @transform_1(%arg0: i32) -> (i32, i32) {
    %c0_i32 = arith.constant 0 : i32
    %c0_i32_0 = arith.constant 0 : i32
    %c0_i32_1 = arith.constant 0 : i32
    return %c0_i32, %c0_i32_0 : i32, i32
  }
  func.func @transform_2(%arg0: i32) -> (i32, i32) {
    %c0_i32 = arith.constant 0 : i32
    %c0_i32_0 = arith.constant 0 : i32
    %c0_i32_1 = arith.constant 0 : i32
    return %c0_i32, %c0_i32_0 : i32, i32
  }
  func.func @transform_3(%arg0: i32) -> (i32, i32) {
    %c0_i32 = arith.constant 0 : i32
    %c0_i32_0 = arith.constant 0 : i32
    %c0_i32_1 = arith.constant 0 : i32
    return %c0_i32, %c0_i32_0 : i32, i32
  }
  func.func @transform_4(%arg0: i32) -> (i32, i32) {
    %c0_i32 = arith.constant 0 : i32
    %c0_i32_0 = arith.constant 0 : i32
    %c0_i32_1 = arith.constant 0 : i32
    return %c0_i32, %c0_i32_0 : i32, i32
  }
  func.func @transform_5(%arg0: i32) -> (i32, i32) {
    %c0_i32 = arith.constant 0 : i32
    %c0_i32_0 = arith.constant 0 : i32
    %c0_i32_1 = arith.constant 0 : i32
    return %c0_i32, %c0_i32_0 : i32, i32
  }
  func.func @transform_6(%arg0: i32) -> (i32, i32) {
    %c0_i32 = arith.constant 0 : i32
    %c0_i32_0 = arith.constant 0 : i32
    %c0_i32_1 = arith.constant 0 : i32
    return %c0_i32, %c0_i32_0 : i32, i32
  }
  func.func @transform_7(%arg0: i32) -> (i32, i32) {
    %c0_i32 = arith.constant 0 : i32
    %c0_i32_0 = arith.constant 0 : i32
    return %arg0, %c0_i32 : i32, i32
  }
  func.func @transform_8(%arg0: i32) -> (i32, i32) {
    %c0_i32 = arith.constant 0 : i32
    %c0_i32_0 = arith.constant 0 : i32
    return %arg0, %c0_i32 : i32, i32
  }
}

</mosaic_0001>

<llo_original>
// kernel: tpu_custom_call.1
$region0: #{tpu_custom_call.1}
  #allocation0 [shape = 'u32[]', space=smem, size = 0x4, offset = 0x4, fixed_abs, tag = 'smem constant byte address 0x4 - core index']
  #allocation1 [shape = 'u32[144,128]{1,0:T(1,128)}', space=vmem, size = 0x12000, scoped, tag = 'internal scratch']
  %s0 = inlined_call_operand.hbm [shape: f32[8,896], index: 0, kind: input, shape index: {}]
  %s1 = inlined_call_operand.hbm [shape: bf16[896,1024], index: 1, kind: input, shape index: {}]
  %s2 = inlined_call_operand.hbm [shape: f32[1,1024], index: 2, kind: input, shape index: {}]
  %s3 = inlined_call_operand.hbm [shape: bf16[1024,256], index: 3, kind: input, shape index: {}]
  %s4 = inlined_call_operand.hbm [shape: f32[1,256], index: 4, kind: input, shape index: {}]
  %s5 = inlined_call_operand.hbm [shape: bf16[256,128], index: 5, kind: input, shape index: {}]
  %s6 = inlined_call_operand.hbm [shape: f32[1,128], index: 6, kind: input, shape index: {}]
  %s7 = inlined_call_operand.hbm [shape: f32[8,128], index: 7, kind: output, shape index: {0}]
  %s8 = inlined_call_operand.hbm [shape: f32[8,128], index: 8, kind: output, shape index: {1}]
  %9 = xla_tuple %s7, %s8
  %s10 = sld [smem:[#allocation0]]
  $region74: #{tpu_custom_call.1} parent=0
    _
  %s12 = ssub.s32 1, %s10
  %s13 = scalar_select 0, %s12, %s10
  $region1: #{tpu_custom_call.1} parent=0
    #allocation2 [shape = 'u8[28672]{0}', space=vmem, size = 0x7000, scoped, tag = 'input window, operand 0, single buffered']
    #allocation3 [shape = 's32[1]{0}', space=sflag, size = 0x4, scoped, tag = 'scoped memory for tpu_custom_call.1']
    #allocation4 [shape = 's32[1]{0}', space=sflag, size = 0x4, scoped, tag = 'scoped memory for tpu_custom_call.1']
    #allocation5 [shape = 'u8[1835008]{0}', space=vmem, size = 0x1c0000, scoped, tag = 'input window, operand 1, single buffered']
    #allocation6 [shape = 's32[1]{0}', space=sflag, size = 0x4, scoped, tag = 'scoped memory for tpu_custom_call.1']
    #allocation7 [shape = 'u8[4096]{0}', space=vmem, size = 0x1000, scoped, tag = 'input window, operand 2, single buffered']
    #allocation8 [shape = 'u8[524288]{0}', space=vmem, size = 0x80000, scoped, tag = 'input window, operand 3, single buffered']
    #allocation9 [shape = 's32[1]{0}', space=sflag, size = 0x4, scoped, tag = 'scoped memory for tpu_custom_call.1']
    #allocation10 [shape = 'u8[1024]{0}', space=vmem, size = 0x400, scoped, tag = 'input window, operand 4, single buffered']
    #allocation11 [shape = 'u8[65536]{0}', space=vmem, size = 0x10000, scoped, tag = 'input window, operand 5, single buffered']
    #allocation12 [shape = 's32[1]{0}', space=sflag, size = 0x4, scoped, tag = 'scoped memory for tpu_custom_call.1']
    #allocation13 [shape = 'u8[512]{0}', space=vmem, size = 0x400, scoped, tag = 'input window, operand 6, single buffered']
    #allocation14 [shape = 'u8[4096]{0}', space=vmem, size = 0x1000, scoped, tag = 'output window, operand 0, single buffered']
    #allocation15 [shape = 'u8[4096]{0}', space=vmem, size = 0x1000, scoped, tag = 'output window, operand 1, single buffered']
    #allocation16 [shape = 's32[1]{0}', space=sflag, size = 0x4, scoped, tag = 'scoped memory for tpu_custom_call.1']
    %14 = vsyncpa [#allocation3], 0
    %15 = vsyncpa [#allocation6], 0
    %16 = vsyncpa [#allocation9], 0
    %17 = vsyncpa [#allocation12], 0
    %18 = vsyncpa [#allocation4], 0
    %19 = vsyncpa [#allocation16], 0
    // Predicated region
    $region2: #{tpu_custom_call.1} parent=1 // pred_check
      _
    $region3: #{tpu_custom_call.1} parent=1 // pred_check_branch
      %21 = sbr.rel (0) target = $region5
    $region4: #{tpu_custom_call.1} parent=1 // pred_region
      %s23 = ssub.s32 896, 896
      %24 = vsyncadd [#allocation3], %s23
      %s26 = sshll.u32 [#allocation2], 4
      %s27 = int_to_ptr.vmem [resolvable:$true] %s26
      %29 = dma.hbm_to_vmem [thread:$0]  %s0, 896, %s27, [#allocation3]
    $region5: #{tpu_custom_call.1} parent=1 // pred_fallthru
      _
    // Predicated region
    $region6: #{tpu_custom_call.1} parent=1 // pred_check
      _
    $region7: #{tpu_custom_call.1} parent=1 // pred_check_branch
      %31 = sbr.rel (0) target = $region9
    $region8: #{tpu_custom_call.1} parent=1 // pred_region
      %s33 = ssub.s32 57344, 57344
      %34 = vsyncadd [#allocation6], %s33
      %s35 = sshll.u32 [#allocation5], 4
      %s36 = int_to_ptr.vmem [resolvable:$true] %s35
      %41 = dma.hbm_to_vmem [thread:$0]  %s1, 57344, %s36, [#allocation6], 512, 512, 32
    $region9: #{tpu_custom_call.1} parent=1 // pred_fallthru
      _
    // Predicated region
    $region10: #{tpu_custom_call.1} parent=1 // pred_check
      _
    $region11: #{tpu_custom_call.1} parent=1 // pred_check_branch
      %43 = sbr.rel (0) target = $region13
    $region12: #{tpu_custom_call.1} parent=1 // pred_region
      %s45 = ssub.s32 128, 128
      %46 = vsyncadd [#allocation6], %s45
      %s48 = sshll.u32 [#allocation7], 4
      %s49 = int_to_ptr.vmem [resolvable:$true] %s48
      %51 = dma.hbm_to_vmem [thread:$0]  %s2, 128, %s49, [#allocation6]
    $region13: #{tpu_custom_call.1} parent=1 // pred_fallthru
      _
    // Predicated region
    $region14: #{tpu_custom_call.1} parent=1 // pred_check
      _
    $region15: #{tpu_custom_call.1} parent=1 // pred_check_branch
      %53 = sbr.rel (0) target = $region17
    $region16: #{tpu_custom_call.1} parent=1 // pred_region
      %s55 = ssub.s32 16384, 16384
      %56 = vsyncadd [#allocation9], %s55
      %s57 = sshll.u32 [#allocation8], 4
      %s58 = int_to_ptr.vmem [resolvable:$true] %s57
      %63 = dma.hbm_to_vmem [thread:$0]  %s3, 16384, %s58, [#allocation9], 128, 128, 8
    $region17: #{tpu_custom_call.1} parent=1 // pred_fallthru
      _
    // Predicated region
    $region18: #{tpu_custom_call.1} parent=1 // pred_check
      _
    $region19: #{tpu_custom_call.1} parent=1 // pred_check_branch
      %65 = sbr.rel (0) target = $region21
    $region20: #{tpu_custom_call.1} parent=1 // pred_region
      %s67 = ssub.s32 32, 32
      %68 = vsyncadd [#allocation9], %s67
      %s70 = sshll.u32 [#allocation10], 4
      %s71 = int_to_ptr.vmem [resolvable:$true] %s70
      %73 = dma.hbm_to_vmem [thread:$0]  %s4, 32, %s71, [#allocation9]
    $region21: #{tpu_custom_call.1} parent=1 // pred_fallthru
      _
    // Predicated region
    $region22: #{tpu_custom_call.1} parent=1 // pred_check
      _
    $region23: #{tpu_custom_call.1} parent=1 // pred_check_branch
      %75 = sbr.rel (0) target = $region25
    $region24: #{tpu_custom_call.1} parent=1 // pred_region
      %s77 = ssub.s32 2048, 2048
      %78 = vsyncadd [#allocation12], %s77
      %s79 = sshll.u32 [#allocation11], 4
      %s80 = int_to_ptr.vmem [resolvable:$true] %s79
      %85 = dma.hbm_to_vmem [thread:$0]  %s5, 2048, %s80, [#allocation12], 64, 64, 4
    $region25: #{tpu_custom_call.1} parent=1 // pred_fallthru
      _
    // Predicated region
    $region26: #{tpu_custom_call.1} parent=1 // pred_check
      _
    $region27: #{tpu_custom_call.1} parent=1 // pred_check_branch
      %87 = sbr.rel (0) target = $region29
    $region28: #{tpu_custom_call.1} parent=1 // pred_region
      %s89 = ssub.s32 16, 16
      %90 = vsyncadd [#allocation12], %s89
      %s92 = sshll.u32 [#allocation13], 4
      %s93 = int_to_ptr.vmem [resolvable:$true] %s92
      %95 = dma.hbm_to_vmem [thread:$0]  %s6, 16, %s93, [#allocation12]
    $region29: #{tpu_custom_call.1} parent=1 // pred_fallthru
      _
    // Predicated region
    $region30: #{tpu_custom_call.1} parent=1 // pred_check
      _
    $region31: #{tpu_custom_call.1} parent=1 // pred_check_branch
      %97 = sbr.rel (0) target = $region33
    $region32: #{tpu_custom_call.1} parent=1 // pred_region
      %98 = dma.done [#allocation3], 896
    $region33: #{tpu_custom_call.1} parent=1 // pred_fallthru
      _
    // Predicated region
    $region34: #{tpu_custom_call.1} parent=1 // pred_check
      _
    $region35: #{tpu_custom_call.1} parent=1 // pred_check_branch
      %100 = sbr.rel (0) target = $region37
    $region36: #{tpu_custom_call.1} parent=1 // pred_region
      %101 = dma.done [#allocation6], 57344
    $region37: #{tpu_custom_call.1} parent=1 // pred_fallthru
      _
    // Predicated region
    $region38: #{tpu_custom_call.1} parent=1 // pred_check
      _
    $region39: #{tpu_custom_call.1} parent=1 // pred_check_branch
      %103 = sbr.rel (0) target = $region41
    $region40: #{tpu_custom_call.1} parent=1 // pred_region
      %104 = dma.done [#allocation6], 128
    $region41: #{tpu_custom_call.1} parent=1 // pred_fallthru
      _
    // Predicated region
    $region42: #{tpu_custom_call.1} parent=1 // pred_check
      _
    $region43: #{tpu_custom_call.1} parent=1 // pred_check_branch
      %106 = sbr.rel (0) target = $region45
    $region44: #{tpu_custom_call.1} parent=1 // pred_region
      %107 = dma.done [#allocation9], 16384
    $region45: #{tpu_custom_call.1} parent=1 // pred_fallthru
      _
    // Predicated region
    $region46: #{tpu_custom_call.1} parent=1 // pred_check
      _
    $region47: #{tpu_custom_call.1} parent=1 // pred_check_branch
      %109 = sbr.rel (0) target = $region49
    $region48: #{tpu_custom_call.1} parent=1 // pred_region
      %110 = dma.done [#allocation9], 32
    $region49: #{tpu_custom_call.1} parent=1 // pred_fallthru
      _
    // Predicated region
    $region50: #{tpu_custom_call.1} parent=1 // pred_check
      _
    $region51: #{tpu_custom_call.1} parent=1 // pred_check_branch
      %112 = sbr.rel (0) target = $region53
    $region52: #{tpu_custom_call.1} parent=1 // pred_region
      %113 = dma.done [#allocation12], 2048
    $region53: #{tpu_custom_call.1} parent=1 // pred_fallthru
      _
    // Predicated region
    $region54: #{tpu_custom_call.1} parent=1 // pred_check
      _
    $region55: #{tpu_custom_call.1} parent=1 // pred_check_branch
      %115 = sbr.rel (0) target = $region57
    $region56: #{tpu_custom_call.1} parent=1 // pred_region
      %116 = dma.done [#allocation12], 16
    $region57: #{tpu_custom_call.1} parent=1 // pred_fallthru
      _
    %v118 = vld [vmem:[#allocation2] sm:$0xff]
    %v119 = vld [vmem:[#allocation2 + $0x8] sm:$0xff]
    %v120 = vld [vmem:[#allocation2 + $0x10] sm:$0xff]
    %v121 = vld [vmem:[#allocation2 + $0x18] sm:$0xff]
    %v122 = vld [vmem:[#allocation2 + $0x20] sm:$0xff]
    %v123 = vld [vmem:[#allocation2 + $0x28] sm:$0xff]
    %v124 = vld [vmem:[#allocation2 + $0x30] sm:$0xff]
    %v125 = vpack.c.bf16 %v118, %v118
    %v126 = vpack.c.bf16 %v119, %v119
    %v127 = vpack.c.bf16 %v120, %v120
    %v128 = vpack.c.bf16 %v121, %v121
    %v129 = vpack.c.bf16 %v122, %v122
    %v130 = vpack.c.bf16 %v123, %v123
    %v131 = vpack.c.bf16 %v124, %v124
    %v132 = vld [vmem:[#allocation5] sm:$0xff]
    %v133 = vld [vmem:[#allocation5 + $0x8] sm:$0xff]
    %v134 = vld [vmem:[#allocation5 + $0x10] sm:$0xff]
    %v135 = vld [vmem:[#allocation5 + $0x18] sm:$0xff]
    %v136 = vld [vmem:[#allocation5 + $0x20] sm:$0xff]
    %v137 = vld [vmem:[#allocation5 + $0x28] sm:$0xff]
    %v138 = vld [vmem:[#allocation5 + $0x30] sm:$0xff]
    %v139 = vld [vmem:[#allocation5 + $0x38] sm:$0xff]
    %v140 = vld [vmem:[#allocation5 + $0x40] sm:$0xff]
    %v141 = vld [vmem:[#allocation5 + $0x48] sm:$0xff]
    %v142 = vld [vmem:[#allocation5 + $0x50] sm:$0xff]
    %v143 = vld [vmem:[#allocation5 + $0x58] sm:$0xff]
    %v144 = vld [vmem:[#allocation5 + $0x60] sm:$0xff]
    %v145 = vld [vmem:[#allocation5 + $0x68] sm:$0xff]
    %v146 = vld [vmem:[#allocation5 + $0x70] sm:$0xff]
    %v147 = vld [vmem:[#allocation5 + $0x78] sm:$0xff]
    %v148 = vld [vmem:[#allocation5 + $0x80] sm:$0xff]
    %v149 = vld [vmem:[#allocation5 + $0x88] sm:$0xff]
    %v150 = vld [vmem:[#allocation5 + $0x90] sm:$0xff]
    %v151 = vld [vmem:[#allocation5 + $0x98] sm:$0xff]
    %v152 = vld [vmem:[#allocation5 + $0xa0] sm:$0xff]
    %v153 = vld [vmem:[#allocation5 + $0xa8] sm:$0xff]
    %v154 = vld [vmem:[#allocation5 + $0xb0] sm:$0xff]
    %v155 = vld [vmem:[#allocation5 + $0xb8] sm:$0xff]
    %v156 = vld [vmem:[#allocation5 + $0xc0] sm:$0xff]
    %v157 = vld [vmem:[#allocation5 + $0xc8] sm:$0xff]
    %v158 = vld [vmem:[#allocation5 + $0xd0] sm:$0xff]
    %v159 = vld [vmem:[#allocation5 + $0xd8] sm:$0xff]
    %v160 = vld [vmem:[#allocation5 + $0xe0] sm:$0xff]
    %v161 = vld [vmem:[#allocation5 + $0xe8] sm:$0xff]
    %v162 = vld [vmem:[#allocation5 + $0xf0] sm:$0xff]
    %v163 = vld [vmem:[#allocation5 + $0xf8] sm:$0xff]
    %v164 = vld [vmem:[#allocation5 + $0x100] sm:$0xff]
    %v165 = vld [vmem:[#allocation5 + $0x108] sm:$0xff]
    %v166 = vld [vmem:[#allocation5 + $0x110] sm:$0xff]
    %v167 = vld [vmem:[#allocation5 + $0x118] sm:$0xff]
    %v168 = vld [vmem:[#allocation5 + $0x120] sm:$0xff]
    %v169 = vld [vmem:[#allocation5 + $0x128] sm:$0xff]
    %v170 = vld [vmem:[#allocation5 + $0x130] sm:$0xff]
    %v171 = vld [vmem:[#allocation5 + $0x138] sm:$0xff]
    %v172 = vld [vmem:[#allocation5 + $0x140] sm:$0xff]
    %v173 = vld [vmem:[#allocation5 + $0x148] sm:$0xff]
    %v174 = vld [vmem:[#allocation5 + $0x150] sm:$0xff]
    %v175 = vld [vmem:[#allocation5 + $0x158] sm:$0xff]
    %v176 = vld [vmem:[#allocation5 + $0x160] sm:$0xff]
    %v177 = vld [vmem:[#allocation5 + $0x168] sm:$0xff]
    %v178 = vld [vmem:[#allocation5 + $0x170] sm:$0xff]
    %v179 = vld [vmem:[#allocation5 + $0x178] sm:$0xff]
    %v180 = vld [vmem:[#allocation5 + $0x180] sm:$0xff]
    %v181 = vld [vmem:[#allocation5 + $0x188] sm:$0xff]
    %v182 = vld [vmem:[#allocation5 + $0x190] sm:$0xff]
    %v183 = vld [vmem:[#allocation5 + $0x198] sm:$0xff]
    %v184 = vld [vmem:[#allocation5 + $0x1a0] sm:$0xff]
    %v185 = vld [vmem:[#allocation5 + $0x1a8] sm:$0xff]
    %v186 = vld [vmem:[#allocation5 + $0x1b0] sm:$0xff]
    %v187 = vld [vmem:[#allocation5 + $0x1b8] sm:$0xff]
    %v188 = vld [vmem:[#allocation5 + $0x1c0] sm:$0xff]
    %v189 = vld [vmem:[#allocation5 + $0x1c8] sm:$0xff]
    %v190 = vld [vmem:[#allocation5 + $0x1d0] sm:$0xff]
    %v191 = vld [vmem:[#allocation5 + $0x1d8] sm:$0xff]
    %v192 = vld [vmem:[#allocation5 + $0x1e0] sm:$0xff]
    %v193 = vld [vmem:[#allocation5 + $0x1e8] sm:$0xff]
    %v194 = vld [vmem:[#allocation5 + $0x1f0] sm:$0xff]
    %v195 = vld [vmem:[#allocation5 + $0x1f8] sm:$0xff]
    %v196 = vld [vmem:[#allocation5 + $0x200] sm:$0xff]
    %v197 = vld [vmem:[#allocation5 + $0x208] sm:$0xff]
    %v198 = vld [vmem:[#allocation5 + $0x210] sm:$0xff]
    %v199 = vld [vmem:[#allocation5 + $0x218] sm:$0xff]
    %v200 = vld [vmem:[#allocation5 + $0x220] sm:$0xff]
    %v201 = vld [vmem:[#allocation5 + $0x228] sm:$0xff]
    %v202 = vld [vmem:[#allocation5 + $0x230] sm:$0xff]
    %v203 = vld [vmem:[#allocation5 + $0x238] sm:$0xff]
    %v204 = vld [vmem:[#allocation5 + $0x240] sm:$0xff]
    %v205 = vld [vmem:[#allocation5 + $0x248] sm:$0xff]
    %v206 = vld [vmem:[#allocation5 + $0x250] sm:$0xff]
    %v207 = vld [vmem:[#allocation5 + $0x258] sm:$0xff]
    %v208 = vld [vmem:[#allocation5 + $0x260] sm:$0xff]
    %v209 = vld [vmem:[#allocation5 + $0x268] sm:$0xff]
    %v210 = vld [vmem:[#allocation5 + $0x270] sm:$0xff]
    %v211 = vld [vmem:[#allocation5 + $0x278] sm:$0xff]
    %v212 = vld [vmem:[#allocation5 + $0x280] sm:$0xff]
    %v213 = vld [vmem:[#allocation5 + $0x288] sm:$0xff]
    %v214 = vld [vmem:[#allocation5 + $0x290] sm:$0xff]
    %v215 = vld [vmem:[#allocation5 + $0x298] sm:$0xff]
    %v216 = vld [vmem:[#allocation5 + $0x2a0] sm:$0xff]
    %v217 = vld [vmem:[#allocation5 + $0x2a8] sm:$0xff]
    %v218 = vld [vmem:[#allocation5 + $0x2b0] sm:$0xff]
    %v219 = vld [vmem:[#allocation5 + $0x2b8] sm:$0xff]
    %v220 = vld [vmem:[#allocation5 + $0x2c0] sm:$0xff]
    %v221 = vld [vmem:[#allocation5 + $0x2c8] sm:$0xff]
    %v222 = vld [vmem:[#allocation5 + $0x2d0] sm:$0xff]
    %v223 = vld [vmem:[#allocation5 + $0x2d8] sm:$0xff]
    %v224 = vld [vmem:[#allocation5 + $0x2e0] sm:$0xff]
    %v225 = vld [vmem:[#allocation5 + $0x2e8] sm:$0xff]
    %v226 = vld [vmem:[#allocation5 + $0x2f0] sm:$0xff]
    %v227 = vld [vmem:[#allocation5 + $0x2f8] sm:$0xff]
    %v228 = vld [vmem:[#allocation5 + $0x300] sm:$0xff]
    %v229 = vld [vmem:[#allocation5 + $0x308] sm:$0xff]
    %v230 = vld [vmem:[#allocation5 + $0x310] sm:$0xff]
    %v231 = vld [vmem:[#allocation5 + $0x318] sm:$0xff]
    %v232 = vld [vmem:[#allocation5 + $0x320] sm:$0xff]
    %v233 = vld [vmem:[#allocation5 + $0x328] sm:$0xff]
    %v234 = vld [vmem:[#allocation5 + $0x330] sm:$0xff]
    %v235 = vld [vmem:[#allocation5 + $0x338] sm:$0xff]
    %v236 = vld [vmem:[#allocation5 + $0x340] sm:$0xff]
    %v237 = vld [vmem:[#allocation5 + $0x348] sm:$0xff]
    %v238 = vld [vmem:[#allocation5 + $0x350] sm:$0xff]
    %v239 = vld [vmem:[#allocation5 + $0x358] sm:$0xff]
    %v240 = vld [vmem:[#allocation5 + $0x360] sm:$0xff]
    %v241 = vld [vmem:[#allocation5 + $0x368] sm:$0xff]
    %v242 = vld [vmem:[#allocation5 + $0x370] sm:$0xff]
    %v243 = vld [vmem:[#allocation5 + $0x378] sm:$0xff]
    %v244 = vld [vmem:[#allocation5 + $0x380] sm:$0xff]
    %v245 = vld [vmem:[#allocation5 + $0x388] sm:$0xff]
    %v246 = vld [vmem:[#allocation5 + $0x390] sm:$0xff]
    %v247 = vld [vmem:[#allocation5 + $0x398] sm:$0xff]
    %v248 = vld [vmem:[#allocation5 + $0x3a0] sm:$0xff]
    %v249 = vld [vmem:[#allocation5 + $0x3a8] sm:$0xff]
    %v250 = vld [vmem:[#allocation5 + $0x3b0] sm:$0xff]
    %v251 = vld [vmem:[#allocation5 + $0x3b8] sm:$0xff]
    %v252 = vld [vmem:[#allocation5 + $0x3c0] sm:$0xff]
    %v253 = vld [vmem:[#allocation5 + $0x3c8] sm:$0xff]
    %v254 = vld [vmem:[#allocation5 + $0x3d0] sm:$0xff]
    %v255 = vld [vmem:[#allocation5 + $0x3d8] sm:$0xff]
    %v256 = vld [vmem:[#allocation5 + $0x3e0] sm:$0xff]
    %v257 = vld [vmem:[#allocation5 + $0x3e8] sm:$0xff]
    %v258 = vld [vmem:[#allocation5 + $0x3f0] sm:$0xff]
    %v259 = vld [vmem:[#allocation5 + $0x3f8] sm:$0xff]
    %v260 = vld [vmem:[#allocation5 + $0x400] sm:$0xff]
    %v261 = vld [vmem:[#allocation5 + $0x408] sm:$0xff]
    %v262 = vld [vmem:[#allocation5 + $0x410] sm:$0xff]
    %v263 = vld [vmem:[#allocation5 + $0x418] sm:$0xff]
    %v264 = vld [vmem:[#allocation5 + $0x420] sm:$0xff]
    %v265 = vld [vmem:[#allocation5 + $0x428] sm:$0xff]
    %v266 = vld [vmem:[#allocation5 + $0x430] sm:$0xff]
    %v267 = vld [vmem:[#allocation5 + $0x438] sm:$0xff]
    %v268 = vld [vmem:[#allocation5 + $0x440] sm:$0xff]
    %v269 = vld [vmem:[#allocation5 + $0x448] sm:$0xff]
    %v270 = vld [vmem:[#allocation5 + $0x450] sm:$0xff]
    %v271 = vld [vmem:[#allocation5 + $0x458] sm:$0xff]
    %v272 = vld [vmem:[#allocation5 + $0x460] sm:$0xff]
    %v273 = vld [vmem:[#allocation5 + $0x468] sm:$0xff]
    %v274 = vld [vmem:[#allocation5 + $0x470] sm:$0xff]
    %v275 = vld [vmem:[#allocation5 + $0x478] sm:$0xff]
    %v276 = vld [vmem:[#allocation5 + $0x480] sm:$0xff]
    %v277 = vld [vmem:[#allocation5 + $0x488] sm:$0xff]
    %v278 = vld [vmem:[#allocation5 + $0x490] sm:$0xff]
    %v279 = vld [vmem:[#allocation5 + $0x498] sm:$0xff]
    %v280 = vld [vmem:[#allocation5 + $0x4a0] sm:$0xff]
    %v281 = vld [vmem:[#allocation5 + $0x4a8] sm:$0xff]
    %v282 = vld [vmem:[#allocation5 + $0x4b0] sm:$0xff]
    %v283 = vld [vmem:[#allocation5 + $0x4b8] sm:$0xff]
    %v284 = vld [vmem:[#allocation5 + $0x4c0] sm:$0xff]
    %v285 = vld [vmem:[#allocation5 + $0x4c8] sm:$0xff]
    %v286 = vld [vmem:[#allocation5 + $0x4d0] sm:$0xff]
    %v287 = vld [vmem:[#allocation5 + $0x4d8] sm:$0xff]
    %v288 = vld [vmem:[#allocation5 + $0x4e0] sm:$0xff]
    %v289 = vld [vmem:[#allocation5 + $0x4e8] sm:$0xff]
    %v290 = vld [vmem:[#allocation5 + $0x4f0] sm:$0xff]
    %v291 = vld [vmem:[#allocation5 + $0x4f8] sm:$0xff]
    %v292 = vld [vmem:[#allocation5 + $0x500] sm:$0xff]
    %v293 = vld [vmem:[#allocation5 + $0x508] sm:$0xff]
    %v294 = vld [vmem:[#allocation5 + $0x510] sm:$0xff]
    %v295 = vld [vmem:[#allocation5 + $0x518] sm:$0xff]
    %v296 = vld [vmem:[#allocation5 + $0x520] sm:$0xff]
    %v297 = vld [vmem:[#allocation5 + $0x528] sm:$0xff]
    %v298 = vld [vmem:[#allocation5 + $0x530] sm:$0xff]
    %v299 = vld [vmem:[#allocation5 + $0x538] sm:$0xff]
    %v300 = vld [vmem:[#allocation5 + $0x540] sm:$0xff]
    %v301 = vld [vmem:[#allocation5 + $0x548] sm:$0xff]
    %v302 = vld [vmem:[#allocation5 + $0x550] sm:$0xff]
    %v303 = vld [vmem:[#allocation5 + $0x558] sm:$0xff]
    %v304 = vld [vmem:[#allocation5 + $0x560] sm:$0xff]
    %v305 = vld [vmem:[#allocation5 + $0x568] sm:$0xff]
    %v306 = vld [vmem:[#allocation5 + $0x570] sm:$0xff]
    %v307 = vld [vmem:[#allocation5 + $0x578] sm:$0xff]
    %v308 = vld [vmem:[#allocation5 + $0x580] sm:$0xff]
    %v309 = vld [vmem:[#allocation5 + $0x588] sm:$0xff]
    %v310 = vld [vmem:[#allocation5 + $0x590] sm:$0xff]
    %v311 = vld [vmem:[#allocation5 + $0x598] sm:$0xff]
    %v312 = vld [vmem:[#allocation5 + $0x5a0] sm:$0xff]
    %v313 = vld [vmem:[#allocation5 + $0x5a8] sm:$0xff]
    %v314 = vld [vmem:[#allocation5 + $0x5b0] sm:$0xff]
    %v315 = vld [vmem:[#allocation5 + $0x5b8] sm:$0xff]
    %v316 = vld [vmem:[#allocation5 + $0x5c0] sm:$0xff]
    %v317 = vld [vmem:[#allocation5 + $0x5c8] sm:$0xff]
    %v318 = vld [vmem:[#allocation5 + $0x5d0] sm:$0xff]
    %v319 = vld [vmem:[#allocation5 + $0x5d8] sm:$0xff]
    %v320 = vld [vmem:[#allocation5 + $0x5e0] sm:$0xff]
    %v321 = vld [vmem:[#allocation5 + $0x5e8] sm:$0xff]
    %v322 = vld [vmem:[#allocation5 + $0x5f0] sm:$0xff]
    %v323 = vld [vmem:[#allocation5 + $0x5f8] sm:$0xff]
    %v324 = vld [vmem:[#allocation5 + $0x600] sm:$0xff]
    %v325 = vld [vmem:[#allocation5 + $0x608] sm:$0xff]
    %v326 = vld [vmem:[#allocation5 + $0x610] sm:$0xff]
    %v327 = vld [vmem:[#allocation5 + $0x618] sm:$0xff]
    %v328 = vld [vmem:[#allocation5 + $0x620] sm:$0xff]
    %v329 = vld [vmem:[#allocation5 + $0x628] sm:$0xff]
    %v330 = vld [vmem:[#allocation5 + $0x630] sm:$0xff]
    %v331 = vld [vmem:[#allocation5 + $0x638] sm:$0xff]
    %v332 = vld [vmem:[#allocation5 + $0x640] sm:$0xff]
    %v333 = vld [vmem:[#allocation5 + $0x648] sm:$0xff]
    %v334 = vld [vmem:[#allocation5 + $0x650] sm:$0xff]
    %v335 = vld [vmem:[#allocation5 + $0x658] sm:$0xff]
    %v336 = vld [vmem:[#allocation5 + $0x660] sm:$0xff]
    %v337 = vld [vmem:[#allocation5 + $0x668] sm:$0xff]
    %v338 = vld [vmem:[#allocation5 + $0x670] sm:$0xff]
    %v339 = vld [vmem:[#allocation5 + $0x678] sm:$0xff]
    %v340 = vld [vmem:[#allocation5 + $0x680] sm:$0xff]
    %v341 = vld [vmem:[#allocation5 + $0x688] sm:$0xff]
    %v342 = vld [vmem:[#allocation5 + $0x690] sm:$0xff]
    %v343 = vld [vmem:[#allocation5 + $0x698] sm:$0xff]
    %v344 = vld [vmem:[#allocation5 + $0x6a0] sm:$0xff]
    %v345 = vld [vmem:[#allocation5 + $0x6a8] sm:$0xff]
    %v346 = vld [vmem:[#allocation5 + $0x6b0] sm:$0xff]
    %v347 = vld [vmem:[#allocation5 + $0x6b8] sm:$0xff]
    %v348 = vld [vmem:[#allocation5 + $0x6c0] sm:$0xff]
    %v349 = vld [vmem:[#allocation5 + $0x6c8] sm:$0xff]
    %v350 = vld [vmem:[#allocation5 + $0x6d0] sm:$0xff]
    %v351 = vld [vmem:[#allocation5 + $0x6d8] sm:$0xff]
    %v352 = vld [vmem:[#allocation5 + $0x6e0] sm:$0xff]
    %v353 = vld [vmem:[#allocation5 + $0x6e8] sm:$0xff]
    %v354 = vld [vmem:[#allocation5 + $0x6f0] sm:$0xff]
    %v355 = vld [vmem:[#allocation5 + $0x6f8] sm:$0xff]
    %v356 = vld [vmem:[#allocation5 + $0x700] sm:$0xff]
    %v357 = vld [vmem:[#allocation5 + $0x708] sm:$0xff]
    %v358 = vld [vmem:[#allocation5 + $0x710] sm:$0xff]
    %v359 = vld [vmem:[#allocation5 + $0x718] sm:$0xff]
    %v360 = vld [vmem:[#allocation5 + $0x720] sm:$0xff]
    %v361 = vld [vmem:[#allocation5 + $0x728] sm:$0xff]
    %v362 = vld [vmem:[#allocation5 + $0x730] sm:$0xff]
    %v363 = vld [vmem:[#allocation5 + $0x738] sm:$0xff]
    %v364 = vld [vmem:[#allocation5 + $0x740] sm:$0xff]
    %v365 = vld [vmem:[#allocation5 + $0x748] sm:$0xff]
    %v366 = vld [vmem:[#allocation5 + $0x750] sm:$0xff]
    %v367 = vld [vmem:[#allocation5 + $0x758] sm:$0xff]
    %v368 = vld [vmem:[#allocation5 + $0x760] sm:$0xff]
    %v369 = vld [vmem:[#allocation5 + $0x768] sm:$0xff]
    %v370 = vld [vmem:[#allocation5 + $0x770] sm:$0xff]
    %v371 = vld [vmem:[#allocation5 + $0x778] sm:$0xff]
    %v372 = vld [vmem:[#allocation5 + $0x780] sm:$0xff]
    %v373 = vld [vmem:[#allocation5 + $0x788] sm:$0xff]
    %v374 = vld [vmem:[#allocation5 + $0x790] sm:$0xff]
    %v375 = vld [vmem:[#allocation5 + $0x798] sm:$0xff]
    %v376 = vld [vmem:[#allocation5 + $0x7a0] sm:$0xff]
    %v377 = vld [vmem:[#allocation5 + $0x7a8] sm:$0xff]
    %v378 = vld [vmem:[#allocation5 + $0x7b0] sm:$0xff]
    %v379 = vld [vmem:[#allocation5 + $0x7b8] sm:$0xff]
    %v380 = vld [vmem:[#allocation5 + $0x7c0] sm:$0xff]
    %v381 = vld [vmem:[#allocation5 + $0x7c8] sm:$0xff]
    %v382 = vld [vmem:[#allocation5 + $0x7d0] sm:$0xff]
    %v383 = vld [vmem:[#allocation5 + $0x7d8] sm:$0xff]
    %v384 = vld [vmem:[#allocation5 + $0x7e0] sm:$0xff]
    %v385 = vld [vmem:[#allocation5 + $0x7e8] sm:$0xff]
    %v386 = vld [vmem:[#allocation5 + $0x7f0] sm:$0xff]
    %v387 = vld [vmem:[#allocation5 + $0x7f8] sm:$0xff]
    %v388 = vld [vmem:[#allocation5 + $0x800] sm:$0xff]
    %v389 = vld [vmem:[#allocation5 + $0x808] sm:$0xff]
    %v390 = vld [vmem:[#allocation5 + $0x810] sm:$0xff]
    %v391 = vld [vmem:[#allocation5 + $0x818] sm:$0xff]
    %v392 = vld [vmem:[#allocation5 + $0x820] sm:$0xff]
    %v393 = vld [vmem:[#allocation5 + $0x828] sm:$0xff]
    %v394 = vld [vmem:[#allocation5 + $0x830] sm:$0xff]
    %v395 = vld [vmem:[#allocation5 + $0x838] sm:$0xff]
    %v396 = vld [vmem:[#allocation5 + $0x840] sm:$0xff]
    %v397 = vld [vmem:[#allocation5 + $0x848] sm:$0xff]
    %v398 = vld [vmem:[#allocation5 + $0x850] sm:$0xff]
    %v399 = vld [vmem:[#allocation5 + $0x858] sm:$0xff]
    %v400 = vld [vmem:[#allocation5 + $0x860] sm:$0xff]
    %v401 = vld [vmem:[#allocation5 + $0x868] sm:$0xff]
    %v402 = vld [vmem:[#allocation5 + $0x870] sm:$0xff]
    %v403 = vld [vmem:[#allocation5 + $0x878] sm:$0xff]
    %v404 = vld [vmem:[#allocation5 + $0x880] sm:$0xff]
    %v405 = vld [vmem:[#allocation5 + $0x888] sm:$0xff]
    %v406 = vld [vmem:[#allocation5 + $0x890] sm:$0xff]
    %v407 = vld [vmem:[#allocation5 + $0x898] sm:$0xff]
    %v408 = vld [vmem:[#allocation5 + $0x8a0] sm:$0xff]
    %v409 = vld [vmem:[#allocation5 + $0x8a8] sm:$0xff]
    %v410 = vld [vmem:[#allocation5 + $0x8b0] sm:$0xff]
    %v411 = vld [vmem:[#allocation5 + $0x8b8] sm:$0xff]
    %v412 = vld [vmem:[#allocation5 + $0x8c0] sm:$0xff]
    %v413 = vld [vmem:[#allocation5 + $0x8c8] sm:$0xff]
    %v414 = vld [vmem:[#allocation5 + $0x8d0] sm:$0xff]
    %v415 = vld [vmem:[#allocation5 + $0x8d8] sm:$0xff]
    %v416 = vld [vmem:[#allocation5 + $0x8e0] sm:$0xff]
    %v417 = vld [vmem:[#allocation5 + $0x8e8] sm:$0xff]
    %v418 = vld [vmem:[#allocation5 + $0x8f0] sm:$0xff]
    %v419 = vld [vmem:[#allocation5 + $0x8f8] sm:$0xff]
    %v420 = vld [vmem:[#allocation5 + $0x900] sm:$0xff]
    %v421 = vld [vmem:[#allocation5 + $0x908] sm:$0xff]
    %v422 = vld [vmem:[#allocation5 + $0x910] sm:$0xff]
    %v423 = vld [vmem:[#allocation5 + $0x918] sm:$0xff]
    %v424 = vld [vmem:[#allocation5 + $0x920] sm:$0xff]
    %v425 = vld [vmem:[#allocation5 + $0x928] sm:$0xff]
    %v426 = vld [vmem:[#allocation5 + $0x930] sm:$0xff]
    %v427 = vld [vmem:[#allocation5 + $0x938] sm:$0xff]
    %v428 = vld [vmem:[#allocation5 + $0x940] sm:$0xff]
    %v429 = vld [vmem:[#allocation5 + $0x948] sm:$0xff]
    %v430 = vld [vmem:[#allocation5 + $0x950] sm:$0xff]
    %v431 = vld [vmem:[#allocation5 + $0x958] sm:$0xff]
    %v432 = vld [vmem:[#allocation5 + $0x960] sm:$0xff]
    %v433 = vld [vmem:[#allocation5 + $0x968] sm:$0xff]
    %v434 = vld [vmem:[#allocation5 + $0x970] sm:$0xff]
    %v435 = vld [vmem:[#allocation5 + $0x978] sm:$0xff]
    %v436 = vld [vmem:[#allocation5 + $0x980] sm:$0xff]
    %v437 = vld [vmem:[#allocation5 + $0x988] sm:$0xff]
    %v438 = vld [vmem:[#allocation5 + $0x990] sm:$0xff]
    %v439 = vld [vmem:[#allocation5 + $0x998] sm:$0xff]
    %v440 = vld [vmem:[#allocation5 + $0x9a0] sm:$0xff]
    %v441 = vld [vmem:[#allocation5 + $0x9a8] sm:$0xff]
    %v442 = vld [vmem:[#allocation5 + $0x9b0] sm:$0xff]
    %v443 = vld [vmem:[#allocation5 + $0x9b8] sm:$0xff]
    %v444 = vld [vmem:[#allocation5 + $0x9c0] sm:$0xff]
    %v445 = vld [vmem:[#allocation5 + $0x9c8] sm:$0xff]
    %v446 = vld [vmem:[#allocation5 + $0x9d0] sm:$0xff]
    %v447 = vld [vmem:[#allocation5 + $0x9d8] sm:$0xff]
    %v448 = vld [vmem:[#allocation5 + $0x9e0] sm:$0xff]
    %v449 = vld [vmem:[#allocation5 + $0x9e8] sm:$0xff]
    %v450 = vld [vmem:[#allocation5 + $0x9f0] sm:$0xff]
    %v451 = vld [vmem:[#allocation5 + $0x9f8] sm:$0xff]
    %v452 = vld [vmem:[#allocation5 + $0xa00] sm:$0xff]
    %v453 = vld [vmem:[#allocation5 + $0xa08] sm:$0xff]
    %v454 = vld [vmem:[#allocation5 + $0xa10] sm:$0xff]
    %v455 = vld [vmem:[#allocation5 + $0xa18] sm:$0xff]
    %v456 = vld [vmem:[#allocation5 + $0xa20] sm:$0xff]
    %v457 = vld [vmem:[#allocation5 + $0xa28] sm:$0xff]
    %v458 = vld [vmem:[#allocation5 + $0xa30] sm:$0xff]
    %v459 = vld [vmem:[#allocation5 + $0xa38] sm:$0xff]
    %v460 = vld [vmem:[#allocation5 + $0xa40] sm:$0xff]
    %v461 = vld [vmem:[#allocation5 + $0xa48] sm:$0xff]
    %v462 = vld [vmem:[#allocation5 + $0xa50] sm:$0xff]
    %v463 = vld [vmem:[#allocation5 + $0xa58] sm:$0xff]
    %v464 = vld [vmem:[#allocation5 + $0xa60] sm:$0xff]
    %v465 = vld [vmem:[#allocation5 + $0xa68] sm:$0xff]
    %v466 = vld [vmem:[#allocation5 + $0xa70] sm:$0xff]
    %v467 = vld [vmem:[#allocation5 + $0xa78] sm:$0xff]
    %v468 = vld [vmem:[#allocation5 + $0xa80] sm:$0xff]
    %v469 = vld [vmem:[#allocation5 + $0xa88] sm:$0xff]
    %v470 = vld [vmem:[#allocation5 + $0xa90] sm:$0xff]
    %v471 = vld [vmem:[#allocation5 + $0xa98] sm:$0xff]
    %v472 = vld [vmem:[#allocation5 + $0xaa0] sm:$0xff]
    %v473 = vld [vmem:[#allocation5 + $0xaa8] sm:$0xff]
    %v474 = vld [vmem:[#allocation5 + $0xab0] sm:$0xff]
    %v475 = vld [vmem:[#allocation5 + $0xab8] sm:$0xff]
    %v476 = vld [vmem:[#allocation5 + $0xac0] sm:$0xff]
    %v477 = vld [vmem:[#allocation5 + $0xac8] sm:$0xff]
    %v478 = vld [vmem:[#allocation5 + $0xad0] sm:$0xff]
    %v479 = vld [vmem:[#allocation5 + $0xad8] sm:$0xff]
    %v480 = vld [vmem:[#allocation5 + $0xae0] sm:$0xff]
    %v481 = vld [vmem:[#allocation5 + $0xae8] sm:$0xff]
    %v482 = vld [vmem:[#allocation5 + $0xaf0] sm:$0xff]
    %v483 = vld [vmem:[#allocation5 + $0xaf8] sm:$0xff]
    %v484 = vld [vmem:[#allocation5 + $0xb00] sm:$0xff]
    %v485 = vld [vmem:[#allocation5 + $0xb08] sm:$0xff]
    %v486 = vld [vmem:[#allocation5 + $0xb10] sm:$0xff]
    %v487 = vld [vmem:[#allocation5 + $0xb18] sm:$0xff]
    %v488 = vld [vmem:[#allocation5 + $0xb20] sm:$0xff]
    %v489 = vld [vmem:[#allocation5 + $0xb28] sm:$0xff]
    %v490 = vld [vmem:[#allocation5 + $0xb30] sm:$0xff]
    %v491 = vld [vmem:[#allocation5 + $0xb38] sm:$0xff]
    %v492 = vld [vmem:[#allocation5 + $0xb40] sm:$0xff]
    %v493 = vld [vmem:[#allocation5 + $0xb48] sm:$0xff]
    %v494 = vld [vmem:[#allocation5 + $0xb50] sm:$0xff]
    %v495 = vld [vmem:[#allocation5 + $0xb58] sm:$0xff]
    %v496 = vld [vmem:[#allocation5 + $0xb60] sm:$0xff]
    %v497 = vld [vmem:[#allocation5 + $0xb68] sm:$0xff]
    %v498 = vld [vmem:[#allocation5 + $0xb70] sm:$0xff]
    %v499 = vld [vmem:[#allocation5 + $0xb78] sm:$0xff]
    %v500 = vld [vmem:[#allocation5 + $0xb80] sm:$0xff]
    %v501 = vld [vmem:[#allocation5 + $0xb88] sm:$0xff]
    %v502 = vld [vmem:[#allocation5 + $0xb90] sm:$0xff]
    %v503 = vld [vmem:[#allocation5 + $0xb98] sm:$0xff]
    %v504 = vld [vmem:[#allocation5 + $0xba0] sm:$0xff]
    %v505 = vld [vmem:[#allocation5 + $0xba8] sm:$0xff]
    %v506 = vld [vmem:[#allocation5 + $0xbb0] sm:$0xff]
    %v507 = vld [vmem:[#allocation5 + $0xbb8] sm:$0xff]
    %v508 = vld [vmem:[#allocation5 + $0xbc0] sm:$0xff]
    %v509 = vld [vmem:[#allocation5 + $0xbc8] sm:$0xff]
    %v510 = vld [vmem:[#allocation5 + $0xbd0] sm:$0xff]
    %v511 = vld [vmem:[#allocation5 + $0xbd8] sm:$0xff]
    %v512 = vld [vmem:[#allocation5 + $0xbe0] sm:$0xff]
    %v513 = vld [vmem:[#allocation5 + $0xbe8] sm:$0xff]
    %v514 = vld [vmem:[#allocation5 + $0xbf0] sm:$0xff]
    %v515 = vld [vmem:[#allocation5 + $0xbf8] sm:$0xff]
    %v516 = vld [vmem:[#allocation5 + $0xc00] sm:$0xff]
    %v517 = vld [vmem:[#allocation5 + $0xc08] sm:$0xff]
    %v518 = vld [vmem:[#allocation5 + $0xc10] sm:$0xff]
    %v519 = vld [vmem:[#allocation5 + $0xc18] sm:$0xff]
    %v520 = vld [vmem:[#allocation5 + $0xc20] sm:$0xff]
    %v521 = vld [vmem:[#allocation5 + $0xc28] sm:$0xff]
    %v522 = vld [vmem:[#allocation5 + $0xc30] sm:$0xff]
    %v523 = vld [vmem:[#allocation5 + $0xc38] sm:$0xff]
    %v524 = vld [vmem:[#allocation5 + $0xc40] sm:$0xff]
    %v525 = vld [vmem:[#allocation5 + $0xc48] sm:$0xff]
    %v526 = vld [vmem:[#allocation5 + $0xc50] sm:$0xff]
    %v527 = vld [vmem:[#allocation5 + $0xc58] sm:$0xff]
    %v528 = vld [vmem:[#allocation5 + $0xc60] sm:$0xff]
    %v529 = vld [vmem:[#allocation5 + $0xc68] sm:$0xff]
    %v530 = vld [vmem:[#allocation5 + $0xc70] sm:$0xff]
    %v531 = vld [vmem:[#allocation5 + $0xc78] sm:$0xff]
    %v532 = vld [vmem:[#allocation5 + $0xc80] sm:$0xff]
    %v533 = vld [vmem:[#allocation5 + $0xc88] sm:$0xff]
    %v534 = vld [vmem:[#allocation5 + $0xc90] sm:$0xff]
    %v535 = vld [vmem:[#allocation5 + $0xc98] sm:$0xff]
    %v536 = vld [vmem:[#allocation5 + $0xca0] sm:$0xff]
    %v537 = vld [vmem:[#allocation5 + $0xca8] sm:$0xff]
    %v538 = vld [vmem:[#allocation5 + $0xcb0] sm:$0xff]
    %v539 = vld [vmem:[#allocation5 + $0xcb8] sm:$0xff]
    %v540 = vld [vmem:[#allocation5 + $0xcc0] sm:$0xff]
    %v541 = vld [vmem:[#allocation5 + $0xcc8] sm:$0xff]
    %v542 = vld [vmem:[#allocation5 + $0xcd0] sm:$0xff]
    %v543 = vld [vmem:[#allocation5 + $0xcd8] sm:$0xff]
    %v544 = vld [vmem:[#allocation5 + $0xce0] sm:$0xff]
    %v545 = vld [vmem:[#allocation5 + $0xce8] sm:$0xff]
    %v546 = vld [vmem:[#allocation5 + $0xcf0] sm:$0xff]
    %v547 = vld [vmem:[#allocation5 + $0xcf8] sm:$0xff]
    %v548 = vld [vmem:[#allocation5 + $0xd00] sm:$0xff]
    %v549 = vld [vmem:[#allocation5 + $0xd08] sm:$0xff]
    %v550 = vld [vmem:[#allocation5 + $0xd10] sm:$0xff]
    %v551 = vld [vmem:[#allocation5 + $0xd18] sm:$0xff]
    %v552 = vld [vmem:[#allocation5 + $0xd20] sm:$0xff]
    %v553 = vld [vmem:[#allocation5 + $0xd28] sm:$0xff]
    %v554 = vld [vmem:[#allocation5 + $0xd30] sm:$0xff]
    %v555 = vld [vmem:[#allocation5 + $0xd38] sm:$0xff]
    %v556 = vld [vmem:[#allocation5 + $0xd40] sm:$0xff]
    %v557 = vld [vmem:[#allocation5 + $0xd48] sm:$0xff]
    %v558 = vld [vmem:[#allocation5 + $0xd50] sm:$0xff]
    %v559 = vld [vmem:[#allocation5 + $0xd58] sm:$0xff]
    %v560 = vld [vmem:[#allocation5 + $0xd60] sm:$0xff]
    %v561 = vld [vmem:[#allocation5 + $0xd68] sm:$0xff]
    %v562 = vld [vmem:[#allocation5 + $0xd70] sm:$0xff]
    %v563 = vld [vmem:[#allocation5 + $0xd78] sm:$0xff]
    %v564 = vld [vmem:[#allocation5 + $0xd80] sm:$0xff]
    %v565 = vld [vmem:[#allocation5 + $0xd88] sm:$0xff]
    %v566 = vld [vmem:[#allocation5 + $0xd90] sm:$0xff]
    %v567 = vld [vmem:[#allocation5 + $0xd98] sm:$0xff]
    %v568 = vld [vmem:[#allocation5 + $0xda0] sm:$0xff]
    %v569 = vld [vmem:[#allocation5 + $0xda8] sm:$0xff]
    %v570 = vld [vmem:[#allocation5 + $0xdb0] sm:$0xff]
    %v571 = vld [vmem:[#allocation5 + $0xdb8] sm:$0xff]
    %v572 = vld [vmem:[#allocation5 + $0xdc0] sm:$0xff]
    %v573 = vld [vmem:[#allocation5 + $0xdc8] sm:$0xff]
    %v574 = vld [vmem:[#allocation5 + $0xdd0] sm:$0xff]
    %v575 = vld [vmem:[#allocation5 + $0xdd8] sm:$0xff]
    %v576 = vld [vmem:[#allocation5 + $0xde0] sm:$0xff]
    %v577 = vld [vmem:[#allocation5 + $0xde8] sm:$0xff]
    %v578 = vld [vmem:[#allocation5 + $0xdf0] sm:$0xff]
    %v579 = vld [vmem:[#allocation5 + $0xdf8] sm:$0xff]
    %v580 = vld [vmem:[#allocation7] sm:$0xff]
    %v582 = vlaneseq
    %v583 = vshrl.u32 %v582, 7
    %v584 = vsub.s32 0, %v583
    %v585 = vrot.slane %v580, %v584
    %v586 = vlaneseq
    %v587 = vshrl.u32 %v586, 7
    %v588 = vsub.s32 1, %v587
    %v589 = vrot.slane %v580, %v588
    %v590 = vlaneseq
    %v591 = vshrl.u32 %v590, 7
    %v592 = vsub.s32 2, %v591
    %v593 = vrot.slane %v580, %v592
    %v594 = vlaneseq
    %v595 = vshrl.u32 %v594, 7
    %v596 = vsub.s32 3, %v595
    %v597 = vrot.slane %v580, %v596
    %v598 = vlaneseq
    %v599 = vshrl.u32 %v598, 7
    %v600 = vsub.s32 4, %v599
    %v601 = vrot.slane %v580, %v600
    %v602 = vlaneseq
    %v603 = vshrl.u32 %v602, 7
    %v604 = vsub.s32 5, %v603
    %v605 = vrot.slane %v580, %v604
    %v606 = vlaneseq
    %v607 = vshrl.u32 %v606, 7
    %v608 = vsub.s32 6, %v607
    %v609 = vrot.slane %v580, %v608
    %v610 = vlaneseq
    %v611 = vshrl.u32 %v610, 7
    %v612 = vsub.s32 7, %v611
    %v613 = vrot.slane %v580, %v612
    %v1070 = vunpack.c.l.b16 %v132
    %v1071 = vunpack.c.h.b16 %v132
    %v1072 = vunpack.c.l.b16 %v133
    %v1073 = vunpack.c.h.b16 %v133
    %v1074 = vunpack.c.l.b16 %v134
    %v1075 = vunpack.c.h.b16 %v134
    %v1076 = vunpack.c.l.b16 %v135
    %v1077 = vunpack.c.h.b16 %v135
    %v1078 = vunpack.c.l.b16 %v136
    %v1079 = vunpack.c.h.b16 %v136
    %v1080 = vunpack.c.l.b16 %v137
    %v1081 = vunpack.c.h.b16 %v137
    %v1082 = vunpack.c.l.b16 %v138
    %v1083 = vunpack.c.h.b16 %v138
    %v1084 = vunpack.c.l.b16 %v139
    %v1085 = vunpack.c.h.b16 %v139
    %v1086 = vunpack.c.l.b16 %v140
    %v1087 = vunpack.c.h.b16 %v140
    %v1088 = vunpack.c.l.b16 %v141
    %v1089 = vunpack.c.h.b16 %v141
    %v1090 = vunpack.c.l.b16 %v142
    %v1091 = vunpack.c.h.b16 %v142
    %v1092 = vunpack.c.l.b16 %v143
    %v1093 = vunpack.c.h.b16 %v143
    %v1094 = vunpack.c.l.b16 %v144
    %v1095 = vunpack.c.h.b16 %v144
    %v1096 = vunpack.c.l.b16 %v145
    %v1097 = vunpack.c.h.b16 %v145
    %v1098 = vunpack.c.l.b16 %v146
    %v1099 = vunpack.c.h.b16 %v146
    %v1100 = vunpack.c.l.b16 %v147
    %v1101 = vunpack.c.h.b16 %v147
    %v1102 = vunpack.c.l.b16 %v148
    %v1103 = vunpack.c.h.b16 %v148
    %v1104 = vunpack.c.l.b16 %v149
    %v1105 = vunpack.c.h.b16 %v149
    %v1106 = vunpack.c.l.b16 %v150
    %v1107 = vunpack.c.h.b16 %v150
    %v1108 = vunpack.c.l.b16 %v151
    %v1109 = vunpack.c.h.b16 %v151
    %v1110 = vunpack.c.l.b16 %v152
    %v1111 = vunpack.c.h.b16 %v152
    %v1112 = vunpack.c.l.b16 %v153
    %v1113 = vunpack.c.h.b16 %v153
    %v1114 = vunpack.c.l.b16 %v154
    %v1115 = vunpack.c.h.b16 %v154
    %v1116 = vunpack.c.l.b16 %v155
    %v1117 = vunpack.c.h.b16 %v155
    %v1118 = vunpack.c.l.b16 %v156
    %v1119 = vunpack.c.h.b16 %v156
    %v1120 = vunpack.c.l.b16 %v157
    %v1121 = vunpack.c.h.b16 %v157
    %v1122 = vunpack.c.l.b16 %v158
    %v1123 = vunpack.c.h.b16 %v158
    %v1124 = vunpack.c.l.b16 %v159
    %v1125 = vunpack.c.h.b16 %v159
    %v1126 = vunpack.c.l.b16 %v160
    %v1127 = vunpack.c.h.b16 %v160
    %v1128 = vunpack.c.l.b16 %v161
    %v1129 = vunpack.c.h.b16 %v161
    %v1130 = vunpack.c.l.b16 %v162
    %v1131 = vunpack.c.h.b16 %v162
    %v1132 = vunpack.c.l.b16 %v163
    %v1133 = vunpack.c.h.b16 %v163
    %v1134 = vunpack.c.l.b16 %v164
    %v1135 = vunpack.c.h.b16 %v164
    %v1136 = vunpack.c.l.b16 %v165
    %v1137 = vunpack.c.h.b16 %v165
    %v1138 = vunpack.c.l.b16 %v166
    %v1139 = vunpack.c.h.b16 %v166
    %v1140 = vunpack.c.l.b16 %v167
    %v1141 = vunpack.c.h.b16 %v167
    %v1142 = vunpack.c.l.b16 %v168
    %v1143 = vunpack.c.h.b16 %v168
    %v1144 = vunpack.c.l.b16 %v169
    %v1145 = vunpack.c.h.b16 %v169
    %v1146 = vunpack.c.l.b16 %v170
    %v1147 = vunpack.c.h.b16 %v170
    %v1148 = vunpack.c.l.b16 %v171
    %v1149 = vunpack.c.h.b16 %v171
    %v1150 = vunpack.c.l.b16 %v172
    %v1151 = vunpack.c.h.b16 %v172
    %v1152 = vunpack.c.l.b16 %v173
    %v1153 = vunpack.c.h.b16 %v173
    %v1154 = vunpack.c.l.b16 %v174
    %v1155 = vunpack.c.h.b16 %v174
    %v1156 = vunpack.c.l.b16 %v175
    %v1157 = vunpack.c.h.b16 %v175
    %v1158 = vunpack.c.l.b16 %v176
    %v1159 = vunpack.c.h.b16 %v176
    %v1160 = vunpack.c.l.b16 %v177
    %v1161 = vunpack.c.h.b16 %v177
    %v1162 = vunpack.c.l.b16 %v178
    %v1163 = vunpack.c.h.b16 %v178
    %v1164 = vunpack.c.l.b16 %v179
    %v1165 = vunpack.c.h.b16 %v179
    %v1166 = vunpack.c.l.b16 %v180
    %v1167 = vunpack.c.h.b16 %v180
    %v1168 = vunpack.c.l.b16 %v181
    %v1169 = vunpack.c.h.b16 %v181
    %v1170 = vunpack.c.l.b16 %v182
    %v1171 = vunpack.c.h.b16 %v182
    %v1172 = vunpack.c.l.b16 %v183
    %v1173 = vunpack.c.h.b16 %v183
    %v1174 = vunpack.c.l.b16 %v184
    %v1175 = vunpack.c.h.b16 %v184
    %v1176 = vunpack.c.l.b16 %v185
    %v1177 = vunpack.c.h.b16 %v185
    %v1178 = vunpack.c.l.b16 %v186
    %v1179 = vunpack.c.h.b16 %v186
    %v1180 = vunpack.c.l.b16 %v187
    %v1181 = vunpack.c.h.b16 %v187
    %v1182 = vunpack.c.l.b16 %v188
    %v1183 = vunpack.c.h.b16 %v188
    %v1184 = vunpack.c.l.b16 %v189
    %v1185 = vunpack.c.h.b16 %v189
    %v1186 = vunpack.c.l.b16 %v190
    %v1187 = vunpack.c.h.b16 %v190
    %v1188 = vunpack.c.l.b16 %v191
    %v1189 = vunpack.c.h.b16 %v191
    %v1190 = vunpack.c.l.b16 %v192
    %v1191 = vunpack.c.h.b16 %v192
    %v1192 = vunpack.c.l.b16 %v193
    %v1193 = vunpack.c.h.b16 %v193
    %v1194 = vunpack.c.l.b16 %v194
    %v1195 = vunpack.c.h.b16 %v194
    %v1196 = vunpack.c.l.b16 %v195
    %v1197 = vunpack.c.h.b16 %v195
    %v1198 = vunpack.c.l.b16 %v196
    %v1199 = vunpack.c.h.b16 %v196
    %v1200 = vunpack.c.l.b16 %v197
    %v1201 = vunpack.c.h.b16 %v197
    %v1202 = vunpack.c.l.b16 %v198
    %v1203 = vunpack.c.h.b16 %v198
    %v1204 = vunpack.c.l.b16 %v199
    %v1205 = vunpack.c.h.b16 %v199
    %v1206 = vunpack.c.l.b16 %v200
    %v1207 = vunpack.c.h.b16 %v200
    %v1208 = vunpack.c.l.b16 %v201
    %v1209 = vunpack.c.h.b16 %v201
    %v1210 = vunpack.c.l.b16 %v202
    %v1211 = vunpack.c.h.b16 %v202
    %v1212 = vunpack.c.l.b16 %v203
    %v1213 = vunpack.c.h.b16 %v203
    %v1214 = vunpack.c.l.b16 %v204
    %v1215 = vunpack.c.h.b16 %v204
    %v1216 = vunpack.c.l.b16 %v205
    %v1217 = vunpack.c.h.b16 %v205
    %v1218 = vunpack.c.l.b16 %v206
    %v1219 = vunpack.c.h.b16 %v206
    %v1220 = vunpack.c.l.b16 %v207
    %v1221 = vunpack.c.h.b16 %v207
    %v1222 = vunpack.c.l.b16 %v208
    %v1223 = vunpack.c.h.b16 %v208
    %v1224 = vunpack.c.l.b16 %v209
    %v1225 = vunpack.c.h.b16 %v209
    %v1226 = vunpack.c.l.b16 %v210
    %v1227 = vunpack.c.h.b16 %v210
    %v1228 = vunpack.c.l.b16 %v211
    %v1229 = vunpack.c.h.b16 %v211
    %v1230 = vunpack.c.l.b16 %v212
    %v1231 = vunpack.c.h.b16 %v212
    %v1232 = vunpack.c.l.b16 %v213
    %v1233 = vunpack.c.h.b16 %v213
    %v1234 = vunpack.c.l.b16 %v214
    %v1235 = vunpack.c.h.b16 %v214
    %v1236 = vunpack.c.l.b16 %v215
    %v1237 = vunpack.c.h.b16 %v215
    %v1238 = vunpack.c.l.b16 %v216
    %v1239 = vunpack.c.h.b16 %v216
    %v1240 = vunpack.c.l.b16 %v217
    %v1241 = vunpack.c.h.b16 %v217
    %v1242 = vunpack.c.l.b16 %v218
    %v1243 = vunpack.c.h.b16 %v218
    %v1244 = vunpack.c.l.b16 %v219
    %v1245 = vunpack.c.h.b16 %v219
    %v1246 = vunpack.c.l.b16 %v220
    %v1247 = vunpack.c.h.b16 %v220
    %v1248 = vunpack.c.l.b16 %v221
    %v1249 = vunpack.c.h.b16 %v221
    %v1250 = vunpack.c.l.b16 %v222
    %v1251 = vunpack.c.h.b16 %v222
    %v1252 = vunpack.c.l.b16 %v223
    %v1253 = vunpack.c.h.b16 %v223
    %v1254 = vunpack.c.l.b16 %v224
    %v1255 = vunpack.c.h.b16 %v224
    %v1256 = vunpack.c.l.b16 %v225
    %v1257 = vunpack.c.h.b16 %v225
    %v1258 = vunpack.c.l.b16 %v226
    %v1259 = vunpack.c.h.b16 %v226
    %v1260 = vunpack.c.l.b16 %v227
    %v1261 = vunpack.c.h.b16 %v227
    %v1262 = vunpack.c.l.b16 %v228
    %v1263 = vunpack.c.h.b16 %v228
    %v1264 = vunpack.c.l.b16 %v229
    %v1265 = vunpack.c.h.b16 %v229
    %v1266 = vunpack.c.l.b16 %v230
    %v1267 = vunpack.c.h.b16 %v230
    %v1268 = vunpack.c.l.b16 %v231
    %v1269 = vunpack.c.h.b16 %v231
    %v1270 = vunpack.c.l.b16 %v232
    %v1271 = vunpack.c.h.b16 %v232
    %v1272 = vunpack.c.l.b16 %v233
    %v1273 = vunpack.c.h.b16 %v233
    %v1274 = vunpack.c.l.b16 %v234
    %v1275 = vunpack.c.h.b16 %v234
    %v1276 = vunpack.c.l.b16 %v235
    %v1277 = vunpack.c.h.b16 %v235
    %v1278 = vunpack.c.l.b16 %v236
    %v1279 = vunpack.c.h.b16 %v236
    %v1280 = vunpack.c.l.b16 %v237
    %v1281 = vunpack.c.h.b16 %v237
    %v1282 = vunpack.c.l.b16 %v238
    %v1283 = vunpack.c.h.b16 %v238
    %v1284 = vunpack.c.l.b16 %v239
    %v1285 = vunpack.c.h.b16 %v239
    %v1286 = vunpack.c.l.b16 %v240
    %v1287 = vunpack.c.h.b16 %v240
    %v1288 = vunpack.c.l.b16 %v241
    %v1289 = vunpack.c.h.b16 %v241
    %v1290 = vunpack.c.l.b16 %v242
    %v1291 = vunpack.c.h.b16 %v242
    %v1292 = vunpack.c.l.b16 %v243
    %v1293 = vunpack.c.h.b16 %v243
    %v1294 = vunpack.c.l.b16 %v244
    %v1295 = vunpack.c.h.b16 %v244
    %v1296 = vunpack.c.l.b16 %v245
    %v1297 = vunpack.c.h.b16 %v245
    %v1298 = vunpack.c.l.b16 %v246
    %v1299 = vunpack.c.h.b16 %v246
    %v1300 = vunpack.c.l.b16 %v247
    %v1301 = vunpack.c.h.b16 %v247
    %v1302 = vunpack.c.l.b16 %v248
    %v1303 = vunpack.c.h.b16 %v248
    %v1304 = vunpack.c.l.b16 %v249
    %v1305 = vunpack.c.h.b16 %v249
    %v1306 = vunpack.c.l.b16 %v250
    %v1307 = vunpack.c.h.b16 %v250
    %v1308 = vunpack.c.l.b16 %v251
    %v1309 = vunpack.c.h.b16 %v251
    %v1310 = vunpack.c.l.b16 %v252
    %v1311 = vunpack.c.h.b16 %v252
    %v1312 = vunpack.c.l.b16 %v253
    %v1313 = vunpack.c.h.b16 %v253
    %v1314 = vunpack.c.l.b16 %v254
    %v1315 = vunpack.c.h.b16 %v254
    %v1316 = vunpack.c.l.b16 %v255
    %v1317 = vunpack.c.h.b16 %v255
    %v1318 = vunpack.c.l.b16 %v256
    %v1319 = vunpack.c.h.b16 %v256
    %v1320 = vunpack.c.l.b16 %v257
    %v1321 = vunpack.c.h.b16 %v257
    %v1322 = vunpack.c.l.b16 %v258
    %v1323 = vunpack.c.h.b16 %v258
    %v1324 = vunpack.c.l.b16 %v259
    %v1325 = vunpack.c.h.b16 %v259
    %v1326 = vunpack.c.l.b16 %v260
    %v1327 = vunpack.c.h.b16 %v260
    %v1328 = vunpack.c.l.b16 %v261
    %v1329 = vunpack.c.h.b16 %v261
    %v1330 = vunpack.c.l.b16 %v262
    %v1331 = vunpack.c.h.b16 %v262
    %v1332 = vunpack.c.l.b16 %v263
    %v1333 = vunpack.c.h.b16 %v263
    %v1334 = vunpack.c.l.b16 %v264
    %v1335 = vunpack.c.h.b16 %v264
    %v1336 = vunpack.c.l.b16 %v265
    %v1337 = vunpack.c.h.b16 %v265
    %v1338 = vunpack.c.l.b16 %v266
    %v1339 = vunpack.c.h.b16 %v266
    %v1340 = vunpack.c.l.b16 %v267
    %v1341 = vunpack.c.h.b16 %v267
    %v1342 = vunpack.c.l.b16 %v268
    %v1343 = vunpack.c.h.b16 %v268
    %v1344 = vunpack.c.l.b16 %v269
    %v1345 = vunpack.c.h.b16 %v269
    %v1346 = vunpack.c.l.b16 %v270
    %v1347 = vunpack.c.h.b16 %v270
    %v1348 = vunpack.c.l.b16 %v271
    %v1349 = vunpack.c.h.b16 %v271
    %v1350 = vunpack.c.l.b16 %v272
    %v1351 = vunpack.c.h.b16 %v272
    %v1352 = vunpack.c.l.b16 %v273
    %v1353 = vunpack.c.h.b16 %v273
    %v1354 = vunpack.c.l.b16 %v274
    %v1355 = vunpack.c.h.b16 %v274
    %v1356 = vunpack.c.l.b16 %v275
    %v1357 = vunpack.c.h.b16 %v275
    %v1358 = vunpack.c.l.b16 %v276
    %v1359 = vunpack.c.h.b16 %v276
    %v1360 = vunpack.c.l.b16 %v277
    %v1361 = vunpack.c.h.b16 %v277
    %v1362 = vunpack.c.l.b16 %v278
    %v1363 = vunpack.c.h.b16 %v278
    %v1364 = vunpack.c.l.b16 %v279
    %v1365 = vunpack.c.h.b16 %v279
    %v1366 = vunpack.c.l.b16 %v280
    %v1367 = vunpack.c.h.b16 %v280
    %v1368 = vunpack.c.l.b16 %v281
    %v1369 = vunpack.c.h.b16 %v281
    %v1370 = vunpack.c.l.b16 %v282
    %v1371 = vunpack.c.h.b16 %v282
    %v1372 = vunpack.c.l.b16 %v283
    %v1373 = vunpack.c.h.b16 %v283
    %v1374 = vunpack.c.l.b16 %v284
    %v1375 = vunpack.c.h.b16 %v284
    %v1376 = vunpack.c.l.b16 %v285
    %v1377 = vunpack.c.h.b16 %v285
    %v1378 = vunpack.c.l.b16 %v286
    %v1379 = vunpack.c.h.b16 %v286
    %v1380 = vunpack.c.l.b16 %v287
    %v1381 = vunpack.c.h.b16 %v287
    %v1382 = vunpack.c.l.b16 %v288
    %v1383 = vunpack.c.h.b16 %v288
    %v1384 = vunpack.c.l.b16 %v289
    %v1385 = vunpack.c.h.b16 %v289
    %v1386 = vunpack.c.l.b16 %v290
    %v1387 = vunpack.c.h.b16 %v290
    %v1388 = vunpack.c.l.b16 %v291
    %v1389 = vunpack.c.h.b16 %v291
    %v1390 = vunpack.c.l.b16 %v292
    %v1391 = vunpack.c.h.b16 %v292
    %v1392 = vunpack.c.l.b16 %v293
    %v1393 = vunpack.c.h.b16 %v293
    %v1394 = vunpack.c.l.b16 %v294
    %v1395 = vunpack.c.h.b16 %v294
    %v1396 = vunpack.c.l.b16 %v295
    %v1397 = vunpack.c.h.b16 %v295
    %v1398 = vunpack.c.l.b16 %v296
    %v1399 = vunpack.c.h.b16 %v296
    %v1400 = vunpack.c.l.b16 %v297
    %v1401 = vunpack.c.h.b16 %v297
    %v1402 = vunpack.c.l.b16 %v298
    %v1403 = vunpack.c.h.b16 %v298
    %v1404 = vunpack.c.l.b16 %v299
    %v1405 = vunpack.c.h.b16 %v299
    %v1406 = vunpack.c.l.b16 %v300
    %v1407 = vunpack.c.h.b16 %v300
    %v1408 = vunpack.c.l.b16 %v301
    %v1409 = vunpack.c.h.b16 %v301
    %v1410 = vunpack.c.l.b16 %v302
    %v1411 = vunpack.c.h.b16 %v302
    %v1412 = vunpack.c.l.b16 %v303
    %v1413 = vunpack.c.h.b16 %v303
    %v1414 = vunpack.c.l.b16 %v304
    %v1415 = vunpack.c.h.b16 %v304
    %v1416 = vunpack.c.l.b16 %v305
    %v1417 = vunpack.c.h.b16 %v305
    %v1418 = vunpack.c.l.b16 %v306
    %v1419 = vunpack.c.h.b16 %v306
    %v1420 = vunpack.c.l.b16 %v307
    %v1421 = vunpack.c.h.b16 %v307
    %v1422 = vunpack.c.l.b16 %v308
    %v1423 = vunpack.c.h.b16 %v308
    %v1424 = vunpack.c.l.b16 %v309
    %v1425 = vunpack.c.h.b16 %v309
    %v1426 = vunpack.c.l.b16 %v310
    %v1427 = vunpack.c.h.b16 %v310
    %v1428 = vunpack.c.l.b16 %v311
    %v1429 = vunpack.c.h.b16 %v311
    %v1430 = vunpack.c.l.b16 %v312
    %v1431 = vunpack.c.h.b16 %v312
    %v1432 = vunpack.c.l.b16 %v313
    %v1433 = vunpack.c.h.b16 %v313
    %v1434 = vunpack.c.l.b16 %v314
    %v1435 = vunpack.c.h.b16 %v314
    %v1436 = vunpack.c.l.b16 %v315
    %v1437 = vunpack.c.h.b16 %v315
    %v1438 = vunpack.c.l.b16 %v316
    %v1439 = vunpack.c.h.b16 %v316
    %v1440 = vunpack.c.l.b16 %v317
    %v1441 = vunpack.c.h.b16 %v317
    %v1442 = vunpack.c.l.b16 %v318
    %v1443 = vunpack.c.h.b16 %v318
    %v1444 = vunpack.c.l.b16 %v319
    %v1445 = vunpack.c.h.b16 %v319
    %v1446 = vunpack.c.l.b16 %v320
    %v1447 = vunpack.c.h.b16 %v320
    %v1448 = vunpack.c.l.b16 %v321
    %v1449 = vunpack.c.h.b16 %v321
    %v1450 = vunpack.c.l.b16 %v322
    %v1451 = vunpack.c.h.b16 %v322
    %v1452 = vunpack.c.l.b16 %v323
    %v1453 = vunpack.c.h.b16 %v323
    %v1454 = vunpack.c.l.b16 %v324
    %v1455 = vunpack.c.h.b16 %v324
    %v1456 = vunpack.c.l.b16 %v325
    %v1457 = vunpack.c.h.b16 %v325
    %v1458 = vunpack.c.l.b16 %v326
    %v1459 = vunpack.c.h.b16 %v326
    %v1460 = vunpack.c.l.b16 %v327
    %v1461 = vunpack.c.h.b16 %v327
    %v1462 = vunpack.c.l.b16 %v328
    %v1463 = vunpack.c.h.b16 %v328
    %v1464 = vunpack.c.l.b16 %v329
    %v1465 = vunpack.c.h.b16 %v329
    %v1466 = vunpack.c.l.b16 %v330
    %v1467 = vunpack.c.h.b16 %v330
    %v1468 = vunpack.c.l.b16 %v331
    %v1469 = vunpack.c.h.b16 %v331
    %v1470 = vunpack.c.l.b16 %v332
    %v1471 = vunpack.c.h.b16 %v332
    %v1472 = vunpack.c.l.b16 %v333
    %v1473 = vunpack.c.h.b16 %v333
    %v1474 = vunpack.c.l.b16 %v334
    %v1475 = vunpack.c.h.b16 %v334
    %v1476 = vunpack.c.l.b16 %v335
    %v1477 = vunpack.c.h.b16 %v335
    %v1478 = vunpack.c.l.b16 %v336
    %v1479 = vunpack.c.h.b16 %v336
    %v1480 = vunpack.c.l.b16 %v337
    %v1481 = vunpack.c.h.b16 %v337
    %v1482 = vunpack.c.l.b16 %v338
    %v1483 = vunpack.c.h.b16 %v338
    %v1484 = vunpack.c.l.b16 %v339
    %v1485 = vunpack.c.h.b16 %v339
    %v1486 = vunpack.c.l.b16 %v340
    %v1487 = vunpack.c.h.b16 %v340
    %v1488 = vunpack.c.l.b16 %v341
    %v1489 = vunpack.c.h.b16 %v341
    %v1490 = vunpack.c.l.b16 %v342
    %v1491 = vunpack.c.h.b16 %v342
    %v1492 = vunpack.c.l.b16 %v343
    %v1493 = vunpack.c.h.b16 %v343
    %v1494 = vunpack.c.l.b16 %v344
    %v1495 = vunpack.c.h.b16 %v344
    %v1496 = vunpack.c.l.b16 %v345
    %v1497 = vunpack.c.h.b16 %v345
    %v1498 = vunpack.c.l.b16 %v346
    %v1499 = vunpack.c.h.b16 %v346
    %v1500 = vunpack.c.l.b16 %v347
    %v1501 = vunpack.c.h.b16 %v347
    %v1502 = vunpack.c.l.b16 %v348
    %v1503 = vunpack.c.h.b16 %v348
    %v1504 = vunpack.c.l.b16 %v349
    %v1505 = vunpack.c.h.b16 %v349
    %v1506 = vunpack.c.l.b16 %v350
    %v1507 = vunpack.c.h.b16 %v350
    %v1508 = vunpack.c.l.b16 %v351
    %v1509 = vunpack.c.h.b16 %v351
    %v1510 = vunpack.c.l.b16 %v352
    %v1511 = vunpack.c.h.b16 %v352
    %v1512 = vunpack.c.l.b16 %v353
    %v1513 = vunpack.c.h.b16 %v353
    %v1514 = vunpack.c.l.b16 %v354
    %v1515 = vunpack.c.h.b16 %v354
    %v1516 = vunpack.c.l.b16 %v355
    %v1517 = vunpack.c.h.b16 %v355
    %v1518 = vunpack.c.l.b16 %v356
    %v1519 = vunpack.c.h.b16 %v356
    %v1520 = vunpack.c.l.b16 %v357
    %v1521 = vunpack.c.h.b16 %v357
    %v1522 = vunpack.c.l.b16 %v358
    %v1523 = vunpack.c.h.b16 %v358
    %v1524 = vunpack.c.l.b16 %v359
    %v1525 = vunpack.c.h.b16 %v359
    %v1526 = vunpack.c.l.b16 %v360
    %v1527 = vunpack.c.h.b16 %v360
    %v1528 = vunpack.c.l.b16 %v361
    %v1529 = vunpack.c.h.b16 %v361
    %v1530 = vunpack.c.l.b16 %v362
    %v1531 = vunpack.c.h.b16 %v362
    %v1532 = vunpack.c.l.b16 %v363
    %v1533 = vunpack.c.h.b16 %v363
    %v1534 = vunpack.c.l.b16 %v364
    %v1535 = vunpack.c.h.b16 %v364
    %v1536 = vunpack.c.l.b16 %v365
    %v1537 = vunpack.c.h.b16 %v365
    %v1538 = vunpack.c.l.b16 %v366
    %v1539 = vunpack.c.h.b16 %v366
    %v1540 = vunpack.c.l.b16 %v367
    %v1541 = vunpack.c.h.b16 %v367
    %v1542 = vunpack.c.l.b16 %v368
    %v1543 = vunpack.c.h.b16 %v368
    %v1544 = vunpack.c.l.b16 %v369
    %v1545 = vunpack.c.h.b16 %v369
    %v1546 = vunpack.c.l.b16 %v370
    %v1547 = vunpack.c.h.b16 %v370
    %v1548 = vunpack.c.l.b16 %v371
    %v1549 = vunpack.c.h.b16 %v371
    %v1550 = vunpack.c.l.b16 %v372
    %v1551 = vunpack.c.h.b16 %v372
    %v1552 = vunpack.c.l.b16 %v373
    %v1553 = vunpack.c.h.b16 %v373
    %v1554 = vunpack.c.l.b16 %v374
    %v1555 = vunpack.c.h.b16 %v374
    %v1556 = vunpack.c.l.b16 %v375
    %v1557 = vunpack.c.h.b16 %v375
    %v1558 = vunpack.c.l.b16 %v376
    %v1559 = vunpack.c.h.b16 %v376
    %v1560 = vunpack.c.l.b16 %v377
    %v1561 = vunpack.c.h.b16 %v377
    %v1562 = vunpack.c.l.b16 %v378
    %v1563 = vunpack.c.h.b16 %v378
    %v1564 = vunpack.c.l.b16 %v379
    %v1565 = vunpack.c.h.b16 %v379
    %v1566 = vunpack.c.l.b16 %v380
    %v1567 = vunpack.c.h.b16 %v380
    %v1568 = vunpack.c.l.b16 %v381
    %v1569 = vunpack.c.h.b16 %v381
    %v1570 = vunpack.c.l.b16 %v382
    %v1571 = vunpack.c.h.b16 %v382
    %v1572 = vunpack.c.l.b16 %v383
    %v1573 = vunpack.c.h.b16 %v383
    %v1574 = vunpack.c.l.b16 %v384
    %v1575 = vunpack.c.h.b16 %v384
    %v1576 = vunpack.c.l.b16 %v385
    %v1577 = vunpack.c.h.b16 %v385
    %v1578 = vunpack.c.l.b16 %v386
    %v1579 = vunpack.c.h.b16 %v386
    %v1580 = vunpack.c.l.b16 %v387
    %v1581 = vunpack.c.h.b16 %v387
    %v1582 = vunpack.c.l.b16 %v388
    %v1583 = vunpack.c.h.b16 %v388
    %v1584 = vunpack.c.l.b16 %v389
    %v1585 = vunpack.c.h.b16 %v389
    %v1586 = vunpack.c.l.b16 %v390
    %v1587 = vunpack.c.h.b16 %v390
    %v1588 = vunpack.c.l.b16 %v391
    %v1589 = vunpack.c.h.b16 %v391
    %v1590 = vunpack.c.l.b16 %v392
    %v1591 = vunpack.c.h.b16 %v392
    %v1592 = vunpack.c.l.b16 %v393
    %v1593 = vunpack.c.h.b16 %v393
    %v1594 = vunpack.c.l.b16 %v394
    %v1595 = vunpack.c.h.b16 %v394
    %v1596 = vunpack.c.l.b16 %v395
    %v1597 = vunpack.c.h.b16 %v395
    %v1598 = vunpack.c.l.b16 %v396
    %v1599 = vunpack.c.h.b16 %v396
    %v1600 = vunpack.c.l.b16 %v397
    %v1601 = vunpack.c.h.b16 %v397
    %v1602 = vunpack.c.l.b16 %v398
    %v1603 = vunpack.c.h.b16 %v398
    %v1604 = vunpack.c.l.b16 %v399
    %v1605 = vunpack.c.h.b16 %v399
    %v1606 = vunpack.c.l.b16 %v400
    %v1607 = vunpack.c.h.b16 %v400
    %v1608 = vunpack.c.l.b16 %v401
    %v1609 = vunpack.c.h.b16 %v401
    %v1610 = vunpack.c.l.b16 %v402
    %v1611 = vunpack.c.h.b16 %v402
    %v1612 = vunpack.c.l.b16 %v403
    %v1613 = vunpack.c.h.b16 %v403
    %v1614 = vunpack.c.l.b16 %v404
    %v1615 = vunpack.c.h.b16 %v404
    %v1616 = vunpack.c.l.b16 %v405
    %v1617 = vunpack.c.h.b16 %v405
    %v1618 = vunpack.c.l.b16 %v406
    %v1619 = vunpack.c.h.b16 %v406
    %v1620 = vunpack.c.l.b16 %v407
    %v1621 = vunpack.c.h.b16 %v407
    %v1622 = vunpack.c.l.b16 %v408
    %v1623 = vunpack.c.h.b16 %v408
    %v1624 = vunpack.c.l.b16 %v409
    %v1625 = vunpack.c.h.b16 %v409
    %v1626 = vunpack.c.l.b16 %v410
    %v1627 = vunpack.c.h.b16 %v410
    %v1628 = vunpack.c.l.b16 %v411
    %v1629 = vunpack.c.h.b16 %v411
    %v1630 = vunpack.c.l.b16 %v412
    %v1631 = vunpack.c.h.b16 %v412
    %v1632 = vunpack.c.l.b16 %v413
    %v1633 = vunpack.c.h.b16 %v413
    %v1634 = vunpack.c.l.b16 %v414
    %v1635 = vunpack.c.h.b16 %v414
    %v1636 = vunpack.c.l.b16 %v415
    %v1637 = vunpack.c.h.b16 %v415
    %v1638 = vunpack.c.l.b16 %v416
    %v1639 = vunpack.c.h.b16 %v416
    %v1640 = vunpack.c.l.b16 %v417
    %v1641 = vunpack.c.h.b16 %v417
    %v1642 = vunpack.c.l.b16 %v418
    %v1643 = vunpack.c.h.b16 %v418
    %v1644 = vunpack.c.l.b16 %v419
    %v1645 = vunpack.c.h.b16 %v419
    %v1646 = vunpack.c.l.b16 %v420
    %v1647 = vunpack.c.h.b16 %v420
    %v1648 = vunpack.c.l.b16 %v421
    %v1649 = vunpack.c.h.b16 %v421
    %v1650 = vunpack.c.l.b16 %v422
    %v1651 = vunpack.c.h.b16 %v422
    %v1652 = vunpack.c.l.b16 %v423
    %v1653 = vunpack.c.h.b16 %v423
    %v1654 = vunpack.c.l.b16 %v424
    %v1655 = vunpack.c.h.b16 %v424
    %v1656 = vunpack.c.l.b16 %v425
    %v1657 = vunpack.c.h.b16 %v425
    %v1658 = vunpack.c.l.b16 %v426
    %v1659 = vunpack.c.h.b16 %v426
    %v1660 = vunpack.c.l.b16 %v427
    %v1661 = vunpack.c.h.b16 %v427
    %v1662 = vunpack.c.l.b16 %v428
    %v1663 = vunpack.c.h.b16 %v428
    %v1664 = vunpack.c.l.b16 %v429
    %v1665 = vunpack.c.h.b16 %v429
    %v1666 = vunpack.c.l.b16 %v430
    %v1667 = vunpack.c.h.b16 %v430
    %v1668 = vunpack.c.l.b16 %v431
    %v1669 = vunpack.c.h.b16 %v431
    %v1670 = vunpack.c.l.b16 %v432
    %v1671 = vunpack.c.h.b16 %v432
    %v1672 = vunpack.c.l.b16 %v433
    %v1673 = vunpack.c.h.b16 %v433
    %v1674 = vunpack.c.l.b16 %v434
    %v1675 = vunpack.c.h.b16 %v434
    %v1676 = vunpack.c.l.b16 %v435
    %v1677 = vunpack.c.h.b16 %v435
    %v1678 = vunpack.c.l.b16 %v436
    %v1679 = vunpack.c.h.b16 %v436
    %v1680 = vunpack.c.l.b16 %v437
    %v1681 = vunpack.c.h.b16 %v437
    %v1682 = vunpack.c.l.b16 %v438
    %v1683 = vunpack.c.h.b16 %v438
    %v1684 = vunpack.c.l.b16 %v439
    %v1685 = vunpack.c.h.b16 %v439
    %v1686 = vunpack.c.l.b16 %v440
    %v1687 = vunpack.c.h.b16 %v440
    %v1688 = vunpack.c.l.b16 %v441
    %v1689 = vunpack.c.h.b16 %v441
    %v1690 = vunpack.c.l.b16 %v442
    %v1691 = vunpack.c.h.b16 %v442
    %v1692 = vunpack.c.l.b16 %v443
    %v1693 = vunpack.c.h.b16 %v443
    %v1694 = vunpack.c.l.b16 %v444
    %v1695 = vunpack.c.h.b16 %v444
    %v1696 = vunpack.c.l.b16 %v445
    %v1697 = vunpack.c.h.b16 %v445
    %v1698 = vunpack.c.l.b16 %v446
    %v1699 = vunpack.c.h.b16 %v446
    %v1700 = vunpack.c.l.b16 %v447
    %v1701 = vunpack.c.h.b16 %v447
    %v1702 = vunpack.c.l.b16 %v448
    %v1703 = vunpack.c.h.b16 %v448
    %v1704 = vunpack.c.l.b16 %v449
    %v1705 = vunpack.c.h.b16 %v449
    %v1706 = vunpack.c.l.b16 %v450
    %v1707 = vunpack.c.h.b16 %v450
    %v1708 = vunpack.c.l.b16 %v451
    %v1709 = vunpack.c.h.b16 %v451
    %v1710 = vunpack.c.l.b16 %v452
    %v1711 = vunpack.c.h.b16 %v452
    %v1712 = vunpack.c.l.b16 %v453
    %v1713 = vunpack.c.h.b16 %v453
    %v1714 = vunpack.c.l.b16 %v454
    %v1715 = vunpack.c.h.b16 %v454
    %v1716 = vunpack.c.l.b16 %v455
    %v1717 = vunpack.c.h.b16 %v455
    %v1718 = vunpack.c.l.b16 %v456
    %v1719 = vunpack.c.h.b16 %v456
    %v1720 = vunpack.c.l.b16 %v457
    %v1721 = vunpack.c.h.b16 %v457
    %v1722 = vunpack.c.l.b16 %v458
    %v1723 = vunpack.c.h.b16 %v458
    %v1724 = vunpack.c.l.b16 %v459
    %v1725 = vunpack.c.h.b16 %v459
    %v1726 = vunpack.c.l.b16 %v460
    %v1727 = vunpack.c.h.b16 %v460
    %v1728 = vunpack.c.l.b16 %v461
    %v1729 = vunpack.c.h.b16 %v461
    %v1730 = vunpack.c.l.b16 %v462
    %v1731 = vunpack.c.h.b16 %v462
    %v1732 = vunpack.c.l.b16 %v463
    %v1733 = vunpack.c.h.b16 %v463
    %v1734 = vunpack.c.l.b16 %v464
    %v1735 = vunpack.c.h.b16 %v464
    %v1736 = vunpack.c.l.b16 %v465
    %v1737 = vunpack.c.h.b16 %v465
    %v1738 = vunpack.c.l.b16 %v466
    %v1739 = vunpack.c.h.b16 %v466
    %v1740 = vunpack.c.l.b16 %v467
    %v1741 = vunpack.c.h.b16 %v467
    %v1742 = vunpack.c.l.b16 %v468
    %v1743 = vunpack.c.h.b16 %v468
    %v1744 = vunpack.c.l.b16 %v469
    %v1745 = vunpack.c.h.b16 %v469
    %v1746 = vunpack.c.l.b16 %v470
    %v1747 = vunpack.c.h.b16 %v470
    %v1748 = vunpack.c.l.b16 %v471
    %v1749 = vunpack.c.h.b16 %v471
    %v1750 = vunpack.c.l.b16 %v472
    %v1751 = vunpack.c.h.b16 %v472
    %v1752 = vunpack.c.l.b16 %v473
    %v1753 = vunpack.c.h.b16 %v473
    %v1754 = vunpack.c.l.b16 %v474
    %v1755 = vunpack.c.h.b16 %v474
    %v1756 = vunpack.c.l.b16 %v475
    %v1757 = vunpack.c.h.b16 %v475
    %v1758 = vunpack.c.l.b16 %v476
    %v1759 = vunpack.c.h.b16 %v476
    %v1760 = vunpack.c.l.b16 %v477
    %v1761 = vunpack.c.h.b16 %v477
    %v1762 = vunpack.c.l.b16 %v478
    %v1763 = vunpack.c.h.b16 %v478
    %v1764 = vunpack.c.l.b16 %v479
    %v1765 = vunpack.c.h.b16 %v479
    %v1766 = vunpack.c.l.b16 %v480
    %v1767 = vunpack.c.h.b16 %v480
    %v1768 = vunpack.c.l.b16 %v481
    %v1769 = vunpack.c.h.b16 %v481
    %v1770 = vunpack.c.l.b16 %v482
    %v1771 = vunpack.c.h.b16 %v482
    %v1772 = vunpack.c.l.b16 %v483
    %v1773 = vunpack.c.h.b16 %v483
    %v1774 = vunpack.c.l.b16 %v484
    %v1775 = vunpack.c.h.b16 %v484
    %v1776 = vunpack.c.l.b16 %v485
    %v1777 = vunpack.c.h.b16 %v485
    %v1778 = vunpack.c.l.b16 %v486
    %v1779 = vunpack.c.h.b16 %v486
    %v1780 = vunpack.c.l.b16 %v487
    %v1781 = vunpack.c.h.b16 %v487
    %v1782 = vunpack.c.l.b16 %v488
    %v1783 = vunpack.c.h.b16 %v488
    %v1784 = vunpack.c.l.b16 %v489
    %v1785 = vunpack.c.h.b16 %v489
    %v1786 = vunpack.c.l.b16 %v490
    %v1787 = vunpack.c.h.b16 %v490
    %v1788 = vunpack.c.l.b16 %v491
    %v1789 = vunpack.c.h.b16 %v491
    %v1790 = vunpack.c.l.b16 %v492
    %v1791 = vunpack.c.h.b16 %v492
    %v1792 = vunpack.c.l.b16 %v493
    %v1793 = vunpack.c.h.b16 %v493
    %v1794 = vunpack.c.l.b16 %v494
    %v1795 = vunpack.c.h.b16 %v494
    %v1796 = vunpack.c.l.b16 %v495
    %v1797 = vunpack.c.h.b16 %v495
    %v1798 = vunpack.c.l.b16 %v496
    %v1799 = vunpack.c.h.b16 %v496
    %v1800 = vunpack.c.l.b16 %v497
    %v1801 = vunpack.c.h.b16 %v497
    %v1802 = vunpack.c.l.b16 %v498
    %v1803 = vunpack.c.h.b16 %v498
    %v1804 = vunpack.c.l.b16 %v499
    %v1805 = vunpack.c.h.b16 %v499
    %v1806 = vunpack.c.l.b16 %v500
    %v1807 = vunpack.c.h.b16 %v500
    %v1808 = vunpack.c.l.b16 %v501
    %v1809 = vunpack.c.h.b16 %v501
    %v1810 = vunpack.c.l.b16 %v502
    %v1811 = vunpack.c.h.b16 %v502
    %v1812 = vunpack.c.l.b16 %v503
    %v1813 = vunpack.c.h.b16 %v503
    %v1814 = vunpack.c.l.b16 %v504
    %v1815 = vunpack.c.h.b16 %v504
    %v1816 = vunpack.c.l.b16 %v505
    %v1817 = vunpack.c.h.b16 %v505
    %v1818 = vunpack.c.l.b16 %v506
    %v1819 = vunpack.c.h.b16 %v506
    %v1820 = vunpack.c.l.b16 %v507
    %v1821 = vunpack.c.h.b16 %v507
    %v1822 = vunpack.c.l.b16 %v508
    %v1823 = vunpack.c.h.b16 %v508
    %v1824 = vunpack.c.l.b16 %v509
    %v1825 = vunpack.c.h.b16 %v509
    %v1826 = vunpack.c.l.b16 %v510
    %v1827 = vunpack.c.h.b16 %v510
    %v1828 = vunpack.c.l.b16 %v511
    %v1829 = vunpack.c.h.b16 %v511
    %v1830 = vunpack.c.l.b16 %v512
    %v1831 = vunpack.c.h.b16 %v512
    %v1832 = vunpack.c.l.b16 %v513
    %v1833 = vunpack.c.h.b16 %v513
    %v1834 = vunpack.c.l.b16 %v514
    %v1835 = vunpack.c.h.b16 %v514
    %v1836 = vunpack.c.l.b16 %v515
    %v1837 = vunpack.c.h.b16 %v515
    %v1838 = vunpack.c.l.b16 %v516
    %v1839 = vunpack.c.h.b16 %v516
    %v1840 = vunpack.c.l.b16 %v517
    %v1841 = vunpack.c.h.b16 %v517
    %v1842 = vunpack.c.l.b16 %v518
    %v1843 = vunpack.c.h.b16 %v518
    %v1844 = vunpack.c.l.b16 %v519
    %v1845 = vunpack.c.h.b16 %v519
    %v1846 = vunpack.c.l.b16 %v520
    %v1847 = vunpack.c.h.b16 %v520
    %v1848 = vunpack.c.l.b16 %v521
    %v1849 = vunpack.c.h.b16 %v521
    %v1850 = vunpack.c.l.b16 %v522
    %v1851 = vunpack.c.h.b16 %v522
    %v1852 = vunpack.c.l.b16 %v523
    %v1853 = vunpack.c.h.b16 %v523
    %v1854 = vunpack.c.l.b16 %v524
    %v1855 = vunpack.c.h.b16 %v524
    %v1856 = vunpack.c.l.b16 %v525
    %v1857 = vunpack.c.h.b16 %v525
    %v1858 = vunpack.c.l.b16 %v526
    %v1859 = vunpack.c.h.b16 %v526
    %v1860 = vunpack.c.l.b16 %v527
    %v1861 = vunpack.c.h.b16 %v527
    %v1862 = vunpack.c.l.b16 %v528
    %v1863 = vunpack.c.h.b16 %v528
    %v1864 = vunpack.c.l.b16 %v529
    %v1865 = vunpack.c.h.b16 %v529
    %v1866 = vunpack.c.l.b16 %v530
    %v1867 = vunpack.c.h.b16 %v530
    %v1868 = vunpack.c.l.b16 %v531
    %v1869 = vunpack.c.h.b16 %v531
    %v1870 = vunpack.c.l.b16 %v532
    %v1871 = vunpack.c.h.b16 %v532
    %v1872 = vunpack.c.l.b16 %v533
    %v1873 = vunpack.c.h.b16 %v533
    %v1874 = vunpack.c.l.b16 %v534
    %v1875 = vunpack.c.h.b16 %v534
    %v1876 = vunpack.c.l.b16 %v535
    %v1877 = vunpack.c.h.b16 %v535
    %v1878 = vunpack.c.l.b16 %v536
    %v1879 = vunpack.c.h.b16 %v536
    %v1880 = vunpack.c.l.b16 %v537
    %v1881 = vunpack.c.h.b16 %v537
    %v1882 = vunpack.c.l.b16 %v538
    %v1883 = vunpack.c.h.b16 %v538
    %v1884 = vunpack.c.l.b16 %v539
    %v1885 = vunpack.c.h.b16 %v539
    %v1886 = vunpack.c.l.b16 %v540
    %v1887 = vunpack.c.h.b16 %v540
    %v1888 = vunpack.c.l.b16 %v541
    %v1889 = vunpack.c.h.b16 %v541
    %v1890 = vunpack.c.l.b16 %v542
    %v1891 = vunpack.c.h.b16 %v542
    %v1892 = vunpack.c.l.b16 %v543
    %v1893 = vunpack.c.h.b16 %v543
    %v1894 = vunpack.c.l.b16 %v544
    %v1895 = vunpack.c.h.b16 %v544
    %v1896 = vunpack.c.l.b16 %v545
    %v1897 = vunpack.c.h.b16 %v545
    %v1898 = vunpack.c.l.b16 %v546
    %v1899 = vunpack.c.h.b16 %v546
    %v1900 = vunpack.c.l.b16 %v547
    %v1901 = vunpack.c.h.b16 %v547
    %v1902 = vunpack.c.l.b16 %v548
    %v1903 = vunpack.c.h.b16 %v548
    %v1904 = vunpack.c.l.b16 %v549
    %v1905 = vunpack.c.h.b16 %v549
    %v1906 = vunpack.c.l.b16 %v550
    %v1907 = vunpack.c.h.b16 %v550
    %v1908 = vunpack.c.l.b16 %v551
    %v1909 = vunpack.c.h.b16 %v551
    %v1910 = vunpack.c.l.b16 %v552
    %v1911 = vunpack.c.h.b16 %v552
    %v1912 = vunpack.c.l.b16 %v553
    %v1913 = vunpack.c.h.b16 %v553
    %v1914 = vunpack.c.l.b16 %v554
    %v1915 = vunpack.c.h.b16 %v554
    %v1916 = vunpack.c.l.b16 %v555
    %v1917 = vunpack.c.h.b16 %v555
    %v1918 = vunpack.c.l.b16 %v556
    %v1919 = vunpack.c.h.b16 %v556
    %v1920 = vunpack.c.l.b16 %v557
    %v1921 = vunpack.c.h.b16 %v557
    %v1922 = vunpack.c.l.b16 %v558
    %v1923 = vunpack.c.h.b16 %v558
    %v1924 = vunpack.c.l.b16 %v559
    %v1925 = vunpack.c.h.b16 %v559
    %v1926 = vunpack.c.l.b16 %v560
    %v1927 = vunpack.c.h.b16 %v560
    %v1928 = vunpack.c.l.b16 %v561
    %v1929 = vunpack.c.h.b16 %v561
    %v1930 = vunpack.c.l.b16 %v562
    %v1931 = vunpack.c.h.b16 %v562
    %v1932 = vunpack.c.l.b16 %v563
    %v1933 = vunpack.c.h.b16 %v563
    %v1934 = vunpack.c.l.b16 %v564
    %v1935 = vunpack.c.h.b16 %v564
    %v1936 = vunpack.c.l.b16 %v565
    %v1937 = vunpack.c.h.b16 %v565
    %v1938 = vunpack.c.l.b16 %v566
    %v1939 = vunpack.c.h.b16 %v566
    %v1940 = vunpack.c.l.b16 %v567
    %v1941 = vunpack.c.h.b16 %v567
    %v1942 = vunpack.c.l.b16 %v568
    %v1943 = vunpack.c.h.b16 %v568
    %v1944 = vunpack.c.l.b16 %v569
    %v1945 = vunpack.c.h.b16 %v569
    %v1946 = vunpack.c.l.b16 %v570
    %v1947 = vunpack.c.h.b16 %v570
    %v1948 = vunpack.c.l.b16 %v571
    %v1949 = vunpack.c.h.b16 %v571
    %v1950 = vunpack.c.l.b16 %v572
    %v1951 = vunpack.c.h.b16 %v572
    %v1952 = vunpack.c.l.b16 %v573
    %v1953 = vunpack.c.h.b16 %v573
    %v1954 = vunpack.c.l.b16 %v574
    %v1955 = vunpack.c.h.b16 %v574
    %v1956 = vunpack.c.l.b16 %v575
    %v1957 = vunpack.c.h.b16 %v575
    %v1958 = vunpack.c.l.b16 %v576
    %v1959 = vunpack.c.h.b16 %v576
    %v1960 = vunpack.c.l.b16 %v577
    %v1961 = vunpack.c.h.b16 %v577
    %v1962 = vunpack.c.l.b16 %v578
    %v1963 = vunpack.c.h.b16 %v578
    %v1964 = vunpack.c.l.b16 %v579
    %v1965 = vunpack.c.h.b16 %v579
    %v1966 = vpack.c.b16 %v1078, %v1070
    %v1967 = vpack.c.b16 %v1079, %v1071
    %v1968 = vpack.c.b16 %v1080, %v1072
    %v1969 = vpack.c.b16 %v1081, %v1073
    %v1970 = vpack.c.b16 %v1082, %v1074
    %v1971 = vpack.c.b16 %v1083, %v1075
    %v1972 = vpack.c.b16 %v1084, %v1076
    %v1973 = vpack.c.b16 %v1085, %v1077
    %v1974 = vpack.c.b16 %v1094, %v1086
    %v1975 = vpack.c.b16 %v1095, %v1087
    %v1976 = vpack.c.b16 %v1096, %v1088
    %v1977 = vpack.c.b16 %v1097, %v1089
    %v1978 = vpack.c.b16 %v1098, %v1090
    %v1979 = vpack.c.b16 %v1099, %v1091
    %v1980 = vpack.c.b16 %v1100, %v1092
    %v1981 = vpack.c.b16 %v1101, %v1093
    %v1982 = vpack.c.b16 %v1110, %v1102
    %v1983 = vpack.c.b16 %v1111, %v1103
    %v1984 = vpack.c.b16 %v1112, %v1104
    %v1985 = vpack.c.b16 %v1113, %v1105
    %v1986 = vpack.c.b16 %v1114, %v1106
    %v1987 = vpack.c.b16 %v1115, %v1107
    %v1988 = vpack.c.b16 %v1116, %v1108
    %v1989 = vpack.c.b16 %v1117, %v1109
    %v1990 = vpack.c.b16 %v1126, %v1118
    %v1991 = vpack.c.b16 %v1127, %v1119
    %v1992 = vpack.c.b16 %v1128, %v1120
    %v1993 = vpack.c.b16 %v1129, %v1121
    %v1994 = vpack.c.b16 %v1130, %v1122
    %v1995 = vpack.c.b16 %v1131, %v1123
    %v1996 = vpack.c.b16 %v1132, %v1124
    %v1997 = vpack.c.b16 %v1133, %v1125
    %v1998 = vpack.c.b16 %v1142, %v1134
    %v1999 = vpack.c.b16 %v1143, %v1135
    %v2000 = vpack.c.b16 %v1144, %v1136
    %v2001 = vpack.c.b16 %v1145, %v1137
    %v2002 = vpack.c.b16 %v1146, %v1138
    %v2003 = vpack.c.b16 %v1147, %v1139
    %v2004 = vpack.c.b16 %v1148, %v1140
    %v2005 = vpack.c.b16 %v1149, %v1141
    %v2006 = vpack.c.b16 %v1158, %v1150
    %v2007 = vpack.c.b16 %v1159, %v1151
    %v2008 = vpack.c.b16 %v1160, %v1152
    %v2009 = vpack.c.b16 %v1161, %v1153
    %v2010 = vpack.c.b16 %v1162, %v1154
    %v2011 = vpack.c.b16 %v1163, %v1155
    %v2012 = vpack.c.b16 %v1164, %v1156
    %v2013 = vpack.c.b16 %v1165, %v1157
    %v2014 = vpack.c.b16 %v1174, %v1166
    %v2015 = vpack.c.b16 %v1175, %v1167
    %v2016 = vpack.c.b16 %v1176, %v1168
    %v2017 = vpack.c.b16 %v1177, %v1169
    %v2018 = vpack.c.b16 %v1178, %v1170
    %v2019 = vpack.c.b16 %v1179, %v1171
    %v2020 = vpack.c.b16 %v1180, %v1172
    %v2021 = vpack.c.b16 %v1181, %v1173
    %v2022 = vpack.c.b16 %v1190, %v1182
    %v2023 = vpack.c.b16 %v1191, %v1183
    %v2024 = vpack.c.b16 %v1192, %v1184
    %v2025 = vpack.c.b16 %v1193, %v1185
    %v2026 = vpack.c.b16 %v1194, %v1186
    %v2027 = vpack.c.b16 %v1195, %v1187
    %v2028 = vpack.c.b16 %v1196, %v1188
    %v2029 = vpack.c.b16 %v1197, %v1189
    %v2030 = vpack.c.b16 %v1206, %v1198
    %v2031 = vpack.c.b16 %v1207, %v1199
    %v2032 = vpack.c.b16 %v1208, %v1200
    %v2033 = vpack.c.b16 %v1209, %v1201
    %v2034 = vpack.c.b16 %v1210, %v1202
    %v2035 = vpack.c.b16 %v1211, %v1203
    %v2036 = vpack.c.b16 %v1212, %v1204
    %v2037 = vpack.c.b16 %v1213, %v1205
    %v2038 = vpack.c.b16 %v1222, %v1214
    %v2039 = vpack.c.b16 %v1223, %v1215
    %v2040 = vpack.c.b16 %v1224, %v1216
    %v2041 = vpack.c.b16 %v1225, %v1217
    %v2042 = vpack.c.b16 %v1226, %v1218
    %v2043 = vpack.c.b16 %v1227, %v1219
    %v2044 = vpack.c.b16 %v1228, %v1220
    %v2045 = vpack.c.b16 %v1229, %v1221
    %v2046 = vpack.c.b16 %v1238, %v1230
    %v2047 = vpack.c.b16 %v1239, %v1231
    %v2048 = vpack.c.b16 %v1240, %v1232
    %v2049 = vpack.c.b16 %v1241, %v1233
    %v2050 = vpack.c.b16 %v1242, %v1234
    %v2051 = vpack.c.b16 %v1243, %v1235
    %v2052 = vpack.c.b16 %v1244, %v1236
    %v2053 = vpack.c.b16 %v1245, %v1237
    %v2054 = vpack.c.b16 %v1254, %v1246
    %v2055 = vpack.c.b16 %v1255, %v1247
    %v2056 = vpack.c.b16 %v1256, %v1248
    %v2057 = vpack.c.b16 %v1257, %v1249
    %v2058 = vpack.c.b16 %v1258, %v1250
    %v2059 = vpack.c.b16 %v1259, %v1251
    %v2060 = vpack.c.b16 %v1260, %v1252
    %v2061 = vpack.c.b16 %v1261, %v1253
    %v2062 = vpack.c.b16 %v1270, %v1262
    %v2063 = vpack.c.b16 %v1271, %v1263
    %v2064 = vpack.c.b16 %v1272, %v1264
    %v2065 = vpack.c.b16 %v1273, %v1265
    %v2066 = vpack.c.b16 %v1274, %v1266
    %v2067 = vpack.c.b16 %v1275, %v1267
    %v2068 = vpack.c.b16 %v1276, %v1268
    %v2069 = vpack.c.b16 %v1277, %v1269
    %v2070 = vpack.c.b16 %v1286, %v1278
    %v2071 = vpack.c.b16 %v1287, %v1279
    %v2072 = vpack.c.b16 %v1288, %v1280
    %v2073 = vpack.c.b16 %v1289, %v1281
    %v2074 = vpack.c.b16 %v1290, %v1282
    %v2075 = vpack.c.b16 %v1291, %v1283
    %v2076 = vpack.c.b16 %v1292, %v1284
    %v2077 = vpack.c.b16 %v1293, %v1285
    %v2078 = vpack.c.b16 %v1302, %v1294
    %v2079 = vpack.c.b16 %v1303, %v1295
    %v2080 = vpack.c.b16 %v1304, %v1296
    %v2081 = vpack.c.b16 %v1305, %v1297
    %v2082 = vpack.c.b16 %v1306, %v1298
    %v2083 = vpack.c.b16 %v1307, %v1299
    %v2084 = vpack.c.b16 %v1308, %v1300
    %v2085 = vpack.c.b16 %v1309, %v1301
    %v2086 = vpack.c.b16 %v1318, %v1310
    %v2087 = vpack.c.b16 %v1319, %v1311
    %v2088 = vpack.c.b16 %v1320, %v1312
    %v2089 = vpack.c.b16 %v1321, %v1313
    %v2090 = vpack.c.b16 %v1322, %v1314
    %v2091 = vpack.c.b16 %v1323, %v1315
    %v2092 = vpack.c.b16 %v1324, %v1316
    %v2093 = vpack.c.b16 %v1325, %v1317
    %v2094 = vpack.c.b16 %v1334, %v1326
    %v2095 = vpack.c.b16 %v1335, %v1327
    %v2096 = vpack.c.b16 %v1336, %v1328
    %v2097 = vpack.c.b16 %v1337, %v1329
    %v2098 = vpack.c.b16 %v1338, %v1330
    %v2099 = vpack.c.b16 %v1339, %v1331
    %v2100 = vpack.c.b16 %v1340, %v1332
    %v2101 = vpack.c.b16 %v1341, %v1333
    %v2102 = vpack.c.b16 %v1350, %v1342
    %v2103 = vpack.c.b16 %v1351, %v1343
    %v2104 = vpack.c.b16 %v1352, %v1344
    %v2105 = vpack.c.b16 %v1353, %v1345
    %v2106 = vpack.c.b16 %v1354, %v1346
    %v2107 = vpack.c.b16 %v1355, %v1347
    %v2108 = vpack.c.b16 %v1356, %v1348
    %v2109 = vpack.c.b16 %v1357, %v1349
    %v2110 = vpack.c.b16 %v1366, %v1358
    %v2111 = vpack.c.b16 %v1367, %v1359
    %v2112 = vpack.c.b16 %v1368, %v1360
    %v2113 = vpack.c.b16 %v1369, %v1361
    %v2114 = vpack.c.b16 %v1370, %v1362
    %v2115 = vpack.c.b16 %v1371, %v1363
    %v2116 = vpack.c.b16 %v1372, %v1364
    %v2117 = vpack.c.b16 %v1373, %v1365
    %v2118 = vpack.c.b16 %v1382, %v1374
    %v2119 = vpack.c.b16 %v1383, %v1375
    %v2120 = vpack.c.b16 %v1384, %v1376
    %v2121 = vpack.c.b16 %v1385, %v1377
    %v2122 = vpack.c.b16 %v1386, %v1378
    %v2123 = vpack.c.b16 %v1387, %v1379
    %v2124 = vpack.c.b16 %v1388, %v1380
    %v2125 = vpack.c.b16 %v1389, %v1381
    %v2126 = vpack.c.b16 %v1398, %v1390
    %v2127 = vpack.c.b16 %v1399, %v1391
    %v2128 = vpack.c.b16 %v1400, %v1392
    %v2129 = vpack.c.b16 %v1401, %v1393
    %v2130 = vpack.c.b16 %v1402, %v1394
    %v2131 = vpack.c.b16 %v1403, %v1395
    %v2132 = vpack.c.b16 %v1404, %v1396
    %v2133 = vpack.c.b16 %v1405, %v1397
    %v2134 = vpack.c.b16 %v1414, %v1406
    %v2135 = vpack.c.b16 %v1415, %v1407
    %v2136 = vpack.c.b16 %v1416, %v1408
    %v2137 = vpack.c.b16 %v1417, %v1409
    %v2138 = vpack.c.b16 %v1418, %v1410
    %v2139 = vpack.c.b16 %v1419, %v1411
    %v2140 = vpack.c.b16 %v1420, %v1412
    %v2141 = vpack.c.b16 %v1421, %v1413
    %v2142 = vpack.c.b16 %v1430, %v1422
    %v2143 = vpack.c.b16 %v1431, %v1423
    %v2144 = vpack.c.b16 %v1432, %v1424
    %v2145 = vpack.c.b16 %v1433, %v1425
    %v2146 = vpack.c.b16 %v1434, %v1426
    %v2147 = vpack.c.b16 %v1435, %v1427
    %v2148 = vpack.c.b16 %v1436, %v1428
    %v2149 = vpack.c.b16 %v1437, %v1429
    %v2150 = vpack.c.b16 %v1446, %v1438
    %v2151 = vpack.c.b16 %v1447, %v1439
    %v2152 = vpack.c.b16 %v1448, %v1440
    %v2153 = vpack.c.b16 %v1449, %v1441
    %v2154 = vpack.c.b16 %v1450, %v1442
    %v2155 = vpack.c.b16 %v1451, %v1443
    %v2156 = vpack.c.b16 %v1452, %v1444
    %v2157 = vpack.c.b16 %v1453, %v1445
    %v2158 = vpack.c.b16 %v1462, %v1454
    %v2159 = vpack.c.b16 %v1463, %v1455
    %v2160 = vpack.c.b16 %v1464, %v1456
    %v2161 = vpack.c.b16 %v1465, %v1457
    %v2162 = vpack.c.b16 %v1466, %v1458
    %v2163 = vpack.c.b16 %v1467, %v1459
    %v2164 = vpack.c.b16 %v1468, %v1460
    %v2165 = vpack.c.b16 %v1469, %v1461
    %v2166 = vpack.c.b16 %v1478, %v1470
    %v2167 = vpack.c.b16 %v1479, %v1471
    %v2168 = vpack.c.b16 %v1480, %v1472
    %v2169 = vpack.c.b16 %v1481, %v1473
    %v2170 = vpack.c.b16 %v1482, %v1474
    %v2171 = vpack.c.b16 %v1483, %v1475
    %v2172 = vpack.c.b16 %v1484, %v1476
    %v2173 = vpack.c.b16 %v1485, %v1477
    %v2174 = vpack.c.b16 %v1494, %v1486
    %v2175 = vpack.c.b16 %v1495, %v1487
    %v2176 = vpack.c.b16 %v1496, %v1488
    %v2177 = vpack.c.b16 %v1497, %v1489
    %v2178 = vpack.c.b16 %v1498, %v1490
    %v2179 = vpack.c.b16 %v1499, %v1491
    %v2180 = vpack.c.b16 %v1500, %v1492
    %v2181 = vpack.c.b16 %v1501, %v1493
    %v2182 = vpack.c.b16 %v1510, %v1502
    %v2183 = vpack.c.b16 %v1511, %v1503
    %v2184 = vpack.c.b16 %v1512, %v1504
    %v2185 = vpack.c.b16 %v1513, %v1505
    %v2186 = vpack.c.b16 %v1514, %v1506
    %v2187 = vpack.c.b16 %v1515, %v1507
    %v2188 = vpack.c.b16 %v1516, %v1508
    %v2189 = vpack.c.b16 %v1517, %v1509
    %v2190 = vpack.c.b16 %v1526, %v1518
    %v2191 = vpack.c.b16 %v1527, %v1519
    %v2192 = vpack.c.b16 %v1528, %v1520
    %v2193 = vpack.c.b16 %v1529, %v1521
    %v2194 = vpack.c.b16 %v1530, %v1522
    %v2195 = vpack.c.b16 %v1531, %v1523
    %v2196 = vpack.c.b16 %v1532, %v1524
    %v2197 = vpack.c.b16 %v1533, %v1525
    %v2198 = vpack.c.b16 %v1542, %v1534
    %v2199 = vpack.c.b16 %v1543, %v1535
    %v2200 = vpack.c.b16 %v1544, %v1536
    %v2201 = vpack.c.b16 %v1545, %v1537
    %v2202 = vpack.c.b16 %v1546, %v1538
    %v2203 = vpack.c.b16 %v1547, %v1539
    %v2204 = vpack.c.b16 %v1548, %v1540
    %v2205 = vpack.c.b16 %v1549, %v1541
    %v2206 = vpack.c.b16 %v1558, %v1550
    %v2207 = vpack.c.b16 %v1559, %v1551
    %v2208 = vpack.c.b16 %v1560, %v1552
    %v2209 = vpack.c.b16 %v1561, %v1553
    %v2210 = vpack.c.b16 %v1562, %v1554
    %v2211 = vpack.c.b16 %v1563, %v1555
    %v2212 = vpack.c.b16 %v1564, %v1556
    %v2213 = vpack.c.b16 %v1565, %v1557
    %v2214 = vpack.c.b16 %v1574, %v1566
    %v2215 = vpack.c.b16 %v1575, %v1567
    %v2216 = vpack.c.b16 %v1576, %v1568
    %v2217 = vpack.c.b16 %v1577, %v1569
    %v2218 = vpack.c.b16 %v1578, %v1570
    %v2219 = vpack.c.b16 %v1579, %v1571
    %v2220 = vpack.c.b16 %v1580, %v1572
    %v2221 = vpack.c.b16 %v1581, %v1573
    %v2222 = vpack.c.b16 %v1590, %v1582
    %v2223 = vpack.c.b16 %v1591, %v1583
    %v2224 = vpack.c.b16 %v1592, %v1584
    %v2225 = vpack.c.b16 %v1593, %v1585
    %v2226 = vpack.c.b16 %v1594, %v1586
    %v2227 = vpack.c.b16 %v1595, %v1587
    %v2228 = vpack.c.b16 %v1596, %v1588
    %v2229 = vpack.c.b16 %v1597, %v1589
    %v2230 = vpack.c.b16 %v1606, %v1598
    %v2231 = vpack.c.b16 %v1607, %v1599
    %v2232 = vpack.c.b16 %v1608, %v1600
    %v2233 = vpack.c.b16 %v1609, %v1601
    %v2234 = vpack.c.b16 %v1610, %v1602
    %v2235 = vpack.c.b16 %v1611, %v1603
    %v2236 = vpack.c.b16 %v1612, %v1604
    %v2237 = vpack.c.b16 %v1613, %v1605
    %v2238 = vpack.c.b16 %v1622, %v1614
    %v2239 = vpack.c.b16 %v1623, %v1615
    %v2240 = vpack.c.b16 %v1624, %v1616
    %v2241 = vpack.c.b16 %v1625, %v1617
    %v2242 = vpack.c.b16 %v1626, %v1618
    %v2243 = vpack.c.b16 %v1627, %v1619
    %v2244 = vpack.c.b16 %v1628, %v1620
    %v2245 = vpack.c.b16 %v1629, %v1621
    %v2246 = vpack.c.b16 %v1638, %v1630
    %v2247 = vpack.c.b16 %v1639, %v1631
    %v2248 = vpack.c.b16 %v1640, %v1632
    %v2249 = vpack.c.b16 %v1641, %v1633
    %v2250 = vpack.c.b16 %v1642, %v1634
    %v2251 = vpack.c.b16 %v1643, %v1635
    %v2252 = vpack.c.b16 %v1644, %v1636
    %v2253 = vpack.c.b16 %v1645, %v1637
    %v2254 = vpack.c.b16 %v1654, %v1646
    %v2255 = vpack.c.b16 %v1655, %v1647
    %v2256 = vpack.c.b16 %v1656, %v1648
    %v2257 = vpack.c.b16 %v1657, %v1649
    %v2258 = vpack.c.b16 %v1658, %v1650
    %v2259 = vpack.c.b16 %v1659, %v1651
    %v2260 = vpack.c.b16 %v1660, %v1652
    %v2261 = vpack.c.b16 %v1661, %v1653
    %v2262 = vpack.c.b16 %v1670, %v1662
    %v2263 = vpack.c.b16 %v1671, %v1663
    %v2264 = vpack.c.b16 %v1672, %v1664
    %v2265 = vpack.c.b16 %v1673, %v1665
    %v2266 = vpack.c.b16 %v1674, %v1666
    %v2267 = vpack.c.b16 %v1675, %v1667
    %v2268 = vpack.c.b16 %v1676, %v1668
    %v2269 = vpack.c.b16 %v1677, %v1669
    %v2270 = vpack.c.b16 %v1686, %v1678
    %v2271 = vpack.c.b16 %v1687, %v1679
    %v2272 = vpack.c.b16 %v1688, %v1680
    %v2273 = vpack.c.b16 %v1689, %v1681
    %v2274 = vpack.c.b16 %v1690, %v1682
    %v2275 = vpack.c.b16 %v1691, %v1683
    %v2276 = vpack.c.b16 %v1692, %v1684
    %v2277 = vpack.c.b16 %v1693, %v1685
    %v2278 = vpack.c.b16 %v1702, %v1694
    %v2279 = vpack.c.b16 %v1703, %v1695
    %v2280 = vpack.c.b16 %v1704, %v1696
    %v2281 = vpack.c.b16 %v1705, %v1697
    %v2282 = vpack.c.b16 %v1706, %v1698
    %v2283 = vpack.c.b16 %v1707, %v1699
    %v2284 = vpack.c.b16 %v1708, %v1700
    %v2285 = vpack.c.b16 %v1709, %v1701
    %v2286 = vpack.c.b16 %v1718, %v1710
    %v2287 = vpack.c.b16 %v1719, %v1711
    %v2288 = vpack.c.b16 %v1720, %v1712
    %v2289 = vpack.c.b16 %v1721, %v1713
    %v2290 = vpack.c.b16 %v1722, %v1714
    %v2291 = vpack.c.b16 %v1723, %v1715
    %v2292 = vpack.c.b16 %v1724, %v1716
    %v2293 = vpack.c.b16 %v1725, %v1717
    %v2294 = vpack.c.b16 %v1734, %v1726
    %v2295 = vpack.c.b16 %v1735, %v1727
    %v2296 = vpack.c.b16 %v1736, %v1728
    %v2297 = vpack.c.b16 %v1737, %v1729
    %v2298 = vpack.c.b16 %v1738, %v1730
    %v2299 = vpack.c.b16 %v1739, %v1731
    %v2300 = vpack.c.b16 %v1740, %v1732
    %v2301 = vpack.c.b16 %v1741, %v1733
    %v2302 = vpack.c.b16 %v1750, %v1742
    %v2303 = vpack.c.b16 %v1751, %v1743
    %v2304 = vpack.c.b16 %v1752, %v1744
    %v2305 = vpack.c.b16 %v1753, %v1745
    %v2306 = vpack.c.b16 %v1754, %v1746
    %v2307 = vpack.c.b16 %v1755, %v1747
    %v2308 = vpack.c.b16 %v1756, %v1748
    %v2309 = vpack.c.b16 %v1757, %v1749
    %v2310 = vpack.c.b16 %v1766, %v1758
    %v2311 = vpack.c.b16 %v1767, %v1759
    %v2312 = vpack.c.b16 %v1768, %v1760
    %v2313 = vpack.c.b16 %v1769, %v1761
    %v2314 = vpack.c.b16 %v1770, %v1762
    %v2315 = vpack.c.b16 %v1771, %v1763
    %v2316 = vpack.c.b16 %v1772, %v1764
    %v2317 = vpack.c.b16 %v1773, %v1765
    %v2318 = vpack.c.b16 %v1782, %v1774
    %v2319 = vpack.c.b16 %v1783, %v1775
    %v2320 = vpack.c.b16 %v1784, %v1776
    %v2321 = vpack.c.b16 %v1785, %v1777
    %v2322 = vpack.c.b16 %v1786, %v1778
    %v2323 = vpack.c.b16 %v1787, %v1779
    %v2324 = vpack.c.b16 %v1788, %v1780
    %v2325 = vpack.c.b16 %v1789, %v1781
    %v2326 = vpack.c.b16 %v1798, %v1790
    %v2327 = vpack.c.b16 %v1799, %v1791
    %v2328 = vpack.c.b16 %v1800, %v1792
    %v2329 = vpack.c.b16 %v1801, %v1793
    %v2330 = vpack.c.b16 %v1802, %v1794
    %v2331 = vpack.c.b16 %v1803, %v1795
    %v2332 = vpack.c.b16 %v1804, %v1796
    %v2333 = vpack.c.b16 %v1805, %v1797
    %v2334 = vpack.c.b16 %v1814, %v1806
    %v2335 = vpack.c.b16 %v1815, %v1807
    %v2336 = vpack.c.b16 %v1816, %v1808
    %v2337 = vpack.c.b16 %v1817, %v1809
    %v2338 = vpack.c.b16 %v1818, %v1810
    %v2339 = vpack.c.b16 %v1819, %v1811
    %v2340 = vpack.c.b16 %v1820, %v1812
    %v2341 = vpack.c.b16 %v1821, %v1813
    %v2342 = vpack.c.b16 %v1830, %v1822
    %v2343 = vpack.c.b16 %v1831, %v1823
    %v2344 = vpack.c.b16 %v1832, %v1824
    %v2345 = vpack.c.b16 %v1833, %v1825
    %v2346 = vpack.c.b16 %v1834, %v1826
    %v2347 = vpack.c.b16 %v1835, %v1827
    %v2348 = vpack.c.b16 %v1836, %v1828
    %v2349 = vpack.c.b16 %v1837, %v1829
    %v2350 = vpack.c.b16 %v1846, %v1838
    %v2351 = vpack.c.b16 %v1847, %v1839
    %v2352 = vpack.c.b16 %v1848, %v1840
    %v2353 = vpack.c.b16 %v1849, %v1841
    %v2354 = vpack.c.b16 %v1850, %v1842
    %v2355 = vpack.c.b16 %v1851, %v1843
    %v2356 = vpack.c.b16 %v1852, %v1844
    %v2357 = vpack.c.b16 %v1853, %v1845
    %v2358 = vpack.c.b16 %v1862, %v1854
    %v2359 = vpack.c.b16 %v1863, %v1855
    %v2360 = vpack.c.b16 %v1864, %v1856
    %v2361 = vpack.c.b16 %v1865, %v1857
    %v2362 = vpack.c.b16 %v1866, %v1858
    %v2363 = vpack.c.b16 %v1867, %v1859
    %v2364 = vpack.c.b16 %v1868, %v1860
    %v2365 = vpack.c.b16 %v1869, %v1861
    %v2366 = vpack.c.b16 %v1878, %v1870
    %v2367 = vpack.c.b16 %v1879, %v1871
    %v2368 = vpack.c.b16 %v1880, %v1872
    %v2369 = vpack.c.b16 %v1881, %v1873
    %v2370 = vpack.c.b16 %v1882, %v1874
    %v2371 = vpack.c.b16 %v1883, %v1875
    %v2372 = vpack.c.b16 %v1884, %v1876
    %v2373 = vpack.c.b16 %v1885, %v1877
    %v2374 = vpack.c.b16 %v1894, %v1886
    %v2375 = vpack.c.b16 %v1895, %v1887
    %v2376 = vpack.c.b16 %v1896, %v1888
    %v2377 = vpack.c.b16 %v1897, %v1889
    %v2378 = vpack.c.b16 %v1898, %v1890
    %v2379 = vpack.c.b16 %v1899, %v1891
    %v2380 = vpack.c.b16 %v1900, %v1892
    %v2381 = vpack.c.b16 %v1901, %v1893
    %v2382 = vpack.c.b16 %v1910, %v1902
    %v2383 = vpack.c.b16 %v1911, %v1903
    %v2384 = vpack.c.b16 %v1912, %v1904
    %v2385 = vpack.c.b16 %v1913, %v1905
    %v2386 = vpack.c.b16 %v1914, %v1906
    %v2387 = vpack.c.b16 %v1915, %v1907
    %v2388 = vpack.c.b16 %v1916, %v1908
    %v2389 = vpack.c.b16 %v1917, %v1909
    %v2390 = vpack.c.b16 %v1926, %v1918
    %v2391 = vpack.c.b16 %v1927, %v1919
    %v2392 = vpack.c.b16 %v1928, %v1920
    %v2393 = vpack.c.b16 %v1929, %v1921
    %v2394 = vpack.c.b16 %v1930, %v1922
    %v2395 = vpack.c.b16 %v1931, %v1923
    %v2396 = vpack.c.b16 %v1932, %v1924
    %v2397 = vpack.c.b16 %v1933, %v1925
    %v2398 = vpack.c.b16 %v1942, %v1934
    %v2399 = vpack.c.b16 %v1943, %v1935
    %v2400 = vpack.c.b16 %v1944, %v1936
    %v2401 = vpack.c.b16 %v1945, %v1937
    %v2402 = vpack.c.b16 %v1946, %v1938
    %v2403 = vpack.c.b16 %v1947, %v1939
    %v2404 = vpack.c.b16 %v1948, %v1940
    %v2405 = vpack.c.b16 %v1949, %v1941
    %v2406 = vpack.c.b16 %v1958, %v1950
    %v2407 = vpack.c.b16 %v1959, %v1951
    %v2408 = vpack.c.b16 %v1960, %v1952
    %v2409 = vpack.c.b16 %v1961, %v1953
    %v2410 = vpack.c.b16 %v1962, %v1954
    %v2411 = vpack.c.b16 %v1963, %v1955
    %v2412 = vpack.c.b16 %v1964, %v1956
    %v2413 = vpack.c.b16 %v1965, %v1957
    %2862 = vmatprep.subr.bf16.mxu0 %v1967
    %2863 = vmatpush1.bf16.msra.mxu0 %v1966
    %2864 = vmatprep.subr.bf16.mxu0 %v1975
    %2865 = vmatpush1.bf16.msra.mxu0 %v1974
    %2866 = vmatprep.subr.bf16.mxu0 %v1983
    %2867 = vmatpush1.bf16.msra.mxu0 %v1982
    %2868 = vmatprep.subr.bf16.mxu0 %v1991
    %2869 = vmatpush1.bf16.msra.mxu0 %v1990
    %2870 = vmatprep.subr.bf16.mxu0 %v1999
    %2871 = vmatpush1.bf16.msra.mxu0 %v1998
    %2872 = vmatprep.subr.bf16.mxu0 %v2007
    %2873 = vmatpush1.bf16.msra.mxu0 %v2006
    %2874 = vmatprep.subr.bf16.mxu0 %v2015
    %2875 = vmatpush1.bf16.msra.mxu0 %v2014
    %2876 = vmatprep.subr.bf16.mxu0 %v2023
    %2877 = vmatpush1.bf16.msra.mxu0 %v2022
    %2878 = vmatprep.subr.bf16.mxu0 %v2031
    %2879 = vmatpush1.bf16.msra.mxu0 %v2030
    %2880 = vmatprep.subr.bf16.mxu0 %v2039
    %2881 = vmatpush1.bf16.msra.mxu0 %v2038
    %2882 = vmatprep.subr.bf16.mxu0 %v2047
    %2883 = vmatpush1.bf16.msra.mxu0 %v2046
    %2884 = vmatprep.subr.bf16.mxu0 %v2055
    %2885 = vmatpush1.bf16.msra.mxu0 %v2054
    %2886 = vmatprep.subr.bf16.mxu0 %v2063
    %2887 = vmatpush1.bf16.msra.mxu0 %v2062
    %2888 = vmatprep.subr.bf16.mxu0 %v2071
    %2889 = vmatpush1.bf16.msra.mxu0 %v2070
    %2890 = vmatprep.subr.bf16.mxu0 %v2079
    %2891 = vmatpush1.bf16.msra.mxu0 %v2078
    %2892 = vmatprep.subr.bf16.mxu0 %v2087
    %2893 = vmatpush1.bf16.msra.mxu0 %v2086
    %2894 = vmatprep.mubr.bf16.mxu0 %v126
    %2895 = vmatmul.mubr.bf16.gmra.mrb[0].mxu0 %v125
    %v2896 = vpop.f32.mrb[0].mxu0
    %v2897 = vadd.f32 %v585, %v2896
    %v2898 = vpop.f32.mrb[0].mxu0
    %v2899 = vadd.f32 %v589, %v2898
    %v2900 = vpop.f32.mrb[0].mxu0
    %v2901 = vpop.f32.mrb[0].mxu0
    %2902 = vdwg.mxu0
    %2903 = vmatprep.subr.bf16.mxu0 %v2095
    %2904 = vmatpush1.bf16.msra.mxu0 %v2094
    %2905 = vmatprep.subr.bf16.mxu0 %v2103
    %2906 = vmatpush1.bf16.msra.mxu0 %v2102
    %2907 = vmatprep.subr.bf16.mxu0 %v2111
    %2908 = vmatpush1.bf16.msra.mxu0 %v2110
    %2909 = vmatprep.subr.bf16.mxu0 %v2119
    %2910 = vmatpush1.bf16.msra.mxu0 %v2118
    %2911 = vmatprep.subr.bf16.mxu0 %v2127
    %2912 = vmatpush1.bf16.msra.mxu0 %v2126
    %2913 = vmatprep.subr.bf16.mxu0 %v2135
    %2914 = vmatpush1.bf16.msra.mxu0 %v2134
    %2915 = vmatprep.subr.bf16.mxu0 %v2143
    %2916 = vmatpush1.bf16.msra.mxu0 %v2142
    %2917 = vmatprep.subr.bf16.mxu0 %v2151
    %2918 = vmatpush1.bf16.msra.mxu0 %v2150
    %2919 = vmatprep.subr.bf16.mxu0 %v2159
    %2920 = vmatpush1.bf16.msra.mxu0 %v2158
    %2921 = vmatprep.subr.bf16.mxu0 %v2167
    %2922 = vmatpush1.bf16.msra.mxu0 %v2166
    %2923 = vmatprep.subr.bf16.mxu0 %v2175
    %2924 = vmatpush1.bf16.msra.mxu0 %v2174
    %2925 = vmatprep.subr.bf16.mxu0 %v2183
    %2926 = vmatpush1.bf16.msra.mxu0 %v2182
    %2927 = vmatprep.subr.bf16.mxu0 %v2191
    %2928 = vmatpush1.bf16.msra.mxu0 %v2190
    %2929 = vmatprep.subr.bf16.mxu0 %v2199
    %2930 = vmatpush1.bf16.msra.mxu0 %v2198
    %2931 = vmatprep.subr.bf16.mxu0 %v2207
    %2932 = vmatpush1.bf16.msra.mxu0 %v2206
    %2933 = vmatprep.subr.bf16.mxu0 %v2215
    %2934 = vmatpush1.bf16.msra.mxu0 %v2214
    %2935 = vmatprep.mubr.bf16.mxu0 %v128
    %2936 = vmatmul.mubr.bf16.gmra.mrb[0].mxu0 %v127
    %v2937 = vpop.f32.mrb[0].mxu0
    %v2938 = vadd.f32 %v2897, %v2937
    %v2939 = vpop.f32.mrb[0].mxu0
    %v2940 = vadd.f32 %v2899, %v2939
    %v2941 = vpop.f32.mrb[0].mxu0
    %v2942 = vpop.f32.mrb[0].mxu0
    %2943 = vdwg.mxu0
    %2944 = vmatprep.subr.bf16.mxu0 %v2223
    %2945 = vmatpush1.bf16.msra.mxu0 %v2222
    %2946 = vmatprep.subr.bf16.mxu0 %v2231
    %2947 = vmatpush1.bf16.msra.mxu0 %v2230
    %2948 = vmatprep.subr.bf16.mxu0 %v2239
    %2949 = vmatpush1.bf16.msra.mxu0 %v2238
    %2950 = vmatprep.subr.bf16.mxu0 %v2247
    %2951 = vmatpush1.bf16.msra.mxu0 %v2246
    %2952 = vmatprep.subr.bf16.mxu0 %v2255
    %2953 = vmatpush1.bf16.msra.mxu0 %v2254
    %2954 = vmatprep.subr.bf16.mxu0 %v2263
    %2955 = vmatpush1.bf16.msra.mxu0 %v2262
    %2956 = vmatprep.subr.bf16.mxu0 %v2271
    %2957 = vmatpush1.bf16.msra.mxu0 %v2270
    %2958 = vmatprep.subr.bf16.mxu0 %v2279
    %2959 = vmatpush1.bf16.msra.mxu0 %v2278
    %2960 = vmatprep.subr.bf16.mxu0 %v2287
    %2961 = vmatpush1.bf16.msra.mxu0 %v2286
    %2962 = vmatprep.subr.bf16.mxu0 %v2295
    %2963 = vmatpush1.bf16.msra.mxu0 %v2294
    %2964 = vmatprep.subr.bf16.mxu0 %v2303
    %2965 = vmatpush1.bf16.msra.mxu0 %v2302
    %2966 = vmatprep.subr.bf16.mxu0 %v2311
    %2967 = vmatpush1.bf16.msra.mxu0 %v2310
    %2968 = vmatprep.subr.bf16.mxu0 %v2319
    %2969 = vmatpush1.bf16.msra.mxu0 %v2318
    %2970 = vmatprep.subr.bf16.mxu0 %v2327
    %2971 = vmatpush1.bf16.msra.mxu0 %v2326
    %2972 = vmatprep.subr.bf16.mxu0 %v2335
    %2973 = vmatpush1.bf16.msra.mxu0 %v2334
    %2974 = vmatprep.subr.bf16.mxu0 %v2343
    %2975 = vmatpush1.bf16.msra.mxu0 %v2342
    %2976 = vmatprep.mubr.bf16.mxu0 %v130
    %2977 = vmatmul.mubr.bf16.gmra.mrb[0].mxu0 %v129
    %v2978 = vpop.f32.mrb[0].mxu0
    %v2979 = vadd.f32 %v2938, %v2978
    %v2980 = vpop.f32.mrb[0].mxu0
    %v2981 = vadd.f32 %v2940, %v2980
    %v2982 = vpop.f32.mrb[0].mxu0
    %v2983 = vpop.f32.mrb[0].mxu0
    %2984 = vdwg.mxu0
    %2985 = vmatprep.subr.bf16.mxu0 %v2351
    %2986 = vmatpush1.bf16.msra.mxu0 %v2350
    %2987 = vmatprep.subr.bf16.mxu0 %v2359
    %2988 = vmatpush1.bf16.msra.mxu0 %v2358
    %2989 = vmatprep.subr.bf16.mxu0 %v2367
    %2990 = vmatpush1.bf16.msra.mxu0 %v2366
    %2991 = vmatprep.subr.bf16.mxu0 %v2375
    %2992 = vmatpush1.bf16.msra.mxu0 %v2374
    %2993 = vmatprep.subr.bf16.mxu0 %v2383
    %2994 = vmatpush1.bf16.msra.mxu0 %v2382
    %2995 = vmatprep.subr.bf16.mxu0 %v2391
    %2996 = vmatpush1.bf16.msra.mxu0 %v2390
    %2997 = vmatprep.subr.bf16.mxu0 %v2399
    %2998 = vmatpush1.bf16.msra.mxu0 %v2398
    %2999 = vmatprep.subr.bf16.mxu0 %v2407
    %3000 = vmatpush1.bf16.msra.mxu0 %v2406
    %3001 = vmatprep.subr.bf16.mxu0 0
    %3002 = vmatpush1.bf16.msra.mxu0 0
    %3003 = vmatprep.subr.bf16.mxu0 0
    %3004 = vmatpush1.bf16.msra.mxu0 0
    %3005 = vmatprep.subr.bf16.mxu0 0
    %3006 = vmatpush1.bf16.msra.mxu0 0
    %3007 = vmatprep.subr.bf16.mxu0 0
    %3008 = vmatpush1.bf16.msra.mxu0 0
    %3009 = vmatprep.subr.bf16.mxu0 0
    %3010 = vmatpush1.bf16.msra.mxu0 0
    %3011 = vmatprep.subr.bf16.mxu0 0
    %3012 = vmatpush1.bf16.msra.mxu0 0
    %3013 = vmatprep.subr.bf16.mxu0 0
    %3014 = vmatpush1.bf16.msra.mxu0 0
    %3015 = vmatprep.subr.bf16.mxu0 0
    %3016 = vmatpush1.bf16.msra.mxu0 0
    %3017 = vmatprep.mubr.bf16.mxu0 0
    %3018 = vmatmul.mubr.bf16.gmra.mrb[0].mxu0 %v131
    %v3019 = vpop.f32.mrb[0].mxu0
    %v3020 = vadd.f32 %v2979, %v3019
    %v3021 = vpop.f32.mrb[0].mxu0
    %v3022 = vadd.f32 %v2981, %v3021
    %v3023 = vpop.f32.mrb[0].mxu0
    %v3024 = vpop.f32.mrb[0].mxu0
    %3025 = vdwg.mxu0
    %3026 = vmatprep.subr.bf16.mxu0 %v1969
    %3027 = vmatpush1.bf16.msra.mxu0 %v1968
    %3028 = vmatprep.subr.bf16.mxu0 %v1977
    %3029 = vmatpush1.bf16.msra.mxu0 %v1976
    %3030 = vmatprep.subr.bf16.mxu0 %v1985
    %3031 = vmatpush1.bf16.msra.mxu0 %v1984
    %3032 = vmatprep.subr.bf16.mxu0 %v1993
    %3033 = vmatpush1.bf16.msra.mxu0 %v1992
    %3034 = vmatprep.subr.bf16.mxu0 %v2001
    %3035 = vmatpush1.bf16.msra.mxu0 %v2000
    %3036 = vmatprep.subr.bf16.mxu0 %v2009
    %3037 = vmatpush1.bf16.msra.mxu0 %v2008
    %3038 = vmatprep.subr.bf16.mxu0 %v2017
    %3039 = vmatpush1.bf16.msra.mxu0 %v2016
    %3040 = vmatprep.subr.bf16.mxu0 %v2025
    %3041 = vmatpush1.bf16.msra.mxu0 %v2024
    %3042 = vmatprep.subr.bf16.mxu0 %v2033
    %3043 = vmatpush1.bf16.msra.mxu0 %v2032
    %3044 = vmatprep.subr.bf16.mxu0 %v2041
    %3045 = vmatpush1.bf16.msra.mxu0 %v2040
    %3046 = vmatprep.subr.bf16.mxu0 %v2049
    %3047 = vmatpush1.bf16.msra.mxu0 %v2048
    %3048 = vmatprep.subr.bf16.mxu0 %v2057
    %3049 = vmatpush1.bf16.msra.mxu0 %v2056
    %3050 = vmatprep.subr.bf16.mxu0 %v2065
    %3051 = vmatpush1.bf16.msra.mxu0 %v2064
    %3052 = vmatprep.subr.bf16.mxu0 %v2073
    %3053 = vmatpush1.bf16.msra.mxu0 %v2072
    %3054 = vmatprep.subr.bf16.mxu0 %v2081
    %3055 = vmatpush1.bf16.msra.mxu0 %v2080
    %3056 = vmatprep.subr.bf16.mxu0 %v2089
    %3057 = vmatpush1.bf16.msra.mxu0 %v2088
    %3058 = vmatprep.mubr.bf16.mxu0 %v126
    %3059 = vmatmul.mubr.bf16.gmra.mrb[0].mxu0 %v125
    %v3060 = vpop.f32.mrb[0].mxu0
    %v3061 = vadd.f32 %v593, %v3060
    %v3062 = vpop.f32.mrb[0].mxu0
    %v3063 = vadd.f32 %v597, %v3062
    %v3064 = vpop.f32.mrb[0].mxu0
    %v3065 = vpop.f32.mrb[0].mxu0
    %3066 = vdwg.mxu0
    %3067 = vmatprep.subr.bf16.mxu0 %v2097
    %3068 = vmatpush1.bf16.msra.mxu0 %v2096
    %3069 = vmatprep.subr.bf16.mxu0 %v2105
    %3070 = vmatpush1.bf16.msra.mxu0 %v2104
    %3071 = vmatprep.subr.bf16.mxu0 %v2113
    %3072 = vmatpush1.bf16.msra.mxu0 %v2112
    %3073 = vmatprep.subr.bf16.mxu0 %v2121
    %3074 = vmatpush1.bf16.msra.mxu0 %v2120
    %3075 = vmatprep.subr.bf16.mxu0 %v2129
    %3076 = vmatpush1.bf16.msra.mxu0 %v2128
    %3077 = vmatprep.subr.bf16.mxu0 %v2137
    %3078 = vmatpush1.bf16.msra.mxu0 %v2136
    %3079 = vmatprep.subr.bf16.mxu0 %v2145
    %3080 = vmatpush1.bf16.msra.mxu0 %v2144
    %3081 = vmatprep.subr.bf16.mxu0 %v2153
    %3082 = vmatpush1.bf16.msra.mxu0 %v2152
    %3083 = vmatprep.subr.bf16.mxu0 %v2161
    %3084 = vmatpush1.bf16.msra.mxu0 %v2160
    %3085 = vmatprep.subr.bf16.mxu0 %v2169
    %3086 = vmatpush1.bf16.msra.mxu0 %v2168
    %3087 = vmatprep.subr.bf16.mxu0 %v2177
    %3088 = vmatpush1.bf16.msra.mxu0 %v2176
    %3089 = vmatprep.subr.bf16.mxu0 %v2185
    %3090 = vmatpush1.bf16.msra.mxu0 %v2184
    %3091 = vmatprep.subr.bf16.mxu0 %v2193
    %3092 = vmatpush1.bf16.msra.mxu0 %v2192
    %3093 = vmatprep.subr.bf16.mxu0 %v2201
    %3094 = vmatpush1.bf16.msra.mxu0 %v2200
    %3095 = vmatprep.subr.bf16.mxu0 %v2209
    %3096 = vmatpush1.bf16.msra.mxu0 %v2208
    %3097 = vmatprep.subr.bf16.mxu0 %v2217
    %3098 = vmatpush1.bf16.msra.mxu0 %v2216
    %3099 = vmatprep.mubr.bf16.mxu0 %v128
    %3100 = vmatmul.mubr.bf16.gmra.mrb[0].mxu0 %v127
    %v3101 = vpop.f32.mrb[0].mxu0
    %v3102 = vadd.f32 %v3061, %v3101
    %v3103 = vpop.f32.mrb[0].mxu0
    %v3104 = vadd.f32 %v3063, %v3103
    %v3105 = vpop.f32.mrb[0].mxu0
    %v3106 = vpop.f32.mrb[0].mxu0
    %3107 = vdwg.mxu0
    %3108 = vmatprep.subr.bf16.mxu0 %v2225
    %3109 = vmatpush1.bf16.msra.mxu0 %v2224
    %3110 = vmatprep.subr.bf16.mxu0 %v2233
    %3111 = vmatpush1.bf16.msra.mxu0 %v2232
    %3112 = vmatprep.subr.bf16.mxu0 %v2241
    %3113 = vmatpush1.bf16.msra.mxu0 %v2240
    %3114 = vmatprep.subr.bf16.mxu0 %v2249
    %3115 = vmatpush1.bf16.msra.mxu0 %v2248
    %3116 = vmatprep.subr.bf16.mxu0 %v2257
    %3117 = vmatpush1.bf16.msra.mxu0 %v2256
    %3118 = vmatprep.subr.bf16.mxu0 %v2265
    %3119 = vmatpush1.bf16.msra.mxu0 %v2264
    %3120 = vmatprep.subr.bf16.mxu0 %v2273
    %3121 = vmatpush1.bf16.msra.mxu0 %v2272
    %3122 = vmatprep.subr.bf16.mxu0 %v2281
    %3123 = vmatpush1.bf16.msra.mxu0 %v2280
    %3124 = vmatprep.subr.bf16.mxu0 %v2289
    %3125 = vmatpush1.bf16.msra.mxu0 %v2288
    %3126 = vmatprep.subr.bf16.mxu0 %v2297
    %3127 = vmatpush1.bf16.msra.mxu0 %v2296
    %3128 = vmatprep.subr.bf16.mxu0 %v2305
    %3129 = vmatpush1.bf16.msra.mxu0 %v2304
    %3130 = vmatprep.subr.bf16.mxu0 %v2313
    %3131 = vmatpush1.bf16.msra.mxu0 %v2312
    %3132 = vmatprep.subr.bf16.mxu0 %v2321
    %3133 = vmatpush1.bf16.msra.mxu0 %v2320
    %3134 = vmatprep.subr.bf16.mxu0 %v2329
    %3135 = vmatpush1.bf16.msra.mxu0 %v2328
    %3136 = vmatprep.subr.bf16.mxu0 %v2337
    %3137 = vmatpush1.bf16.msra.mxu0 %v2336
    %3138 = vmatprep.subr.bf16.mxu0 %v2345
    %3139 = vmatpush1.bf16.msra.mxu0 %v2344
    %3140 = vmatprep.mubr.bf16.mxu0 %v130
    %3141 = vmatmul.mubr.bf16.gmra.mrb[0].mxu0 %v129
    %v3142 = vpop.f32.mrb[0].mxu0
    %v3143 = vadd.f32 %v3102, %v3142
    %v3144 = vpop.f32.mrb[0].mxu0
    %v3145 = vadd.f32 %v3104, %v3144
    %v3146 = vpop.f32.mrb[0].mxu0
    %v3147 = vpop.f32.mrb[0].mxu0
    %3148 = vdwg.mxu0
    %3149 = vmatprep.subr.bf16.mxu0 %v2353
    %3150 = vmatpush1.bf16.msra.mxu0 %v2352
    %3151 = vmatprep.subr.bf16.mxu0 %v2361
    %3152 = vmatpush1.bf16.msra.mxu0 %v2360
    %3153 = vmatprep.subr.bf16.mxu0 %v2369
    %3154 = vmatpush1.bf16.msra.mxu0 %v2368
    %3155 = vmatprep.subr.bf16.mxu0 %v2377
    %3156 = vmatpush1.bf16.msra.mxu0 %v2376
    %3157 = vmatprep.subr.bf16.mxu0 %v2385
    %3158 = vmatpush1.bf16.msra.mxu0 %v2384
    %3159 = vmatprep.subr.bf16.mxu0 %v2393
    %3160 = vmatpush1.bf16.msra.mxu0 %v2392
    %3161 = vmatprep.subr.bf16.mxu0 %v2401
    %3162 = vmatpush1.bf16.msra.mxu0 %v2400
    %3163 = vmatprep.subr.bf16.mxu0 %v2409
    %3164 = vmatpush1.bf16.msra.mxu0 %v2408
    %3165 = vmatprep.subr.bf16.mxu0 0
    %3166 = vmatpush1.bf16.msra.mxu0 0
    %3167 = vmatprep.subr.bf16.mxu0 0
    %3168 = vmatpush1.bf16.msra.mxu0 0
    %3169 = vmatprep.subr.bf16.mxu0 0
    %3170 = vmatpush1.bf16.msra.mxu0 0
    %3171 = vmatprep.subr.bf16.mxu0 0
    %3172 = vmatpush1.bf16.msra.mxu0 0
    %3173 = vmatprep.subr.bf16.mxu0 0
    %3174 = vmatpush1.bf16.msra.mxu0 0
    %3175 = vmatprep.subr.bf16.mxu0 0
    %3176 = vmatpush1.bf16.msra.mxu0 0
    %3177 = vmatprep.subr.bf16.mxu0 0
    %3178 = vmatpush1.bf16.msra.mxu0 0
    %3179 = vmatprep.subr.bf16.mxu0 0
    %3180 = vmatpush1.bf16.msra.mxu0 0
    %3181 = vmatprep.mubr.bf16.mxu0 0
    %3182 = vmatmul.mubr.bf16.gmra.mrb[0].mxu0 %v131
    %v3183 = vpop.f32.mrb[0].mxu0
    %v3184 = vadd.f32 %v3143, %v3183
    %v3185 = vpop.f32.mrb[0].mxu0
    %v3186 = vadd.f32 %v3145, %v3185
    %v3187 = vpop.f32.mrb[0].mxu0
    %v3188 = vpop.f32.mrb[0].mxu0
    %3189 = vdwg.mxu0
    %3190 = vmatprep.subr.bf16.mxu0 %v1971
    %3191 = vmatpush1.bf16.msra.mxu0 %v1970
    %3192 = vmatprep.subr.bf16.mxu0 %v1979
    %3193 = vmatpush1.bf16.msra.mxu0 %v1978
    %3194 = vmatprep.subr.bf16.mxu0 %v1987
    %3195 = vmatpush1.bf16.msra.mxu0 %v1986
    %3196 = vmatprep.subr.bf16.mxu0 %v1995
    %3197 = vmatpush1.bf16.msra.mxu0 %v1994
    %3198 = vmatprep.subr.bf16.mxu0 %v2003
    %3199 = vmatpush1.bf16.msra.mxu0 %v2002
    %3200 = vmatprep.subr.bf16.mxu0 %v2011
    %3201 = vmatpush1.bf16.msra.mxu0 %v2010
    %3202 = vmatprep.subr.bf16.mxu0 %v2019
    %3203 = vmatpush1.bf16.msra.mxu0 %v2018
    %3204 = vmatprep.subr.bf16.mxu0 %v2027
    %3205 = vmatpush1.bf16.msra.mxu0 %v2026
    %3206 = vmatprep.subr.bf16.mxu0 %v2035
    %3207 = vmatpush1.bf16.msra.mxu0 %v2034
    %3208 = vmatprep.subr.bf16.mxu0 %v2043
    %3209 = vmatpush1.bf16.msra.mxu0 %v2042
    %3210 = vmatprep.subr.bf16.mxu0 %v2051
    %3211 = vmatpush1.bf16.msra.mxu0 %v2050
    %3212 = vmatprep.subr.bf16.mxu0 %v2059
    %3213 = vmatpush1.bf16.msra.mxu0 %v2058
    %3214 = vmatprep.subr.bf16.mxu0 %v2067
    %3215 = vmatpush1.bf16.msra.mxu0 %v2066
    %3216 = vmatprep.subr.bf16.mxu0 %v2075
    %3217 = vmatpush1.bf16.msra.mxu0 %v2074
    %3218 = vmatprep.subr.bf16.mxu0 %v2083
    %3219 = vmatpush1.bf16.msra.mxu0 %v2082
    %3220 = vmatprep.subr.bf16.mxu0 %v2091
    %3221 = vmatpush1.bf16.msra.mxu0 %v2090
    %3222 = vmatprep.mubr.bf16.mxu0 %v126
    %3223 = vmatmul.mubr.bf16.gmra.mrb[0].mxu0 %v125
    %v3224 = vpop.f32.mrb[0].mxu0
    %v3225 = vadd.f32 %v601, %v3224
    %v3226 = vpop.f32.mrb[0].mxu0
    %v3227 = vadd.f32 %v605, %v3226
    %v3228 = vpop.f32.mrb[0].mxu0
    %v3229 = vpop.f32.mrb[0].mxu0
    %3230 = vdwg.mxu0
    %3231 = vmatprep.subr.bf16.mxu0 %v2099
    %3232 = vmatpush1.bf16.msra.mxu0 %v2098
    %3233 = vmatprep.subr.bf16.mxu0 %v2107
    %3234 = vmatpush1.bf16.msra.mxu0 %v2106
    %3235 = vmatprep.subr.bf16.mxu0 %v2115
    %3236 = vmatpush1.bf16.msra.mxu0 %v2114
    %3237 = vmatprep.subr.bf16.mxu0 %v2123
    %3238 = vmatpush1.bf16.msra.mxu0 %v2122
    %3239 = vmatprep.subr.bf16.mxu0 %v2131
    %3240 = vmatpush1.bf16.msra.mxu0 %v2130
    %3241 = vmatprep.subr.bf16.mxu0 %v2139
    %3242 = vmatpush1.bf16.msra.mxu0 %v2138
    %3243 = vmatprep.subr.bf16.mxu0 %v2147
    %3244 = vmatpush1.bf16.msra.mxu0 %v2146
    %3245 = vmatprep.subr.bf16.mxu0 %v2155
    %3246 = vmatpush1.bf16.msra.mxu0 %v2154
    %3247 = vmatprep.subr.bf16.mxu0 %v2163
    %3248 = vmatpush1.bf16.msra.mxu0 %v2162
    %3249 = vmatprep.subr.bf16.mxu0 %v2171
    %3250 = vmatpush1.bf16.msra.mxu0 %v2170
    %3251 = vmatprep.subr.bf16.mxu0 %v2179
    %3252 = vmatpush1.bf16.msra.mxu0 %v2178
    %3253 = vmatprep.subr.bf16.mxu0 %v2187
    %3254 = vmatpush1.bf16.msra.mxu0 %v2186
    %3255 = vmatprep.subr.bf16.mxu0 %v2195
    %3256 = vmatpush1.bf16.msra.mxu0 %v2194
    %3257 = vmatprep.subr.bf16.mxu0 %v2203
    %3258 = vmatpush1.bf16.msra.mxu0 %v2202
    %3259 = vmatprep.subr.bf16.mxu0 %v2211
    %3260 = vmatpush1.bf16.msra.mxu0 %v2210
    %3261 = vmatprep.subr.bf16.mxu0 %v2219
    %3262 = vmatpush1.bf16.msra.mxu0 %v2218
    %3263 = vmatprep.mubr.bf16.mxu0 %v128
    %3264 = vmatmul.mubr.bf16.gmra.mrb[0].mxu0 %v127
    %v3265 = vpop.f32.mrb[0].mxu0
    %v3266 = vadd.f32 %v3225, %v3265
    %v3267 = vpop.f32.mrb[0].mxu0
    %v3268 = vadd.f32 %v3227, %v3267
    %v3269 = vpop.f32.mrb[0].mxu0
    %v3270 = vpop.f32.mrb[0].mxu0
    %3271 = vdwg.mxu0
    %3272 = vmatprep.subr.bf16.mxu0 %v2227
    %3273 = vmatpush1.bf16.msra.mxu0 %v2226
    %3274 = vmatprep.subr.bf16.mxu0 %v2235
    %3275 = vmatpush1.bf16.msra.mxu0 %v2234
    %3276 = vmatprep.subr.bf16.mxu0 %v2243
    %3277 = vmatpush1.bf16.msra.mxu0 %v2242
    %3278 = vmatprep.subr.bf16.mxu0 %v2251
    %3279 = vmatpush1.bf16.msra.mxu0 %v2250
    %3280 = vmatprep.subr.bf16.mxu0 %v2259
    %3281 = vmatpush1.bf16.msra.mxu0 %v2258
    %3282 = vmatprep.subr.bf16.mxu0 %v2267
    %3283 = vmatpush1.bf16.msra.mxu0 %v2266
    %3284 = vmatprep.subr.bf16.mxu0 %v2275
    %3285 = vmatpush1.bf16.msra.mxu0 %v2274
    %3286 = vmatprep.subr.bf16.mxu0 %v2283
    %3287 = vmatpush1.bf16.msra.mxu0 %v2282
    %3288 = vmatprep.subr.bf16.mxu0 %v2291
    %3289 = vmatpush1.bf16.msra.mxu0 %v2290
    %3290 = vmatprep.subr.bf16.mxu0 %v2299
    %3291 = vmatpush1.bf16.msra.mxu0 %v2298
    %3292 = vmatprep.subr.bf16.mxu0 %v2307
    %3293 = vmatpush1.bf16.msra.mxu0 %v2306
    %3294 = vmatprep.subr.bf16.mxu0 %v2315
    %3295 = vmatpush1.bf16.msra.mxu0 %v2314
    %3296 = vmatprep.subr.bf16.mxu0 %v2323
    %3297 = vmatpush1.bf16.msra.mxu0 %v2322
    %3298 = vmatprep.subr.bf16.mxu0 %v2331
    %3299 = vmatpush1.bf16.msra.mxu0 %v2330
    %3300 = vmatprep.subr.bf16.mxu0 %v2339
    %3301 = vmatpush1.bf16.msra.mxu0 %v2338
    %3302 = vmatprep.subr.bf16.mxu0 %v2347
    %3303 = vmatpush1.bf16.msra.mxu0 %v2346
    %3304 = vmatprep.mubr.bf16.mxu0 %v130
    %3305 = vmatmul.mubr.bf16.gmra.mrb[0].mxu0 %v129
    %v3306 = vpop.f32.mrb[0].mxu0
    %v3307 = vadd.f32 %v3266, %v3306
    %v3308 = vpop.f32.mrb[0].mxu0
    %v3309 = vadd.f32 %v3268, %v3308
    %v3310 = vpop.f32.mrb[0].mxu0
    %v3311 = vpop.f32.mrb[0].mxu0
    %3312 = vdwg.mxu0
    %3313 = vmatprep.subr.bf16.mxu0 %v2355
    %3314 = vmatpush1.bf16.msra.mxu0 %v2354
    %3315 = vmatprep.subr.bf16.mxu0 %v2363
    %3316 = vmatpush1.bf16.msra.mxu0 %v2362
    %3317 = vmatprep.subr.bf16.mxu0 %v2371
    %3318 = vmatpush1.bf16.msra.mxu0 %v2370
    %3319 = vmatprep.subr.bf16.mxu0 %v2379
    %3320 = vmatpush1.bf16.msra.mxu0 %v2378
    %3321 = vmatprep.subr.bf16.mxu0 %v2387
    %3322 = vmatpush1.bf16.msra.mxu0 %v2386
    %3323 = vmatprep.subr.bf16.mxu0 %v2395
    %3324 = vmatpush1.bf16.msra.mxu0 %v2394
    %3325 = vmatprep.subr.bf16.mxu0 %v2403
    %3326 = vmatpush1.bf16.msra.mxu0 %v2402
    %3327 = vmatprep.subr.bf16.mxu0 %v2411
    %3328 = vmatpush1.bf16.msra.mxu0 %v2410
    %3329 = vmatprep.subr.bf16.mxu0 0
    %3330 = vmatpush1.bf16.msra.mxu0 0
    %3331 = vmatprep.subr.bf16.mxu0 0
    %3332 = vmatpush1.bf16.msra.mxu0 0
    %3333 = vmatprep.subr.bf16.mxu0 0
    %3334 = vmatpush1.bf16.msra.mxu0 0
    %3335 = vmatprep.subr.bf16.mxu0 0
    %3336 = vmatpush1.bf16.msra.mxu0 0
    %3337 = vmatprep.subr.bf16.mxu0 0
    %3338 = vmatpush1.bf16.msra.mxu0 0
    %3339 = vmatprep.subr.bf16.mxu0 0
    %3340 = vmatpush1.bf16.msra.mxu0 0
    %3341 = vmatprep.subr.bf16.mxu0 0
    %3342 = vmatpush1.bf16.msra.mxu0 0
    %3343 = vmatprep.subr.bf16.mxu0 0
    %3344 = vmatpush1.bf16.msra.mxu0 0
    %3345 = vmatprep.mubr.bf16.mxu0 0
    %3346 = vmatmul.mubr.bf16.gmra.mrb[0].mxu0 %v131
    %v3347 = vpop.f32.mrb[0].mxu0
    %v3348 = vadd.f32 %v3307, %v3347
    %v3349 = vpop.f32.mrb[0].mxu0
    %v3350 = vadd.f32 %v3309, %v3349
    %v3351 = vpop.f32.mrb[0].mxu0
    %v3352 = vpop.f32.mrb[0].mxu0
    %3353 = vdwg.mxu0
    %3354 = vmatprep.subr.bf16.mxu0 %v1973
    %3355 = vmatpush1.bf16.msra.mxu0 %v1972
    %3356 = vmatprep.subr.bf16.mxu0 %v1981
    %3357 = vmatpush1.bf16.msra.mxu0 %v1980
    %3358 = vmatprep.subr.bf16.mxu0 %v1989
    %3359 = vmatpush1.bf16.msra.mxu0 %v1988
    %3360 = vmatprep.subr.bf16.mxu0 %v1997
    %3361 = vmatpush1.bf16.msra.mxu0 %v1996
    %3362 = vmatprep.subr.bf16.mxu0 %v2005
    %3363 = vmatpush1.bf16.msra.mxu0 %v2004
    %3364 = vmatprep.subr.bf16.mxu0 %v2013
    %3365 = vmatpush1.bf16.msra.mxu0 %v2012
    %3366 = vmatprep.subr.bf16.mxu0 %v2021
    %3367 = vmatpush1.bf16.msra.mxu0 %v2020
    %3368 = vmatprep.subr.bf16.mxu0 %v2029
    %3369 = vmatpush1.bf16.msra.mxu0 %v2028
    %3370 = vmatprep.subr.bf16.mxu0 %v2037
    %3371 = vmatpush1.bf16.msra.mxu0 %v2036
    %3372 = vmatprep.subr.bf16.mxu0 %v2045
    %3373 = vmatpush1.bf16.msra.mxu0 %v2044
    %3374 = vmatprep.subr.bf16.mxu0 %v2053
    %3375 = vmatpush1.bf16.msra.mxu0 %v2052
    %3376 = vmatprep.subr.bf16.mxu0 %v2061
    %3377 = vmatpush1.bf16.msra.mxu0 %v2060
    %3378 = vmatprep.subr.bf16.mxu0 %v2069
    %3379 = vmatpush1.bf16.msra.mxu0 %v2068
    %3380 = vmatprep.subr.bf16.mxu0 %v2077
    %3381 = vmatpush1.bf16.msra.mxu0 %v2076
    %3382 = vmatprep.subr.bf16.mxu0 %v2085
    %3383 = vmatpush1.bf16.msra.mxu0 %v2084
    %3384 = vmatprep.subr.bf16.mxu0 %v2093
    %3385 = vmatpush1.bf16.msra.mxu0 %v2092
    %3386 = vmatprep.mubr.bf16.mxu0 %v126
    %3387 = vmatmul.mubr.bf16.gmra.mrb[0].mxu0 %v125
    %v3388 = vpop.f32.mrb[0].mxu0
    %v3389 = vadd.f32 %v609, %v3388
    %v3390 = vpop.f32.mrb[0].mxu0
    %v3391 = vadd.f32 %v613, %v3390
    %v3392 = vpop.f32.mrb[0].mxu0
    %v3393 = vpop.f32.mrb[0].mxu0
    %3394 = vdwg.mxu0
    %3395 = vmatprep.subr.bf16.mxu0 %v2101
    %3396 = vmatpush1.bf16.msra.mxu0 %v2100
    %3397 = vmatprep.subr.bf16.mxu0 %v2109
    %3398 = vmatpush1.bf16.msra.mxu0 %v2108
    %3399 = vmatprep.subr.bf16.mxu0 %v2117
    %3400 = vmatpush1.bf16.msra.mxu0 %v2116
    %3401 = vmatprep.subr.bf16.mxu0 %v2125
    %3402 = vmatpush1.bf16.msra.mxu0 %v2124
    %3403 = vmatprep.subr.bf16.mxu0 %v2133
    %3404 = vmatpush1.bf16.msra.mxu0 %v2132
    %3405 = vmatprep.subr.bf16.mxu0 %v2141
    %3406 = vmatpush1.bf16.msra.mxu0 %v2140
    %3407 = vmatprep.subr.bf16.mxu0 %v2149
    %3408 = vmatpush1.bf16.msra.mxu0 %v2148
    %3409 = vmatprep.subr.bf16.mxu0 %v2157
    %3410 = vmatpush1.bf16.msra.mxu0 %v2156
    %3411 = vmatprep.subr.bf16.mxu0 %v2165
    %3412 = vmatpush1.bf16.msra.mxu0 %v2164
    %3413 = vmatprep.subr.bf16.mxu0 %v2173
    %3414 = vmatpush1.bf16.msra.mxu0 %v2172
    %3415 = vmatprep.subr.bf16.mxu0 %v2181
    %3416 = vmatpush1.bf16.msra.mxu0 %v2180
    %3417 = vmatprep.subr.bf16.mxu0 %v2189
    %3418 = vmatpush1.bf16.msra.mxu0 %v2188
    %3419 = vmatprep.subr.bf16.mxu0 %v2197
    %3420 = vmatpush1.bf16.msra.mxu0 %v2196
    %3421 = vmatprep.subr.bf16.mxu0 %v2205
    %3422 = vmatpush1.bf16.msra.mxu0 %v2204
    %3423 = vmatprep.subr.bf16.mxu0 %v2213
    %3424 = vmatpush1.bf16.msra.mxu0 %v2212
    %3425 = vmatprep.subr.bf16.mxu0 %v2221
    %3426 = vmatpush1.bf16.msra.mxu0 %v2220
    %3427 = vmatprep.mubr.bf16.mxu0 %v128
    %3428 = vmatmul.mubr.bf16.gmra.mrb[0].mxu0 %v127
    %v3429 = vpop.f32.mrb[0].mxu0
    %v3430 = vadd.f32 %v3389, %v3429
    %v3431 = vpop.f32.mrb[0].mxu0
    %v3432 = vadd.f32 %v3391, %v3431
    %v3433 = vpop.f32.mrb[0].mxu0
    %v3434 = vpop.f32.mrb[0].mxu0
    %3435 = vdwg.mxu0
    %3436 = vmatprep.subr.bf16.mxu0 %v2229
    %3437 = vmatpush1.bf16.msra.mxu0 %v2228
    %3438 = vmatprep.subr.bf16.mxu0 %v2237
    %3439 = vmatpush1.bf16.msra.mxu0 %v2236
    %3440 = vmatprep.subr.bf16.mxu0 %v2245
    %3441 = vmatpush1.bf16.msra.mxu0 %v2244
    %3442 = vmatprep.subr.bf16.mxu0 %v2253
    %3443 = vmatpush1.bf16.msra.mxu0 %v2252
    %3444 = vmatprep.subr.bf16.mxu0 %v2261
    %3445 = vmatpush1.bf16.msra.mxu0 %v2260
    %3446 = vmatprep.subr.bf16.mxu0 %v2269
    %3447 = vmatpush1.bf16.msra.mxu0 %v2268
    %3448 = vmatprep.subr.bf16.mxu0 %v2277
    %3449 = vmatpush1.bf16.msra.mxu0 %v2276
    %3450 = vmatprep.subr.bf16.mxu0 %v2285
    %3451 = vmatpush1.bf16.msra.mxu0 %v2284
    %3452 = vmatprep.subr.bf16.mxu0 %v2293
    %3453 = vmatpush1.bf16.msra.mxu0 %v2292
    %3454 = vmatprep.subr.bf16.mxu0 %v2301
    %3455 = vmatpush1.bf16.msra.mxu0 %v2300
    %3456 = vmatprep.subr.bf16.mxu0 %v2309
    %3457 = vmatpush1.bf16.msra.mxu0 %v2308
    %3458 = vmatprep.subr.bf16.mxu0 %v2317
    %3459 = vmatpush1.bf16.msra.mxu0 %v2316
    %3460 = vmatprep.subr.bf16.mxu0 %v2325
    %3461 = vmatpush1.bf16.msra.mxu0 %v2324
    %3462 = vmatprep.subr.bf16.mxu0 %v2333
    %3463 = vmatpush1.bf16.msra.mxu0 %v2332
    %3464 = vmatprep.subr.bf16.mxu0 %v2341
    %3465 = vmatpush1.bf16.msra.mxu0 %v2340
    %3466 = vmatprep.subr.bf16.mxu0 %v2349
    %3467 = vmatpush1.bf16.msra.mxu0 %v2348
    %3468 = vmatprep.mubr.bf16.mxu0 %v130
    %3469 = vmatmul.mubr.bf16.gmra.mrb[0].mxu0 %v129
    %v3470 = vpop.f32.mrb[0].mxu0
    %v3471 = vadd.f32 %v3430, %v3470
    %v3472 = vpop.f32.mrb[0].mxu0
    %v3473 = vadd.f32 %v3432, %v3472
    %v3474 = vpop.f32.mrb[0].mxu0
    %v3475 = vpop.f32.mrb[0].mxu0
    %3476 = vdwg.mxu0
    %3477 = vmatprep.subr.bf16.mxu0 %v2357
    %3478 = vmatpush1.bf16.msra.mxu0 %v2356
    %3479 = vmatprep.subr.bf16.mxu0 %v2365
    %3480 = vmatpush1.bf16.msra.mxu0 %v2364
    %3481 = vmatprep.subr.bf16.mxu0 %v2373
    %3482 = vmatpush1.bf16.msra.mxu0 %v2372
    %3483 = vmatprep.subr.bf16.mxu0 %v2381
    %3484 = vmatpush1.bf16.msra.mxu0 %v2380
    %3485 = vmatprep.subr.bf16.mxu0 %v2389
    %3486 = vmatpush1.bf16.msra.mxu0 %v2388
    %3487 = vmatprep.subr.bf16.mxu0 %v2397
    %3488 = vmatpush1.bf16.msra.mxu0 %v2396
    %3489 = vmatprep.subr.bf16.mxu0 %v2405
    %3490 = vmatpush1.bf16.msra.mxu0 %v2404
    %3491 = vmatprep.subr.bf16.mxu0 %v2413
    %3492 = vmatpush1.bf16.msra.mxu0 %v2412
    %3493 = vmatprep.subr.bf16.mxu0 0
    %3494 = vmatpush1.bf16.msra.mxu0 0
    %3495 = vmatprep.subr.bf16.mxu0 0
    %3496 = vmatpush1.bf16.msra.mxu0 0
    %3497 = vmatprep.subr.bf16.mxu0 0
    %3498 = vmatpush1.bf16.msra.mxu0 0
    %3499 = vmatprep.subr.bf16.mxu0 0
    %3500 = vmatpush1.bf16.msra.mxu0 0
    %3501 = vmatprep.subr.bf16.mxu0 0
    %3502 = vmatpush1.bf16.msra.mxu0 0
    %3503 = vmatprep.subr.bf16.mxu0 0
    %3504 = vmatpush1.bf16.msra.mxu0 0
    %3505 = vmatprep.subr.bf16.mxu0 0
    %3506 = vmatpush1.bf16.msra.mxu0 0
    %3507 = vmatprep.subr.bf16.mxu0 0
    %3508 = vmatpush1.bf16.msra.mxu0 0
    %3509 = vmatprep.mubr.bf16.mxu0 0
    %3510 = vmatmul.mubr.bf16.gmra.mrb[0].mxu0 %v131
    %v3511 = vpop.f32.mrb[0].mxu0
    %v3512 = vadd.f32 %v3471, %v3511
    %v3513 = vpop.f32.mrb[0].mxu0
    %v3514 = vadd.f32 %v3473, %v3513
    %v3515 = vpop.f32.mrb[0].mxu0
    %v3516 = vpop.f32.mrb[0].mxu0
    %3517 = vdwg.mxu0
    %v3518 = vmax.f32 %v3020, 0.0
    %v3519 = vmax.f32 %v3022, 0.0
    %v3520 = vmax.f32 %v3184, 0.0
    %v3521 = vmax.f32 %v3186, 0.0
    %v3522 = vmax.f32 %v3348, 0.0
    %v3523 = vmax.f32 %v3350, 0.0
    %v3524 = vmax.f32 %v3512, 0.0
    %v3525 = vmax.f32 %v3514, 0.0
    %v3526 = vpack.c.bf16 %v3518, %v3518
    %v3527 = vpack.c.bf16 %v3519, %v3519
    %v3528 = vpack.c.bf16 %v3520, %v3520
    %v3529 = vpack.c.bf16 %v3521, %v3521
    %v3530 = vpack.c.bf16 %v3522, %v3522
    %v3531 = vpack.c.bf16 %v3523, %v3523
    %v3532 = vpack.c.bf16 %v3524, %v3524
    %v3533 = vpack.c.bf16 %v3525, %v3525
    %v3534 = vld [vmem:[#allocation8] sm:$0xff]
    %v3535 = vld [vmem:[#allocation8 + $0x8] sm:$0xff]
    %v3536 = vld [vmem:[#allocation8 + $0x10] sm:$0xff]
    %v3537 = vld [vmem:[#allocation8 + $0x18] sm:$0xff]
    %v3538 = vld [vmem:[#allocation8 + $0x20] sm:$0xff]
    %v3539 = vld [vmem:[#allocation8 + $0x28] sm:$0xff]
    %v3540 = vld [vmem:[#allocation8 + $0x30] sm:$0xff]
    %v3541 = vld [vmem:[#allocation8 + $0x38] sm:$0xff]
    %v3542 = vld [vmem:[#allocation8 + $0x40] sm:$0xff]
    %v3543 = vld [vmem:[#allocation8 + $0x48] sm:$0xff]
    %v3544 = vld [vmem:[#allocation8 + $0x50] sm:$0xff]
    %v3545 = vld [vmem:[#allocation8 + $0x58] sm:$0xff]
    %v3546 = vld [vmem:[#allocation8 + $0x60] sm:$0xff]
    %v3547 = vld [vmem:[#allocation8 + $0x68] sm:$0xff]
    %v3548 = vld [vmem:[#allocation8 + $0x70] sm:$0xff]
    %v3549 = vld [vmem:[#allocation8 + $0x78] sm:$0xff]
    %v3550 = vld [vmem:[#allocation8 + $0x80] sm:$0xff]
    %v3551 = vld [vmem:[#allocation8 + $0x88] sm:$0xff]
    %v3552 = vld [vmem:[#allocation8 + $0x90] sm:$0xff]
    %v3553 = vld [vmem:[#allocation8 + $0x98] sm:$0xff]
    %v3554 = vld [vmem:[#allocation8 + $0xa0] sm:$0xff]
    %v3555 = vld [vmem:[#allocation8 + $0xa8] sm:$0xff]
    %v3556 = vld [vmem:[#allocation8 + $0xb0] sm:$0xff]
    %v3557 = vld [vmem:[#allocation8 + $0xb8] sm:$0xff]
    %v3558 = vld [vmem:[#allocation8 + $0xc0] sm:$0xff]
    %v3559 = vld [vmem:[#allocation8 + $0xc8] sm:$0xff]
    %v3560 = vld [vmem:[#allocation8 + $0xd0] sm:$0xff]
    %v3561 = vld [vmem:[#allocation8 + $0xd8] sm:$0xff]
    %v3562 = vld [vmem:[#allocation8 + $0xe0] sm:$0xff]
    %v3563 = vld [vmem:[#allocation8 + $0xe8] sm:$0xff]
    %v3564 = vld [vmem:[#allocation8 + $0xf0] sm:$0xff]
    %v3565 = vld [vmem:[#allocation8 + $0xf8] sm:$0xff]
    %v3566 = vld [vmem:[#allocation8 + $0x100] sm:$0xff]
    %v3567 = vld [vmem:[#allocation8 + $0x108] sm:$0xff]
    %v3568 = vld [vmem:[#allocation8 + $0x110] sm:$0xff]
    %v3569 = vld [vmem:[#allocation8 + $0x118] sm:$0xff]
    %v3570 = vld [vmem:[#allocation8 + $0x120] sm:$0xff]
    %v3571 = vld [vmem:[#allocation8 + $0x128] sm:$0xff]
    %v3572 = vld [vmem:[#allocation8 + $0x130] sm:$0xff]
    %v3573 = vld [vmem:[#allocation8 + $0x138] sm:$0xff]
    %v3574 = vld [vmem:[#allocation8 + $0x140] sm:$0xff]
    %v3575 = vld [vmem:[#allocation8 + $0x148] sm:$0xff]
    %v3576 = vld [vmem:[#allocation8 + $0x150] sm:$0xff]
    %v3577 = vld [vmem:[#allocation8 + $0x158] sm:$0xff]
    %v3578 = vld [vmem:[#allocation8 + $0x160] sm:$0xff]
    %v3579 = vld [vmem:[#allocation8 + $0x168] sm:$0xff]
    %v3580 = vld [vmem:[#allocation8 + $0x170] sm:$0xff]
    %v3581 = vld [vmem:[#allocation8 + $0x178] sm:$0xff]
    %v3582 = vld [vmem:[#allocation8 + $0x180] sm:$0xff]
    %v3583 = vld [vmem:[#allocation8 + $0x188] sm:$0xff]
    %v3584 = vld [vmem:[#allocation8 + $0x190] sm:$0xff]
    %v3585 = vld [vmem:[#allocation8 + $0x198] sm:$0xff]
    %v3586 = vld [vmem:[#allocation8 + $0x1a0] sm:$0xff]
    %v3587 = vld [vmem:[#allocation8 + $0x1a8] sm:$0xff]
    %v3588 = vld [vmem:[#allocation8 + $0x1b0] sm:$0xff]
    %v3589 = vld [vmem:[#allocation8 + $0x1b8] sm:$0xff]
    %v3590 = vld [vmem:[#allocation8 + $0x1c0] sm:$0xff]
    %v3591 = vld [vmem:[#allocation8 + $0x1c8] sm:$0xff]
    %v3592 = vld [vmem:[#allocation8 + $0x1d0] sm:$0xff]
    %v3593 = vld [vmem:[#allocation8 + $0x1d8] sm:$0xff]
    %v3594 = vld [vmem:[#allocation8 + $0x1e0] sm:$0xff]
    %v3595 = vld [vmem:[#allocation8 + $0x1e8] sm:$0xff]
    %v3596 = vld [vmem:[#allocation8 + $0x1f0] sm:$0xff]
    %v3597 = vld [vmem:[#allocation8 + $0x1f8] sm:$0xff]
    %v3598 = vld [vmem:[#allocation8 + $0x200] sm:$0xff]
    %v3599 = vld [vmem:[#allocation8 + $0x208] sm:$0xff]
    %v3600 = vld [vmem:[#allocation8 + $0x210] sm:$0xff]
    %v3601 = vld [vmem:[#allocation8 + $0x218] sm:$0xff]
    %v3602 = vld [vmem:[#allocation8 + $0x220] sm:$0xff]
    %v3603 = vld [vmem:[#allocation8 + $0x228] sm:$0xff]
    %v3604 = vld [vmem:[#allocation8 + $0x230] sm:$0xff]
    %v3605 = vld [vmem:[#allocation8 + $0x238] sm:$0xff]
    %v3606 = vld [vmem:[#allocation8 + $0x240] sm:$0xff]
    %v3607 = vld [vmem:[#allocation8 + $0x248] sm:$0xff]
    %v3608 = vld [vmem:[#allocation8 + $0x250] sm:$0xff]
    %v3609 = vld [vmem:[#allocation8 + $0x258] sm:$0xff]
    %v3610 = vld [vmem:[#allocation8 + $0x260] sm:$0xff]
    %v3611 = vld [vmem:[#allocation8 + $0x268] sm:$0xff]
    %v3612 = vld [vmem:[#allocation8 + $0x270] sm:$0xff]
    %v3613 = vld [vmem:[#allocation8 + $0x278] sm:$0xff]
    %v3614 = vld [vmem:[#allocation8 + $0x280] sm:$0xff]
    %v3615 = vld [vmem:[#allocation8 + $0x288] sm:$0xff]
    %v3616 = vld [vmem:[#allocation8 + $0x290] sm:$0xff]
    %v3617 = vld [vmem:[#allocation8 + $0x298] sm:$0xff]
    %v3618 = vld [vmem:[#allocation8 + $0x2a0] sm:$0xff]
    %v3619 = vld [vmem:[#allocation8 + $0x2a8] sm:$0xff]
    %v3620 = vld [vmem:[#allocation8 + $0x2b0] sm:$0xff]
    %v3621 = vld [vmem:[#allocation8 + $0x2b8] sm:$0xff]
    %v3622 = vld [vmem:[#allocation8 + $0x2c0] sm:$0xff]
    %v3623 = vld [vmem:[#allocation8 + $0x2c8] sm:$0xff]
    %v3624 = vld [vmem:[#allocation8 + $0x2d0] sm:$0xff]
    %v3625 = vld [vmem:[#allocation8 + $0x2d8] sm:$0xff]
    %v3626 = vld [vmem:[#allocation8 + $0x2e0] sm:$0xff]
    %v3627 = vld [vmem:[#allocation8 + $0x2e8] sm:$0xff]
    %v3628 = vld [vmem:[#allocation8 + $0x2f0] sm:$0xff]
    %v3629 = vld [vmem:[#allocation8 + $0x2f8] sm:$0xff]
    %v3630 = vld [vmem:[#allocation8 + $0x300] sm:$0xff]
    %v3631 = vld [vmem:[#allocation8 + $0x308] sm:$0xff]
    %v3632 = vld [vmem:[#allocation8 + $0x310] sm:$0xff]
    %v3633 = vld [vmem:[#allocation8 + $0x318] sm:$0xff]
    %v3634 = vld [vmem:[#allocation8 + $0x320] sm:$0xff]
    %v3635 = vld [vmem:[#allocation8 + $0x328] sm:$0xff]
    %v3636 = vld [vmem:[#allocation8 + $0x330] sm:$0xff]
    %v3637 = vld [vmem:[#allocation8 + $0x338] sm:$0xff]
    %v3638 = vld [vmem:[#allocation8 + $0x340] sm:$0xff]
    %v3639 = vld [vmem:[#allocation8 + $0x348] sm:$0xff]
    %v3640 = vld [vmem:[#allocation8 + $0x350] sm:$0xff]
    %v3641 = vld [vmem:[#allocation8 + $0x358] sm:$0xff]
    %v3642 = vld [vmem:[#allocation8 + $0x360] sm:$0xff]
    %v3643 = vld [vmem:[#allocation8 + $0x368] sm:$0xff]
    %v3644 = vld [vmem:[#allocation8 + $0x370] sm:$0xff]
    %v3645 = vld [vmem:[#allocation8 + $0x378] sm:$0xff]
    %v3646 = vld [vmem:[#allocation8 + $0x380] sm:$0xff]
    %v3647 = vld [vmem:[#allocation8 + $0x388] sm:$0xff]
    %v3648 = vld [vmem:[#allocation8 + $0x390] sm:$0xff]
    %v3649 = vld [vmem:[#allocation8 + $0x398] sm:$0xff]
    %v3650 = vld [vmem:[#allocation8 + $0x3a0] sm:$0xff]
    %v3651 = vld [vmem:[#allocation8 + $0x3a8] sm:$0xff]
    %v3652 = vld [vmem:[#allocation8 + $0x3b0] sm:$0xff]
    %v3653 = vld [vmem:[#allocation8 + $0x3b8] sm:$0xff]
    %v3654 = vld [vmem:[#allocation8 + $0x3c0] sm:$0xff]
    %v3655 = vld [vmem:[#allocation8 + $0x3c8] sm:$0xff]
    %v3656 = vld [vmem:[#allocation8 + $0x3d0] sm:$0xff]
    %v3657 = vld [vmem:[#allocation8 + $0x3d8] sm:$0xff]
    %v3658 = vld [vmem:[#allocation8 + $0x3e0] sm:$0xff]
    %v3659 = vld [vmem:[#allocation8 + $0x3e8] sm:$0xff]
    %v3660 = vld [vmem:[#allocation8 + $0x3f0] sm:$0xff]
    %v3661 = vld [vmem:[#allocation8 + $0x3f8] sm:$0xff]
    %v3662 = vld [vmem:[#allocation10] sm:$0x3]
    %v3664 = vlaneseq
    %v3665 = vshrl.u32 %v3664, 7
    %v3666 = vsub.s32 0, %v3665
    %v3667 = vrot.slane %v3662, %v3666
    %v3668 = vlaneseq
    %v3669 = vshrl.u32 %v3668, 7
    %v3670 = vsub.s32 1, %v3669
    %v3671 = vrot.slane %v3662, %v3670
    %v3802 = vunpack.c.l.b16 %v3534
    %v3803 = vunpack.c.h.b16 %v3534
    %v3804 = vunpack.c.l.b16 %v3535
    %v3805 = vunpack.c.h.b16 %v3535
    %v3806 = vunpack.c.l.b16 %v3536
    %v3807 = vunpack.c.h.b16 %v3536
    %v3808 = vunpack.c.l.b16 %v3537
    %v3809 = vunpack.c.h.b16 %v3537
    %v3810 = vunpack.c.l.b16 %v3538
    %v3811 = vunpack.c.h.b16 %v3538
    %v3812 = vunpack.c.l.b16 %v3539
    %v3813 = vunpack.c.h.b16 %v3539
    %v3814 = vunpack.c.l.b16 %v3540
    %v3815 = vunpack.c.h.b16 %v3540
    %v3816 = vunpack.c.l.b16 %v3541
    %v3817 = vunpack.c.h.b16 %v3541
    %v3818 = vunpack.c.l.b16 %v3542
    %v3819 = vunpack.c.h.b16 %v3542
    %v3820 = vunpack.c.l.b16 %v3543
    %v3821 = vunpack.c.h.b16 %v3543
    %v3822 = vunpack.c.l.b16 %v3544
    %v3823 = vunpack.c.h.b16 %v3544
    %v3824 = vunpack.c.l.b16 %v3545
    %v3825 = vunpack.c.h.b16 %v3545
    %v3826 = vunpack.c.l.b16 %v3546
    %v3827 = vunpack.c.h.b16 %v3546
    %v3828 = vunpack.c.l.b16 %v3547
    %v3829 = vunpack.c.h.b16 %v3547
    %v3830 = vunpack.c.l.b16 %v3548
    %v3831 = vunpack.c.h.b16 %v3548
    %v3832 = vunpack.c.l.b16 %v3549
    %v3833 = vunpack.c.h.b16 %v3549
    %v3834 = vunpack.c.l.b16 %v3550
    %v3835 = vunpack.c.h.b16 %v3550
    %v3836 = vunpack.c.l.b16 %v3551
    %v3837 = vunpack.c.h.b16 %v3551
    %v3838 = vunpack.c.l.b16 %v3552
    %v3839 = vunpack.c.h.b16 %v3552
    %v3840 = vunpack.c.l.b16 %v3553
    %v3841 = vunpack.c.h.b16 %v3553
    %v3842 = vunpack.c.l.b16 %v3554
    %v3843 = vunpack.c.h.b16 %v3554
    %v3844 = vunpack.c.l.b16 %v3555
    %v3845 = vunpack.c.h.b16 %v3555
    %v3846 = vunpack.c.l.b16 %v3556
    %v3847 = vunpack.c.h.b16 %v3556
    %v3848 = vunpack.c.l.b16 %v3557
    %v3849 = vunpack.c.h.b16 %v3557
    %v3850 = vunpack.c.l.b16 %v3558
    %v3851 = vunpack.c.h.b16 %v3558
    %v3852 = vunpack.c.l.b16 %v3559
    %v3853 = vunpack.c.h.b16 %v3559
    %v3854 = vunpack.c.l.b16 %v3560
    %v3855 = vunpack.c.h.b16 %v3560
    %v3856 = vunpack.c.l.b16 %v3561
    %v3857 = vunpack.c.h.b16 %v3561
    %v3858 = vunpack.c.l.b16 %v3562
    %v3859 = vunpack.c.h.b16 %v3562
    %v3860 = vunpack.c.l.b16 %v3563
    %v3861 = vunpack.c.h.b16 %v3563
    %v3862 = vunpack.c.l.b16 %v3564
    %v3863 = vunpack.c.h.b16 %v3564
    %v3864 = vunpack.c.l.b16 %v3565
    %v3865 = vunpack.c.h.b16 %v3565
    %v3866 = vunpack.c.l.b16 %v3566
    %v3867 = vunpack.c.h.b16 %v3566
    %v3868 = vunpack.c.l.b16 %v3567
    %v3869 = vunpack.c.h.b16 %v3567
    %v3870 = vunpack.c.l.b16 %v3568
    %v3871 = vunpack.c.h.b16 %v3568
    %v3872 = vunpack.c.l.b16 %v3569
    %v3873 = vunpack.c.h.b16 %v3569
    %v3874 = vunpack.c.l.b16 %v3570
    %v3875 = vunpack.c.h.b16 %v3570
    %v3876 = vunpack.c.l.b16 %v3571
    %v3877 = vunpack.c.h.b16 %v3571
    %v3878 = vunpack.c.l.b16 %v3572
    %v3879 = vunpack.c.h.b16 %v3572
    %v3880 = vunpack.c.l.b16 %v3573
    %v3881 = vunpack.c.h.b16 %v3573
    %v3882 = vunpack.c.l.b16 %v3574
    %v3883 = vunpack.c.h.b16 %v3574
    %v3884 = vunpack.c.l.b16 %v3575
    %v3885 = vunpack.c.h.b16 %v3575
    %v3886 = vunpack.c.l.b16 %v3576
    %v3887 = vunpack.c.h.b16 %v3576
    %v3888 = vunpack.c.l.b16 %v3577
    %v3889 = vunpack.c.h.b16 %v3577
    %v3890 = vunpack.c.l.b16 %v3578
    %v3891 = vunpack.c.h.b16 %v3578
    %v3892 = vunpack.c.l.b16 %v3579
    %v3893 = vunpack.c.h.b16 %v3579
    %v3894 = vunpack.c.l.b16 %v3580
    %v3895 = vunpack.c.h.b16 %v3580
    %v3896 = vunpack.c.l.b16 %v3581
    %v3897 = vunpack.c.h.b16 %v3581
    %v3898 = vunpack.c.l.b16 %v3582
    %v3899 = vunpack.c.h.b16 %v3582
    %v3900 = vunpack.c.l.b16 %v3583
    %v3901 = vunpack.c.h.b16 %v3583
    %v3902 = vunpack.c.l.b16 %v3584
    %v3903 = vunpack.c.h.b16 %v3584
    %v3904 = vunpack.c.l.b16 %v3585
    %v3905 = vunpack.c.h.b16 %v3585
    %v3906 = vunpack.c.l.b16 %v3586
    %v3907 = vunpack.c.h.b16 %v3586
    %v3908 = vunpack.c.l.b16 %v3587
    %v3909 = vunpack.c.h.b16 %v3587
    %v3910 = vunpack.c.l.b16 %v3588
    %v3911 = vunpack.c.h.b16 %v3588
    %v3912 = vunpack.c.l.b16 %v3589
    %v3913 = vunpack.c.h.b16 %v3589
    %v3914 = vunpack.c.l.b16 %v3590
    %v3915 = vunpack.c.h.b16 %v3590
    %v3916 = vunpack.c.l.b16 %v3591
    %v3917 = vunpack.c.h.b16 %v3591
    %v3918 = vunpack.c.l.b16 %v3592
    %v3919 = vunpack.c.h.b16 %v3592
    %v3920 = vunpack.c.l.b16 %v3593
    %v3921 = vunpack.c.h.b16 %v3593
    %v3922 = vunpack.c.l.b16 %v3594
    %v3923 = vunpack.c.h.b16 %v3594
    %v3924 = vunpack.c.l.b16 %v3595
    %v3925 = vunpack.c.h.b16 %v3595
    %v3926 = vunpack.c.l.b16 %v3596
    %v3927 = vunpack.c.h.b16 %v3596
    %v3928 = vunpack.c.l.b16 %v3597
    %v3929 = vunpack.c.h.b16 %v3597
    %v3930 = vunpack.c.l.b16 %v3598
    %v3931 = vunpack.c.h.b16 %v3598
    %v3932 = vunpack.c.l.b16 %v3599
    %v3933 = vunpack.c.h.b16 %v3599
    %v3934 = vunpack.c.l.b16 %v3600
    %v3935 = vunpack.c.h.b16 %v3600
    %v3936 = vunpack.c.l.b16 %v3601
    %v3937 = vunpack.c.h.b16 %v3601
    %v3938 = vunpack.c.l.b16 %v3602
    %v3939 = vunpack.c.h.b16 %v3602
    %v3940 = vunpack.c.l.b16 %v3603
    %v3941 = vunpack.c.h.b16 %v3603
    %v3942 = vunpack.c.l.b16 %v3604
    %v3943 = vunpack.c.h.b16 %v3604
    %v3944 = vunpack.c.l.b16 %v3605
    %v3945 = vunpack.c.h.b16 %v3605
    %v3946 = vunpack.c.l.b16 %v3606
    %v3947 = vunpack.c.h.b16 %v3606
    %v3948 = vunpack.c.l.b16 %v3607
    %v3949 = vunpack.c.h.b16 %v3607
    %v3950 = vunpack.c.l.b16 %v3608
    %v3951 = vunpack.c.h.b16 %v3608
    %v3952 = vunpack.c.l.b16 %v3609
    %v3953 = vunpack.c.h.b16 %v3609
    %v3954 = vunpack.c.l.b16 %v3610
    %v3955 = vunpack.c.h.b16 %v3610
    %v3956 = vunpack.c.l.b16 %v3611
    %v3957 = vunpack.c.h.b16 %v3611
    %v3958 = vunpack.c.l.b16 %v3612
    %v3959 = vunpack.c.h.b16 %v3612
    %v3960 = vunpack.c.l.b16 %v3613
    %v3961 = vunpack.c.h.b16 %v3613
    %v3962 = vunpack.c.l.b16 %v3614
    %v3963 = vunpack.c.h.b16 %v3614
    %v3964 = vunpack.c.l.b16 %v3615
    %v3965 = vunpack.c.h.b16 %v3615
    %v3966 = vunpack.c.l.b16 %v3616
    %v3967 = vunpack.c.h.b16 %v3616
    %v3968 = vunpack.c.l.b16 %v3617
    %v3969 = vunpack.c.h.b16 %v3617
    %v3970 = vunpack.c.l.b16 %v3618
    %v3971 = vunpack.c.h.b16 %v3618
    %v3972 = vunpack.c.l.b16 %v3619
    %v3973 = vunpack.c.h.b16 %v3619
    %v3974 = vunpack.c.l.b16 %v3620
    %v3975 = vunpack.c.h.b16 %v3620
    %v3976 = vunpack.c.l.b16 %v3621
    %v3977 = vunpack.c.h.b16 %v3621
    %v3978 = vunpack.c.l.b16 %v3622
    %v3979 = vunpack.c.h.b16 %v3622
    %v3980 = vunpack.c.l.b16 %v3623
    %v3981 = vunpack.c.h.b16 %v3623
    %v3982 = vunpack.c.l.b16 %v3624
    %v3983 = vunpack.c.h.b16 %v3624
    %v3984 = vunpack.c.l.b16 %v3625
    %v3985 = vunpack.c.h.b16 %v3625
    %v3986 = vunpack.c.l.b16 %v3626
    %v3987 = vunpack.c.h.b16 %v3626
    %v3988 = vunpack.c.l.b16 %v3627
    %v3989 = vunpack.c.h.b16 %v3627
    %v3990 = vunpack.c.l.b16 %v3628
    %v3991 = vunpack.c.h.b16 %v3628
    %v3992 = vunpack.c.l.b16 %v3629
    %v3993 = vunpack.c.h.b16 %v3629
    %v3994 = vunpack.c.l.b16 %v3630
    %v3995 = vunpack.c.h.b16 %v3630
    %v3996 = vunpack.c.l.b16 %v3631
    %v3997 = vunpack.c.h.b16 %v3631
    %v3998 = vunpack.c.l.b16 %v3632
    %v3999 = vunpack.c.h.b16 %v3632
    %v4000 = vunpack.c.l.b16 %v3633
    %v4001 = vunpack.c.h.b16 %v3633
    %v4002 = vunpack.c.l.b16 %v3634
    %v4003 = vunpack.c.h.b16 %v3634
    %v4004 = vunpack.c.l.b16 %v3635
    %v4005 = vunpack.c.h.b16 %v3635
    %v4006 = vunpack.c.l.b16 %v3636
    %v4007 = vunpack.c.h.b16 %v3636
    %v4008 = vunpack.c.l.b16 %v3637
    %v4009 = vunpack.c.h.b16 %v3637
    %v4010 = vunpack.c.l.b16 %v3638
    %v4011 = vunpack.c.h.b16 %v3638
    %v4012 = vunpack.c.l.b16 %v3639
    %v4013 = vunpack.c.h.b16 %v3639
    %v4014 = vunpack.c.l.b16 %v3640
    %v4015 = vunpack.c.h.b16 %v3640
    %v4016 = vunpack.c.l.b16 %v3641
    %v4017 = vunpack.c.h.b16 %v3641
    %v4018 = vunpack.c.l.b16 %v3642
    %v4019 = vunpack.c.h.b16 %v3642
    %v4020 = vunpack.c.l.b16 %v3643
    %v4021 = vunpack.c.h.b16 %v3643
    %v4022 = vunpack.c.l.b16 %v3644
    %v4023 = vunpack.c.h.b16 %v3644
    %v4024 = vunpack.c.l.b16 %v3645
    %v4025 = vunpack.c.h.b16 %v3645
    %v4026 = vunpack.c.l.b16 %v3646
    %v4027 = vunpack.c.h.b16 %v3646
    %v4028 = vunpack.c.l.b16 %v3647
    %v4029 = vunpack.c.h.b16 %v3647
    %v4030 = vunpack.c.l.b16 %v3648
    %v4031 = vunpack.c.h.b16 %v3648
    %v4032 = vunpack.c.l.b16 %v3649
    %v4033 = vunpack.c.h.b16 %v3649
    %v4034 = vunpack.c.l.b16 %v3650
    %v4035 = vunpack.c.h.b16 %v3650
    %v4036 = vunpack.c.l.b16 %v3651
    %v4037 = vunpack.c.h.b16 %v3651
    %v4038 = vunpack.c.l.b16 %v3652
    %v4039 = vunpack.c.h.b16 %v3652
    %v4040 = vunpack.c.l.b16 %v3653
    %v4041 = vunpack.c.h.b16 %v3653
    %v4042 = vunpack.c.l.b16 %v3654
    %v4043 = vunpack.c.h.b16 %v3654
    %v4044 = vunpack.c.l.b16 %v3655
    %v4045 = vunpack.c.h.b16 %v3655
    %v4046 = vunpack.c.l.b16 %v3656
    %v4047 = vunpack.c.h.b16 %v3656
    %v4048 = vunpack.c.l.b16 %v3657
    %v4049 = vunpack.c.h.b16 %v3657
    %v4050 = vunpack.c.l.b16 %v3658
    %v4051 = vunpack.c.h.b16 %v3658
    %v4052 = vunpack.c.l.b16 %v3659
    %v4053 = vunpack.c.h.b16 %v3659
    %v4054 = vunpack.c.l.b16 %v3660
    %v4055 = vunpack.c.h.b16 %v3660
    %v4056 = vunpack.c.l.b16 %v3661
    %v4057 = vunpack.c.h.b16 %v3661
    %v4058 = vpack.c.b16 %v3804, %v3802
    %v4059 = vpack.c.b16 %v3805, %v3803
    %v4060 = vpack.c.b16 %v3808, %v3806
    %v4061 = vpack.c.b16 %v3809, %v3807
    %v4062 = vpack.c.b16 %v3812, %v3810
    %v4063 = vpack.c.b16 %v3813, %v3811
    %v4064 = vpack.c.b16 %v3816, %v3814
    %v4065 = vpack.c.b16 %v3817, %v3815
    %v4066 = vpack.c.b16 %v3820, %v3818
    %v4067 = vpack.c.b16 %v3821, %v3819
    %v4068 = vpack.c.b16 %v3824, %v3822
    %v4069 = vpack.c.b16 %v3825, %v3823
    %v4070 = vpack.c.b16 %v3828, %v3826
    %v4071 = vpack.c.b16 %v3829, %v3827
    %v4072 = vpack.c.b16 %v3832, %v3830
    %v4073 = vpack.c.b16 %v3833, %v3831
    %v4074 = vpack.c.b16 %v3836, %v3834
    %v4075 = vpack.c.b16 %v3837, %v3835
    %v4076 = vpack.c.b16 %v3840, %v3838
    %v4077 = vpack.c.b16 %v3841, %v3839
    %v4078 = vpack.c.b16 %v3844, %v3842
    %v4079 = vpack.c.b16 %v3845, %v3843
    %v4080 = vpack.c.b16 %v3848, %v3846
    %v4081 = vpack.c.b16 %v3849, %v3847
    %v4082 = vpack.c.b16 %v3852, %v3850
    %v4083 = vpack.c.b16 %v3853, %v3851
    %v4084 = vpack.c.b16 %v3856, %v3854
    %v4085 = vpack.c.b16 %v3857, %v3855
    %v4086 = vpack.c.b16 %v3860, %v3858
    %v4087 = vpack.c.b16 %v3861, %v3859
    %v4088 = vpack.c.b16 %v3864, %v3862
    %v4089 = vpack.c.b16 %v3865, %v3863
    %v4090 = vpack.c.b16 %v3868, %v3866
    %v4091 = vpack.c.b16 %v3869, %v3867
    %v4092 = vpack.c.b16 %v3872, %v3870
    %v4093 = vpack.c.b16 %v3873, %v3871
    %v4094 = vpack.c.b16 %v3876, %v3874
    %v4095 = vpack.c.b16 %v3877, %v3875
    %v4096 = vpack.c.b16 %v3880, %v3878
    %v4097 = vpack.c.b16 %v3881, %v3879
    %v4098 = vpack.c.b16 %v3884, %v3882
    %v4099 = vpack.c.b16 %v3885, %v3883
    %v4100 = vpack.c.b16 %v3888, %v3886
    %v4101 = vpack.c.b16 %v3889, %v3887
    %v4102 = vpack.c.b16 %v3892, %v3890
    %v4103 = vpack.c.b16 %v3893, %v3891
    %v4104 = vpack.c.b16 %v3896, %v3894
    %v4105 = vpack.c.b16 %v3897, %v3895
    %v4106 = vpack.c.b16 %v3900, %v3898
    %v4107 = vpack.c.b16 %v3901, %v3899
    %v4108 = vpack.c.b16 %v3904, %v3902
    %v4109 = vpack.c.b16 %v3905, %v3903
    %v4110 = vpack.c.b16 %v3908, %v3906
    %v4111 = vpack.c.b16 %v3909, %v3907
    %v4112 = vpack.c.b16 %v3912, %v3910
    %v4113 = vpack.c.b16 %v3913, %v3911
    %v4114 = vpack.c.b16 %v3916, %v3914
    %v4115 = vpack.c.b16 %v3917, %v3915
    %v4116 = vpack.c.b16 %v3920, %v3918
    %v4117 = vpack.c.b16 %v3921, %v3919
    %v4118 = vpack.c.b16 %v3924, %v3922
    %v4119 = vpack.c.b16 %v3925, %v3923
    %v4120 = vpack.c.b16 %v3928, %v3926
    %v4121 = vpack.c.b16 %v3929, %v3927
    %v4122 = vpack.c.b16 %v3932, %v3930
    %v4123 = vpack.c.b16 %v3933, %v3931
    %v4124 = vpack.c.b16 %v3936, %v3934
    %v4125 = vpack.c.b16 %v3937, %v3935
    %v4126 = vpack.c.b16 %v3940, %v3938
    %v4127 = vpack.c.b16 %v3941, %v3939
    %v4128 = vpack.c.b16 %v3944, %v3942
    %v4129 = vpack.c.b16 %v3945, %v3943
    %v4130 = vpack.c.b16 %v3948, %v3946
    %v4131 = vpack.c.b16 %v3949, %v3947
    %v4132 = vpack.c.b16 %v3952, %v3950
    %v4133 = vpack.c.b16 %v3953, %v3951
    %v4134 = vpack.c.b16 %v3956, %v3954
    %v4135 = vpack.c.b16 %v3957, %v3955
    %v4136 = vpack.c.b16 %v3960, %v3958
    %v4137 = vpack.c.b16 %v3961, %v3959
    %v4138 = vpack.c.b16 %v3964, %v3962
    %v4139 = vpack.c.b16 %v3965, %v3963
    %v4140 = vpack.c.b16 %v3968, %v3966
    %v4141 = vpack.c.b16 %v3969, %v3967
    %v4142 = vpack.c.b16 %v3972, %v3970
    %v4143 = vpack.c.b16 %v3973, %v3971
    %v4144 = vpack.c.b16 %v3976, %v3974
    %v4145 = vpack.c.b16 %v3977, %v3975
    %v4146 = vpack.c.b16 %v3980, %v3978
    %v4147 = vpack.c.b16 %v3981, %v3979
    %v4148 = vpack.c.b16 %v3984, %v3982
    %v4149 = vpack.c.b16 %v3985, %v3983
    %v4150 = vpack.c.b16 %v3988, %v3986
    %v4151 = vpack.c.b16 %v3989, %v3987
    %v4152 = vpack.c.b16 %v3992, %v3990
    %v4153 = vpack.c.b16 %v3993, %v3991
    %v4154 = vpack.c.b16 %v3996, %v3994
    %v4155 = vpack.c.b16 %v3997, %v3995
    %v4156 = vpack.c.b16 %v4000, %v3998
    %v4157 = vpack.c.b16 %v4001, %v3999
    %v4158 = vpack.c.b16 %v4004, %v4002
    %v4159 = vpack.c.b16 %v4005, %v4003
    %v4160 = vpack.c.b16 %v4008, %v4006
    %v4161 = vpack.c.b16 %v4009, %v4007
    %v4162 = vpack.c.b16 %v4012, %v4010
    %v4163 = vpack.c.b16 %v4013, %v4011
    %v4164 = vpack.c.b16 %v4016, %v4014
    %v4165 = vpack.c.b16 %v4017, %v4015
    %v4166 = vpack.c.b16 %v4020, %v4018
    %v4167 = vpack.c.b16 %v4021, %v4019
    %v4168 = vpack.c.b16 %v4024, %v4022
    %v4169 = vpack.c.b16 %v4025, %v4023
    %v4170 = vpack.c.b16 %v4028, %v4026
    %v4171 = vpack.c.b16 %v4029, %v4027
    %v4172 = vpack.c.b16 %v4032, %v4030
    %v4173 = vpack.c.b16 %v4033, %v4031
    %v4174 = vpack.c.b16 %v4036, %v4034
    %v4175 = vpack.c.b16 %v4037, %v4035
    %v4176 = vpack.c.b16 %v4040, %v4038
    %v4177 = vpack.c.b16 %v4041, %v4039
    %v4178 = vpack.c.b16 %v4044, %v4042
    %v4179 = vpack.c.b16 %v4045, %v4043
    %v4180 = vpack.c.b16 %v4048, %v4046
    %v4181 = vpack.c.b16 %v4049, %v4047
    %v4182 = vpack.c.b16 %v4052, %v4050
    %v4183 = vpack.c.b16 %v4053, %v4051
    %v4184 = vpack.c.b16 %v4056, %v4054
    %v4185 = vpack.c.b16 %v4057, %v4055
    %4314 = vmatprep.subr.bf16.mxu0 %v4059
    %4315 = vmatpush1.bf16.msra.mxu0 %v4058
    %4316 = vmatprep.subr.bf16.mxu0 %v4061
    %4317 = vmatpush1.bf16.msra.mxu0 %v4060
    %4318 = vmatprep.subr.bf16.mxu0 %v4063
    %4319 = vmatpush1.bf16.msra.mxu0 %v4062
    %4320 = vmatprep.subr.bf16.mxu0 %v4065
    %4321 = vmatpush1.bf16.msra.mxu0 %v4064
    %4322 = vmatprep.subr.bf16.mxu0 %v4067
    %4323 = vmatpush1.bf16.msra.mxu0 %v4066
    %4324 = vmatprep.subr.bf16.mxu0 %v4069
    %4325 = vmatpush1.bf16.msra.mxu0 %v4068
    %4326 = vmatprep.subr.bf16.mxu0 %v4071
    %4327 = vmatpush1.bf16.msra.mxu0 %v4070
    %4328 = vmatprep.subr.bf16.mxu0 %v4073
    %4329 = vmatpush1.bf16.msra.mxu0 %v4072
    %4330 = vmatprep.subr.bf16.mxu0 %v4075
    %4331 = vmatpush1.bf16.msra.mxu0 %v4074
    %4332 = vmatprep.subr.bf16.mxu0 %v4077
    %4333 = vmatpush1.bf16.msra.mxu0 %v4076
    %4334 = vmatprep.subr.bf16.mxu0 %v4079
    %4335 = vmatpush1.bf16.msra.mxu0 %v4078
    %4336 = vmatprep.subr.bf16.mxu0 %v4081
    %4337 = vmatpush1.bf16.msra.mxu0 %v4080
    %4338 = vmatprep.subr.bf16.mxu0 %v4083
    %4339 = vmatpush1.bf16.msra.mxu0 %v4082
    %4340 = vmatprep.subr.bf16.mxu0 %v4085
    %4341 = vmatpush1.bf16.msra.mxu0 %v4084
    %4342 = vmatprep.subr.bf16.mxu0 %v4087
    %4343 = vmatpush1.bf16.msra.mxu0 %v4086
    %4344 = vmatprep.subr.bf16.mxu0 %v4089
    %4345 = vmatpush1.bf16.msra.mxu0 %v4088
    %4346 = vmatprep.mubr.bf16.mxu0 %v3527
    %4347 = vmatmul.mubr.bf16.gmra.mrb[0].mxu0 %v3526
    %v4348 = vpop.f32.mrb[0].mxu0
    %v4349 = vadd.f32 %v3667, %v4348
    %v4350 = vpop.f32.mrb[0].mxu0
    %v4351 = vadd.f32 %v3671, %v4350
    %v4352 = vpop.f32.mrb[0].mxu0
    %v4353 = vpop.f32.mrb[0].mxu0
    %4354 = vdwg.mxu0
    %4355 = vmatprep.subr.bf16.mxu0 %v4091
    %4356 = vmatpush1.bf16.msra.mxu0 %v4090
    %4357 = vmatprep.subr.bf16.mxu0 %v4093
    %4358 = vmatpush1.bf16.msra.mxu0 %v4092
    %4359 = vmatprep.subr.bf16.mxu0 %v4095
    %4360 = vmatpush1.bf16.msra.mxu0 %v4094
    %4361 = vmatprep.subr.bf16.mxu0 %v4097
    %4362 = vmatpush1.bf16.msra.mxu0 %v4096
    %4363 = vmatprep.subr.bf16.mxu0 %v4099
    %4364 = vmatpush1.bf16.msra.mxu0 %v4098
    %4365 = vmatprep.subr.bf16.mxu0 %v4101
    %4366 = vmatpush1.bf16.msra.mxu0 %v4100
    %4367 = vmatprep.subr.bf16.mxu0 %v4103
    %4368 = vmatpush1.bf16.msra.mxu0 %v4102
    %4369 = vmatprep.subr.bf16.mxu0 %v4105
    %4370 = vmatpush1.bf16.msra.mxu0 %v4104
    %4371 = vmatprep.subr.bf16.mxu0 %v4107
    %4372 = vmatpush1.bf16.msra.mxu0 %v4106
    %4373 = vmatprep.subr.bf16.mxu0 %v4109
    %4374 = vmatpush1.bf16.msra.mxu0 %v4108
    %4375 = vmatprep.subr.bf16.mxu0 %v4111
    %4376 = vmatpush1.bf16.msra.mxu0 %v4110
    %4377 = vmatprep.subr.bf16.mxu0 %v4113
    %4378 = vmatpush1.bf16.msra.mxu0 %v4112
    %4379 = vmatprep.subr.bf16.mxu0 %v4115
    %4380 = vmatpush1.bf16.msra.mxu0 %v4114
    %4381 = vmatprep.subr.bf16.mxu0 %v4117
    %4382 = vmatpush1.bf16.msra.mxu0 %v4116
    %4383 = vmatprep.subr.bf16.mxu0 %v4119
    %4384 = vmatpush1.bf16.msra.mxu0 %v4118
    %4385 = vmatprep.subr.bf16.mxu0 %v4121
    %4386 = vmatpush1.bf16.msra.mxu0 %v4120
    %4387 = vmatprep.mubr.bf16.mxu0 %v3529
    %4388 = vmatmul.mubr.bf16.gmra.mrb[0].mxu0 %v3528
    %v4389 = vpop.f32.mrb[0].mxu0
    %v4390 = vadd.f32 %v4349, %v4389
    %v4391 = vpop.f32.mrb[0].mxu0
    %v4392 = vadd.f32 %v4351, %v4391
    %v4393 = vpop.f32.mrb[0].mxu0
    %v4394 = vpop.f32.mrb[0].mxu0
    %4395 = vdwg.mxu0
    %4396 = vmatprep.subr.bf16.mxu0 %v4123
    %4397 = vmatpush1.bf16.msra.mxu0 %v4122
    %4398 = vmatprep.subr.bf16.mxu0 %v4125
    %4399 = vmatpush1.bf16.msra.mxu0 %v4124
    %4400 = vmatprep.subr.bf16.mxu0 %v4127
    %4401 = vmatpush1.bf16.msra.mxu0 %v4126
    %4402 = vmatprep.subr.bf16.mxu0 %v4129
    %4403 = vmatpush1.bf16.msra.mxu0 %v4128
    %4404 = vmatprep.subr.bf16.mxu0 %v4131
    %4405 = vmatpush1.bf16.msra.mxu0 %v4130
    %4406 = vmatprep.subr.bf16.mxu0 %v4133
    %4407 = vmatpush1.bf16.msra.mxu0 %v4132
    %4408 = vmatprep.subr.bf16.mxu0 %v4135
    %4409 = vmatpush1.bf16.msra.mxu0 %v4134
    %4410 = vmatprep.subr.bf16.mxu0 %v4137
    %4411 = vmatpush1.bf16.msra.mxu0 %v4136
    %4412 = vmatprep.subr.bf16.mxu0 %v4139
    %4413 = vmatpush1.bf16.msra.mxu0 %v4138
    %4414 = vmatprep.subr.bf16.mxu0 %v4141
    %4415 = vmatpush1.bf16.msra.mxu0 %v4140
    %4416 = vmatprep.subr.bf16.mxu0 %v4143
    %4417 = vmatpush1.bf16.msra.mxu0 %v4142
    %4418 = vmatprep.subr.bf16.mxu0 %v4145
    %4419 = vmatpush1.bf16.msra.mxu0 %v4144
    %4420 = vmatprep.subr.bf16.mxu0 %v4147
    %4421 = vmatpush1.bf16.msra.mxu0 %v4146
    %4422 = vmatprep.subr.bf16.mxu0 %v4149
    %4423 = vmatpush1.bf16.msra.mxu0 %v4148
    %4424 = vmatprep.subr.bf16.mxu0 %v4151
    %4425 = vmatpush1.bf16.msra.mxu0 %v4150
    %4426 = vmatprep.subr.bf16.mxu0 %v4153
    %4427 = vmatpush1.bf16.msra.mxu0 %v4152
    %4428 = vmatprep.mubr.bf16.mxu0 %v3531
    %4429 = vmatmul.mubr.bf16.gmra.mrb[0].mxu0 %v3530
    %v4430 = vpop.f32.mrb[0].mxu0
    %v4431 = vadd.f32 %v4390, %v4430
    %v4432 = vpop.f32.mrb[0].mxu0
    %v4433 = vadd.f32 %v4392, %v4432
    %v4434 = vpop.f32.mrb[0].mxu0
    %v4435 = vpop.f32.mrb[0].mxu0
    %4436 = vdwg.mxu0
    %4437 = vmatprep.subr.bf16.mxu0 %v4155
    %4438 = vmatpush1.bf16.msra.mxu0 %v4154
    %4439 = vmatprep.subr.bf16.mxu0 %v4157
    %4440 = vmatpush1.bf16.msra.mxu0 %v4156
    %4441 = vmatprep.subr.bf16.mxu0 %v4159
    %4442 = vmatpush1.bf16.msra.mxu0 %v4158
    %4443 = vmatprep.subr.bf16.mxu0 %v4161
    %4444 = vmatpush1.bf16.msra.mxu0 %v4160
    %4445 = vmatprep.subr.bf16.mxu0 %v4163
    %4446 = vmatpush1.bf16.msra.mxu0 %v4162
    %4447 = vmatprep.subr.bf16.mxu0 %v4165
    %4448 = vmatpush1.bf16.msra.mxu0 %v4164
    %4449 = vmatprep.subr.bf16.mxu0 %v4167
    %4450 = vmatpush1.bf16.msra.mxu0 %v4166
    %4451 = vmatprep.subr.bf16.mxu0 %v4169
    %4452 = vmatpush1.bf16.msra.mxu0 %v4168
    %4453 = vmatprep.subr.bf16.mxu0 %v4171
    %4454 = vmatpush1.bf16.msra.mxu0 %v4170
    %4455 = vmatprep.subr.bf16.mxu0 %v4173
    %4456 = vmatpush1.bf16.msra.mxu0 %v4172
    %4457 = vmatprep.subr.bf16.mxu0 %v4175
    %4458 = vmatpush1.bf16.msra.mxu0 %v4174
    %4459 = vmatprep.subr.bf16.mxu0 %v4177
    %4460 = vmatpush1.bf16.msra.mxu0 %v4176
    %4461 = vmatprep.subr.bf16.mxu0 %v4179
    %4462 = vmatpush1.bf16.msra.mxu0 %v4178
    %4463 = vmatprep.subr.bf16.mxu0 %v4181
    %4464 = vmatpush1.bf16.msra.mxu0 %v4180
    %4465 = vmatprep.subr.bf16.mxu0 %v4183
    %4466 = vmatpush1.bf16.msra.mxu0 %v4182
    %4467 = vmatprep.subr.bf16.mxu0 %v4185
    %4468 = vmatpush1.bf16.msra.mxu0 %v4184
    %4469 = vmatprep.mubr.bf16.mxu0 %v3533
    %4470 = vmatmul.mubr.bf16.gmra.mrb[0].mxu0 %v3532
    %v4471 = vpop.f32.mrb[0].mxu0
    %v4472 = vadd.f32 %v4431, %v4471
    %v4473 = vpop.f32.mrb[0].mxu0
    %v4474 = vadd.f32 %v4433, %v4473
    %v4475 = vpop.f32.mrb[0].mxu0
    %v4476 = vpop.f32.mrb[0].mxu0
    %4477 = vdwg.mxu0
    %v4478 = vmax.f32 %v4472, 0.0
    %v4479 = vmax.f32 %v4474, 0.0
    %v4480 = vpack.c.bf16 %v4478, %v4478
    %v4481 = vpack.c.bf16 %v4479, %v4479
    %v4482 = vld [vmem:[#allocation11] sm:$0xf]
    %v4483 = vld [vmem:[#allocation11 + $0x4] sm:$0xf]
    %v4484 = vld [vmem:[#allocation11 + $0x8] sm:$0xf]
    %v4485 = vld [vmem:[#allocation11 + $0xc] sm:$0xf]
    %v4486 = vld [vmem:[#allocation11 + $0x10] sm:$0xf]
    %v4487 = vld [vmem:[#allocation11 + $0x14] sm:$0xf]
    %v4488 = vld [vmem:[#allocation11 + $0x18] sm:$0xf]
    %v4489 = vld [vmem:[#allocation11 + $0x1c] sm:$0xf]
    %v4490 = vld [vmem:[#allocation11 + $0x20] sm:$0xf]
    %v4491 = vld [vmem:[#allocation11 + $0x24] sm:$0xf]
    %v4492 = vld [vmem:[#allocation11 + $0x28] sm:$0xf]
    %v4493 = vld [vmem:[#allocation11 + $0x2c] sm:$0xf]
    %v4494 = vld [vmem:[#allocation11 + $0x30] sm:$0xf]
    %v4495 = vld [vmem:[#allocation11 + $0x34] sm:$0xf]
    %v4496 = vld [vmem:[#allocation11 + $0x38] sm:$0xf]
    %v4497 = vld [vmem:[#allocation11 + $0x3c] sm:$0xf]
    %v4498 = vld [vmem:[#allocation11 + $0x40] sm:$0xf]
    %v4499 = vld [vmem:[#allocation11 + $0x44] sm:$0xf]
    %v4500 = vld [vmem:[#allocation11 + $0x48] sm:$0xf]
    %v4501 = vld [vmem:[#allocation11 + $0x4c] sm:$0xf]
    %v4502 = vld [vmem:[#allocation11 + $0x50] sm:$0xf]
    %v4503 = vld [vmem:[#allocation11 + $0x54] sm:$0xf]
    %v4504 = vld [vmem:[#allocation11 + $0x58] sm:$0xf]
    %v4505 = vld [vmem:[#allocation11 + $0x5c] sm:$0xf]
    %v4506 = vld [vmem:[#allocation11 + $0x60] sm:$0xf]
    %v4507 = vld [vmem:[#allocation11 + $0x64] sm:$0xf]
    %v4508 = vld [vmem:[#allocation11 + $0x68] sm:$0xf]
    %v4509 = vld [vmem:[#allocation11 + $0x6c] sm:$0xf]
    %v4510 = vld [vmem:[#allocation11 + $0x70] sm:$0xf]
    %v4511 = vld [vmem:[#allocation11 + $0x74] sm:$0xf]
    %v4512 = vld [vmem:[#allocation11 + $0x78] sm:$0xf]
    %v4513 = vld [vmem:[#allocation11 + $0x7c] sm:$0xf]
    %v4514 = vld [vmem:[#allocation13] sm:$0x1]
    %v4516 = vlaneseq
    %v4517 = vshrl.u32 %v4516, 7
    %v4518 = vsub.s32 0, %v4517
    %v4519 = vrot.slane %v4514, %v4518
    %v4553 = vunpack.c.l.b16 %v4482
    %v4554 = vunpack.c.l.b16 %v4483
    %v4555 = vunpack.c.l.b16 %v4484
    %v4556 = vunpack.c.l.b16 %v4485
    %v4557 = vunpack.c.l.b16 %v4486
    %v4558 = vunpack.c.l.b16 %v4487
    %v4559 = vunpack.c.l.b16 %v4488
    %v4560 = vunpack.c.l.b16 %v4489
    %v4561 = vunpack.c.l.b16 %v4490
    %v4562 = vunpack.c.l.b16 %v4491
    %v4563 = vunpack.c.l.b16 %v4492
    %v4564 = vunpack.c.l.b16 %v4493
    %v4565 = vunpack.c.l.b16 %v4494
    %v4566 = vunpack.c.l.b16 %v4495
    %v4567 = vunpack.c.l.b16 %v4496
    %v4568 = vunpack.c.l.b16 %v4497
    %v4569 = vunpack.c.l.b16 %v4498
    %v4570 = vunpack.c.l.b16 %v4499
    %v4571 = vunpack.c.l.b16 %v4500
    %v4572 = vunpack.c.l.b16 %v4501
    %v4573 = vunpack.c.l.b16 %v4502
    %v4574 = vunpack.c.l.b16 %v4503
    %v4575 = vunpack.c.l.b16 %v4504
    %v4576 = vunpack.c.l.b16 %v4505
    %v4577 = vunpack.c.l.b16 %v4506
    %v4578 = vunpack.c.l.b16 %v4507
    %v4579 = vunpack.c.l.b16 %v4508
    %v4580 = vunpack.c.l.b16 %v4509
    %v4581 = vunpack.c.l.b16 %v4510
    %v4582 = vunpack.c.l.b16 %v4511
    %v4583 = vunpack.c.l.b16 %v4512
    %v4584 = vunpack.c.l.b16 %v4513
    %v4585 = vpack.c.b16 %v4554, %v4553
    %v4586 = vpack.c.b16 %v4556, %v4555
    %v4587 = vpack.c.b16 %v4558, %v4557
    %v4588 = vpack.c.b16 %v4560, %v4559
    %v4589 = vpack.c.b16 %v4562, %v4561
    %v4590 = vpack.c.b16 %v4564, %v4563
    %v4591 = vpack.c.b16 %v4566, %v4565
    %v4592 = vpack.c.b16 %v4568, %v4567
    %v4593 = vpack.c.b16 %v4570, %v4569
    %v4594 = vpack.c.b16 %v4572, %v4571
    %v4595 = vpack.c.b16 %v4574, %v4573
    %v4596 = vpack.c.b16 %v4576, %v4575
    %v4597 = vpack.c.b16 %v4578, %v4577
    %v4598 = vpack.c.b16 %v4580, %v4579
    %v4599 = vpack.c.b16 %v4582, %v4581
    %v4600 = vpack.c.b16 %v4584, %v4583
    %4617 = vmatprep.subr.bf16.mxu0 0
    %4618 = vmatpush1.bf16.msra.mxu0 %v4585
    %4619 = vmatprep.subr.bf16.mxu0 0
    %4620 = vmatpush1.bf16.msra.mxu0 %v4586
    %4621 = vmatprep.subr.bf16.mxu0 0
    %4622 = vmatpush1.bf16.msra.mxu0 %v4587
    %4623 = vmatprep.subr.bf16.mxu0 0
    %4624 = vmatpush1.bf16.msra.mxu0 %v4588
    %4625 = vmatprep.subr.bf16.mxu0 0
    %4626 = vmatpush1.bf16.msra.mxu0 %v4589
    %4627 = vmatprep.subr.bf16.mxu0 0
    %4628 = vmatpush1.bf16.msra.mxu0 %v4590
    %4629 = vmatprep.subr.bf16.mxu0 0
    %4630 = vmatpush1.bf16.msra.mxu0 %v4591
    %4631 = vmatprep.subr.bf16.mxu0 0
    %4632 = vmatpush1.bf16.msra.mxu0 %v4592
    %4633 = vmatprep.subr.bf16.mxu0 0
    %4634 = vmatpush1.bf16.msra.mxu0 %v4593
    %4635 = vmatprep.subr.bf16.mxu0 0
    %4636 = vmatpush1.bf16.msra.mxu0 %v4594
    %4637 = vmatprep.subr.bf16.mxu0 0
    %4638 = vmatpush1.bf16.msra.mxu0 %v4595
    %4639 = vmatprep.subr.bf16.mxu0 0
    %4640 = vmatpush1.bf16.msra.mxu0 %v4596
    %4641 = vmatprep.subr.bf16.mxu0 0
    %4642 = vmatpush1.bf16.msra.mxu0 %v4597
    %4643 = vmatprep.subr.bf16.mxu0 0
    %4644 = vmatpush1.bf16.msra.mxu0 %v4598
    %4645 = vmatprep.subr.bf16.mxu0 0
    %4646 = vmatpush1.bf16.msra.mxu0 %v4599
    %4647 = vmatprep.subr.bf16.mxu0 0
    %4648 = vmatpush1.bf16.msra.mxu0 %v4600
    %4649 = vmatprep.mubr.bf16.mxu0 %v4481
    %4650 = vmatmul.mubr.bf16.gmra.mrb[0].mxu0 %v4480
    %v4651 = vpop.f32.mrb[0].mxu0
    %v4652 = vadd.f32 %v4519, %v4651
    %v4653 = vpop.f32.mrb[0].mxu0
    %v4654 = vpop.f32.mrb[0].mxu0
    %v4655 = vpop.f32.mrb[0].mxu0
    %4656 = vdwg.mxu0
    %4657 = vst [vmem:[#allocation14] sm:$0xff] %v4652
    %v4658 = vmax.f32 %v4652, 0.0
    %v4659 = vand.u32 2147483647, %v4652
    %v4660 = vsub.f32 0.0, %v4659
    %v4661 = vmul.f32 %v4660, 1.442695
    %v4662 = vpow.pop %v4661
    %v4663 = vadd.f32 %v4662, 1.0
    %v4664 = vlog2.pop %v4663
    %v4665 = vmul.f32 %v4664, 0.6931472
    %v4666 = vadd.f32 %v4658, %v4665
    %v4667 = vadd.f32 %v4666, 1.1920929e-07
    %4668 = vst [vmem:[#allocation15] sm:$0xff] %v4667
    // Predicated region
    $region58: #{tpu_custom_call.1} parent=1 // pred_check
      _
    $region59: #{tpu_custom_call.1} parent=1 // pred_check_branch
      %4670 = sbr.rel (0) target = $region61
    $region60: #{tpu_custom_call.1} parent=1 // pred_region
      %s4672 = ssub.s32 128, 128
      %4673 = vsyncadd [#allocation4], %s4672
      %s4675 = sshll.u32 [#allocation14], 4
      %s4676 = int_to_ptr.vmem [resolvable:$true] %s4675
      %4678 = dma.vmem_to_hbm [thread:$0]  %s4676, 128, %s7, [#allocation4]
    $region61: #{tpu_custom_call.1} parent=1 // pred_fallthru
      _
    // Predicated region
    $region62: #{tpu_custom_call.1} parent=1 // pred_check
      _
    $region63: #{tpu_custom_call.1} parent=1 // pred_check_branch
      %4680 = sbr.rel (0) target = $region65
    $region64: #{tpu_custom_call.1} parent=1 // pred_region
      %s4682 = ssub.s32 128, 128
      %4683 = vsyncadd [#allocation16], %s4682
      %s4685 = sshll.u32 [#allocation15], 4
      %s4686 = int_to_ptr.vmem [resolvable:$true] %s4685
      %4688 = dma.vmem_to_hbm [thread:$0]  %s4686, 128, %s8, [#allocation16]
    $region65: #{tpu_custom_call.1} parent=1 // pred_fallthru
      _
    // Predicated region
    $region66: #{tpu_custom_call.1} parent=1 // pred_check
      _
    $region67: #{tpu_custom_call.1} parent=1 // pred_check_branch
      %4690 = sbr.rel (0) target = $region69
    $region68: #{tpu_custom_call.1} parent=1 // pred_region
      %4691 = dma.done [#allocation4], 128
    $region69: #{tpu_custom_call.1} parent=1 // pred_fallthru
      _
    // Predicated region
    $region70: #{tpu_custom_call.1} parent=1 // pred_check
      _
    $region71: #{tpu_custom_call.1} parent=1 // pred_check_branch
      %4693 = sbr.rel (0) target = $region73
    $region72: #{tpu_custom_call.1} parent=1 // pred_region
      %4694 = dma.done [#allocation16], 128
    $region73: #{tpu_custom_call.1} parent=1 // pred_fallthru
      _
    %4695 = vsyncpa [#allocation3], 1
    %4696 = vsyncpa [#allocation6], 1
    %4697 = vsyncpa [#allocation9], 1
    %4698 = vsyncpa [#allocation12], 1
    %4699 = vsyncpa [#allocation4], 1
    %4700 = vsyncpa [#allocation16], 1

</llo_original>
